<compile_context>
chip_gen: v5e
topology: v5e:2x2
jax: 0.10.0
libtpu: 0.0.40
codegen_flags: <defaults>
</compile_context>

<pallas_src>
import functools

import numpy as np

import jax
import jax.numpy as jnp
from jax import lax
from jax.experimental import pallas as pl
from jax.experimental.pallas import tpu as pltpu


# ----------------------------------------------------------------------------
# Small math helpers (pure jnp; used both inside the kernel and in the ref)
# ----------------------------------------------------------------------------
def _elu(x):
    # F.elu with alpha=1.0
    return jnp.where(x > 0, x, jnp.exp(jnp.minimum(x, 0.0)) - 1.0)


def _sigmoid(x):
    return 1.0 / (1.0 + jnp.exp(-x))


# ----------------------------------------------------------------------------
# Wrapper-side weight / mask preprocessing (layout plumbing, done once)
# ----------------------------------------------------------------------------
def _conv_weight_matrix(w, F):
    """(kh, kw, 2F, Cout) HWIO conv weight -> (Cout, 2*kh*kw*F) matrix.

    K ordering = [elu(+) half taps (di, dj, c), then elu(-) half taps], which
    matches the im2col scratch fill order inside the kernel.
    """
    kh, kw, _, cout = w.shape
    w_pos = w[:, :, :F, :].reshape(kh * kw * F, cout)   # pairs with elu(x)
    w_neg = w[:, :, F:, :].reshape(kh * kw * F, cout)   # pairs with elu(-x)
    return jnp.concatenate([w_pos, w_neg], axis=0).T


def _prep_stream(params, F):
    """Fold conv_input + nin_skip into one (Cout, K) matrix + combined bias."""
    w1, b1, wn, bn, w2, b2 = params
    W1 = jnp.concatenate([_conv_weight_matrix(w1, F), wn.T], axis=1)
    B1 = (b1 + bn).reshape(-1, 1)           # both biases add into c1
    W2 = _conv_weight_matrix(w2, F)
    B2 = b2.reshape(-1, 1)
    return W1, B1, W2, B2


def _make_tap_masks(H, W, kh, kw, padl):
    """Per-tap 0/1 validity masks over the flattened H*W axis, shape
    (kh*kw, 1, H*W).  Tap (di, dj) reads input pixel (i+si, j+sj) with
    si = di-(kh-1), sj = dj-padl; out-of-image reads are zeroed."""
    m = np.zeros((kh * kw, 1, H, W), np.float32)
    for di in range(kh):
        for dj in range(kw):
            si, sj = di - (kh - 1), dj - padl
            i0, i1 = max(0, -si), min(H, H - si)
            j0, j1 = max(0, -sj), min(W, W - sj)
            m[di * kw + dj, 0, i0:i1, j0:j1] = 1.0
    return jnp.asarray(m.reshape(kh * kw, 1, H * W))


# ----------------------------------------------------------------------------
# Fused Pallas kernel: one full PixelCNNLayer_down iteration (u + ul streams)
# per grid step (= one batch element).
# ----------------------------------------------------------------------------
def _fused_down_kernel(u_ref, au_ref, ul_ref, aul_ref,
                       mu_ref, ml_ref,
                       w1u_ref, b1u_ref, w2u_ref, b2u_ref,
                       w1l_ref, b1l_ref, w2l_ref, b2l_ref,
                       u_out_ref, ul_out_ref, col_ref,
                       *, H, W, F):
    HW = H * W

    def fill_taps(x_pos, x_neg, kh, kw, padl, mask_ref, base):
        """im2col: write shifted+masked taps of both elu halves into col_ref.

        Shifts use pltpu.roll along the lane (H*W) axis; boundary wrap is
        killed with the precomputed 0/1 mask.  Returns next free K row."""
        k = base
        for xh in (x_pos, x_neg):
            for di in range(kh):
                for dj in range(kw):
                    si, sj = di - (kh - 1), dj - padl
                    if si == 0 and sj == 0:
                        blk = xh
                    else:
                        shift = (-(si * W + sj)) % HW
                        blk = (pltpu.roll(xh, shift, axis=1)
                               * mask_ref[di * kw + dj])
                    col_ref[k:k + F, :] = blk
                    k += F
        return k

    def gated_resnet(og, kh, kw, padl, mask_ref, w1_ref, b1_ref,
                     w2_ref, b2_ref, nin_blocks):
        # c1 = conv_input(concat_elu(og)) + nin_skip(concat_elu(a))
        #    -> a single lane-dense MXU dot over the combined K axis.
        k = fill_taps(_elu(og), _elu(-og), kh, kw, padl, mask_ref, 0)
        for blk in nin_blocks:
            col_ref[k:k + F, :] = blk
            k += F
        c1 = jnp.dot(w1_ref[...], col_ref[pl.ds(0, k), :],
                     preferred_element_type=jnp.float32) + b1_ref[...]

        # dropout(0.5) is identity in eval mode.
        # c2 = conv_out(concat_elu(c1))  -> one more MXU dot.
        k = fill_taps(_elu(c1), _elu(-c1), kh, kw, padl, mask_ref, 0)
        c2 = jnp.dot(w2_ref[...], col_ref[pl.ds(0, k), :],
                     preferred_element_type=jnp.float32) + b2_ref[...]

        # a, b = chunk(c2, 2, channel);  out = og + a * sigmoid(b)
        aa = c2[0:F, :]
        bb = c2[F:2 * F, :]
        return og + aa * _sigmoid(bb)

    u = u_ref[0].astype(jnp.float32)      # (F, HW)
    au = au_ref[0].astype(jnp.float32)
    ul = ul_ref[0].astype(jnp.float32)
    aul = aul_ref[0].astype(jnp.float32)

    # u-stream: down_shifted_conv2d (2x3), skip_connection=1, a = u_list[i]
    u_new = gated_resnet(u, 2, 3, 1, mu_ref, w1u_ref, b1u_ref,
                         w2u_ref, b2u_ref,
                         nin_blocks=[_elu(au), _elu(-au)])
    u_out_ref[0] = u_new.astype(u_out_ref.dtype)

    # ul-stream: down_right_shifted_conv2d (2x2), skip_connection=2,
    # a = cat(u_new, ul_list[i]) -> concat_elu block order [u, uls, -u, -uls]
    # (u_new stays on-chip: no HBM round-trip, no wrapper-level concat).
    ul_new = gated_resnet(ul, 2, 2, 1, ml_ref, w1l_ref, b1l_ref,
                          w2l_ref, b2l_ref,
                          nin_blocks=[_elu(u_new), _elu(aul),
                                      _elu(-u_new), _elu(-aul)])
    ul_out_ref[0] = ul_new.astype(ul_out_ref.dtype)


def _fused_down_step(u, ul, au, aul, prep_u, prep_ul, masks_u, masks_ul, H, W):
    B, F, HW = u.shape
    W1u, B1u, W2u, B2u = prep_u
    W1l, B1l, W2l, B2l = prep_ul

    kernel = functools.partial(_fused_down_kernel, H=H, W=W, F=F)
    act = pl.BlockSpec((1, F, HW), lambda b: (b, 0, 0))

    def full(arr):
        nd = arr.ndim
        return pl.BlockSpec(arr.shape, lambda b, _nd=nd: (0,) * _nd)

    # Max im2col K: u-stream conv_input (2*6*F) + its nin skip (2*F) = 14F.
    max_k = 14 * F

    return pl.pallas_call(
        kernel,
        out_shape=(jax.ShapeDtypeStruct((B, F, HW), u.dtype),
                   jax.ShapeDtypeStruct((B, F, HW), ul.dtype)),
        grid=(B,),
        in_specs=[act, act, act, act,
                  full(masks_u), full(masks_ul),
                  full(W1u), full(B1u), full(W2u), full(B2u),
                  full(W1l), full(B1l), full(W2l), full(B2l)],
        out_specs=(act, act),
        scratch_shapes=[pltpu.VMEM((max_k, HW), jnp.float32)],
        compiler_params=pltpu.CompilerParams(
            dimension_semantics=("parallel",)),
    )(u, au, ul, aul, masks_u, masks_ul,
      W1u, B1u, W2u, B2u, W1l, B1l, W2l, B2l)


# ----------------------------------------------------------------------------
# PixelCNNLayer_down forward (NCHW, like the PyTorch module)
# ----------------------------------------------------------------------------
def pixelcnn_layer_down(u, ul, u_list, ul_list, params_u, params_ul):
    B, F, H, W = u.shape
    HW = H * W
    masks_u = _make_tap_masks(H, W, 2, 3, 1)    # down_shifted (2x3), pad L1/R1
    masks_ul = _make_tap_masks(H, W, 2, 2, 1)   # down_right   (2x2), pad L1/R0
    prep_u = [_prep_stream(p, F) for p in params_u]
    prep_ul = [_prep_stream(p, F) for p in params_ul]

    u_list = list(u_list)
    ul_list = list(ul_list)
    uf = u.reshape(B, F, HW)
    ulf = ul.reshape(B, F, HW)
    for i in range(len(params_u)):
        au = u_list.pop().reshape(B, F, HW)
        aul = ul_list.pop().reshape(B, F, HW)
        uf, ulf = _fused_down_step(uf, ulf, au, aul, prep_u[i], prep_ul[i],
                                   masks_u, masks_ul, H, W)
    return uf.reshape(B, F, H, W), ulf.reshape(B, F, H, W)


# ----------------------------------------------------------------------------
# Pure-JAX reference (correctness check only), NCHW like the PyTorch module
# ----------------------------------------------------------------------------
def _ref_conv(x, w, b, pads):
    y = lax.conv_general_dilated(x, w, (1, 1), pads,
                                 dimension_numbers=('NCHW', 'HWIO', 'NCHW'))
    return y + b.reshape(1, -1, 1, 1)


def _concat_elu_nchw(x):
    return jnp.concatenate([_elu(x), _elu(-x)], axis=1)


def _ref_gated_resnet(og, a, params, pads):
    w1, b1, wn, bn, w2, b2 = params
    F_ = og.shape[1]
    c1 = _ref_conv(_concat_elu_nchw(og), w1, b1, pads)
    c1 = c1 + jnp.einsum('bchw,cd->bdhw', _concat_elu_nchw(a), wn) \
            + bn.reshape(1, -1, 1, 1)
    c2 = _ref_conv(_concat_elu_nchw(c1), w2, b2, pads)
    aa, bb = c2[:, :F_], c2[:, F_:]
    return og + aa * _sigmoid(bb)


def _ref_layer_down(u, ul, u_list, ul_list, params_u, params_ul):
    u_list = list(u_list)
    ul_list = list(ul_list)
    for i in range(len(params_u)):
        u = _ref_gated_resnet(u, u_list.pop(), params_u[i],
                              pads=((1, 0), (1, 1)))
        a = jnp.concatenate([u, ul_list.pop()], axis=1)
        ul = _ref_gated_resnet(ul, a, params_ul[i], pads=((1, 0), (1, 0)))
    return u, ul


# ----------------------------------------------------------------------------
# Deterministic synthetic parameters
# ----------------------------------------------------------------------------
def init_params(key, nr_resnet, nf):
    def w(k, shape, scale=0.1):
        return jax.random.normal(k, shape, jnp.float32) * scale

    params_u, params_ul = [], []
    for i in range(nr_resnet):
        ks = jax.random.split(jax.random.fold_in(key, i), 12)
        params_u.append((
            w(ks[0], (2, 3, 2 * nf, nf)),        # conv_input (down_shifted 2x3)
            w(ks[1], (nf,), 0.01),
            w(ks[2], (2 * nf, nf)),              # nin_skip (skip_connection=1)
            w(ks[3], (nf,), 0.01),
            w(ks[4], (2, 3, 2 * nf, 2 * nf)),    # conv_out
            w(ks[5], (2 * nf,), 0.01),
        ))
        params_ul.append((
            w(ks[6], (2, 2, 2 * nf, nf)),        # conv_input (down_right 2x2)
            w(ks[7], (nf,), 0.01),
            w(ks[8], (4 * nf, nf)),              # nin_skip (skip_connection=2)
            w(ks[9], (nf,), 0.01),
            w(ks[10], (2, 2, 2 * nf, 2 * nf)),   # conv_out
            w(ks[11], (2 * nf,), 0.01),
        ))
    return params_u, params_ul


if __name__ == "__main__":
    B, nf, H, W = 2, 8, 16, 16      # batch, nr_filters, height, width (NCHW)
    nr_resnet = 2

    key = jax.random.PRNGKey(0)
    k1, k2, k3, k4, k5 = jax.random.split(key, 5)
    u = jax.random.normal(k1, (B, nf, H, W), jnp.float32)
    ul = jax.random.normal(k2, (B, nf, H, W), jnp.float32)
    u_list = [jax.random.normal(jax.random.fold_in(k3, i), (B, nf, H, W),
                                jnp.float32) for i in range(nr_resnet)]
    ul_list = [jax.random.normal(jax.random.fold_in(k4, i), (B, nf, H, W),
                                 jnp.float32) for i in range(nr_resnet)]
    params_u, params_ul = init_params(k5, nr_resnet, nf)

    u_out, ul_out = pixelcnn_layer_down(u, ul, u_list, ul_list,
                                        params_u, params_ul)
    jax.block_until_ready((u_out, ul_out))

    # Correctness check against a pure-JAX reference.
    u_ref, ul_ref = _ref_layer_down(u, ul, u_list, ul_list,
                                    params_u, params_ul)
    assert jnp.allclose(u_out, u_ref, atol=1e-3, rtol=1e-3), "u mismatch"
    assert jnp.allclose(ul_out, ul_ref, atol=1e-3, rtol=1e-3), "ul mismatch"

    print("KERNEL_OK")
</pallas_src>

<mosaic_0001>
module attributes {stable_mosaic.version = 11 : i64} {
  func.func @_fused_down_kernel(%arg0: i32, %arg1: memref<1x8x256xf32, #tpu.memory_space<vmem>>, %arg2: memref<1x8x256xf32, #tpu.memory_space<vmem>>, %arg3: memref<1x8x256xf32, #tpu.memory_space<vmem>>, %arg4: memref<1x8x256xf32, #tpu.memory_space<vmem>>, %arg5: memref<6x1x256xf32, #tpu.memory_space<vmem>>, %arg6: memref<4x1x256xf32, #tpu.memory_space<vmem>>, %arg7: memref<8x112xf32, #tpu.memory_space<vmem>>, %arg8: memref<8x1xf32, #tpu.memory_space<vmem>>, %arg9: memref<16x96xf32, #tpu.memory_space<vmem>>, %arg10: memref<16x1xf32, #tpu.memory_space<vmem>>, %arg11: memref<8x96xf32, #tpu.memory_space<vmem>>, %arg12: memref<8x1xf32, #tpu.memory_space<vmem>>, %arg13: memref<16x64xf32, #tpu.memory_space<vmem>>, %arg14: memref<16x1xf32, #tpu.memory_space<vmem>>, %arg15: memref<1x8x256xf32, #tpu.memory_space<vmem>>, %arg16: memref<1x8x256xf32, #tpu.memory_space<vmem>>, %arg17: memref<112x256xf32, #tpu.memory_space<vmem>>) attributes {dimension_semantics = [#tpu.dimension_semantics<parallel>], iteration_bounds = array<i64: 2>, scalar_prefetch = 0 : i64, scratch_operands = 1 : i64, tpu.core_type = #tpu.core_type<tc>, window_params = [{transform_indices = @transform_0, window_bounds = array<i64: 1, 8, 256>}, {transform_indices = @transform_1, window_bounds = array<i64: 1, 8, 256>}, {transform_indices = @transform_2, window_bounds = array<i64: 1, 8, 256>}, {transform_indices = @transform_3, window_bounds = array<i64: 1, 8, 256>}, {pipeline_mode = #tpu.pipeline_mode<synchronous>, transform_indices = @transform_4, window_bounds = array<i64: 6, 1, 256>}, {pipeline_mode = #tpu.pipeline_mode<synchronous>, transform_indices = @transform_5, window_bounds = array<i64: 4, 1, 256>}, {pipeline_mode = #tpu.pipeline_mode<synchronous>, transform_indices = @transform_6, window_bounds = array<i64: 8, 112>}, {pipeline_mode = #tpu.pipeline_mode<synchronous>, transform_indices = @transform_7, window_bounds = array<i64: 8, 1>}, {pipeline_mode = #tpu.pipeline_mode<synchronous>, transform_indices = @transform_8, window_bounds = array<i64: 16, 96>}, {pipeline_mode = #tpu.pipeline_mode<synchronous>, transform_indices = @transform_9, window_bounds = array<i64: 16, 1>}, {pipeline_mode = #tpu.pipeline_mode<synchronous>, transform_indices = @transform_10, window_bounds = array<i64: 8, 96>}, {pipeline_mode = #tpu.pipeline_mode<synchronous>, transform_indices = @transform_11, window_bounds = array<i64: 8, 1>}, {pipeline_mode = #tpu.pipeline_mode<synchronous>, transform_indices = @transform_12, window_bounds = array<i64: 16, 64>}, {pipeline_mode = #tpu.pipeline_mode<synchronous>, transform_indices = @transform_13, window_bounds = array<i64: 16, 1>}, {transform_indices = @transform_14, window_bounds = array<i64: 1, 8, 256>}, {transform_indices = @transform_15, window_bounds = array<i64: 1, 8, 256>}]} {
    %c0 = arith.constant 0 : index
    %c0_0 = arith.constant 0 : index
    %c0_1 = arith.constant 0 : index
    %0 = vector.load %arg1[%c0, %c0_0, %c0_1] : memref<1x8x256xf32, #tpu.memory_space<vmem>>, vector<1x8x256xf32>
    %1 = vector.shape_cast %0 : vector<1x8x256xf32> to vector<8x256xf32>
    %c0_2 = arith.constant 0 : index
    %c0_3 = arith.constant 0 : index
    %c0_4 = arith.constant 0 : index
    %2 = vector.load %arg2[%c0_2, %c0_3, %c0_4] : memref<1x8x256xf32, #tpu.memory_space<vmem>>, vector<1x8x256xf32>
    %3 = vector.shape_cast %2 : vector<1x8x256xf32> to vector<8x256xf32>
    %c0_5 = arith.constant 0 : index
    %c0_6 = arith.constant 0 : index
    %c0_7 = arith.constant 0 : index
    %4 = vector.load %arg3[%c0_5, %c0_6, %c0_7] : memref<1x8x256xf32, #tpu.memory_space<vmem>>, vector<1x8x256xf32>
    %5 = vector.shape_cast %4 : vector<1x8x256xf32> to vector<8x256xf32>
    %c0_8 = arith.constant 0 : index
    %c0_9 = arith.constant 0 : index
    %c0_10 = arith.constant 0 : index
    %6 = vector.load %arg4[%c0_8, %c0_9, %c0_10] : memref<1x8x256xf32, #tpu.memory_space<vmem>>, vector<1x8x256xf32>
    %7 = vector.shape_cast %6 : vector<1x8x256xf32> to vector<8x256xf32>
    %cst = arith.constant 0.000000e+00 : f32
    %8 = vector.broadcast %cst : f32 to vector<8x256xf32>
    %9 = arith.cmpf ogt, %3, %8 : vector<8x256xf32>
    %cst_11 = arith.constant 0.000000e+00 : f32
    %10 = vector.broadcast %cst_11 : f32 to vector<8x256xf32>
    %11 = arith.minimumf %3, %10 : vector<8x256xf32>
    %12 = math.exp %11 : vector<8x256xf32>
    %cst_12 = arith.constant 1.000000e+00 : f32
    %13 = vector.broadcast %cst_12 : f32 to vector<8x256xf32>
    %14 = arith.subf %12, %13 : vector<8x256xf32>
    %15 = arith.select %9, %3, %14 : vector<8x256xi1>, vector<8x256xf32>
    %cst_13 = arith.constant 0.000000e+00 : f32
    %16 = vector.broadcast %cst_13 : f32 to vector<8x256xf32>
    %17 = arith.subf %16, %3 : vector<8x256xf32>
    %cst_14 = arith.constant 0.000000e+00 : f32
    %18 = vector.broadcast %cst_14 : f32 to vector<8x256xf32>
    %19 = arith.cmpf ogt, %17, %18 : vector<8x256xf32>
    %cst_15 = arith.constant 0.000000e+00 : f32
    %20 = vector.broadcast %cst_15 : f32 to vector<8x256xf32>
    %21 = arith.minimumf %17, %20 : vector<8x256xf32>
    %22 = math.exp %21 : vector<8x256xf32>
    %cst_16 = arith.constant 1.000000e+00 : f32
    %23 = vector.broadcast %cst_16 : f32 to vector<8x256xf32>
    %24 = arith.subf %22, %23 : vector<8x256xf32>
    %25 = arith.select %19, %17, %24 : vector<8x256xi1>, vector<8x256xf32>
    %cst_17 = arith.constant 0.000000e+00 : f32
    %26 = vector.broadcast %cst_17 : f32 to vector<8x256xf32>
    %27 = arith.cmpf ogt, %1, %26 : vector<8x256xf32>
    %cst_18 = arith.constant 0.000000e+00 : f32
    %28 = vector.broadcast %cst_18 : f32 to vector<8x256xf32>
    %29 = arith.minimumf %1, %28 : vector<8x256xf32>
    %30 = math.exp %29 : vector<8x256xf32>
    %cst_19 = arith.constant 1.000000e+00 : f32
    %31 = vector.broadcast %cst_19 : f32 to vector<8x256xf32>
    %32 = arith.subf %30, %31 : vector<8x256xf32>
    %33 = arith.select %27, %1, %32 : vector<8x256xi1>, vector<8x256xf32>
    %cst_20 = arith.constant 0.000000e+00 : f32
    %34 = vector.broadcast %cst_20 : f32 to vector<8x256xf32>
    %35 = arith.subf %34, %1 : vector<8x256xf32>
    %cst_21 = arith.constant 0.000000e+00 : f32
    %36 = vector.broadcast %cst_21 : f32 to vector<8x256xf32>
    %37 = arith.cmpf ogt, %35, %36 : vector<8x256xf32>
    %cst_22 = arith.constant 0.000000e+00 : f32
    %38 = vector.broadcast %cst_22 : f32 to vector<8x256xf32>
    %39 = arith.minimumf %35, %38 : vector<8x256xf32>
    %40 = math.exp %39 : vector<8x256xf32>
    %cst_23 = arith.constant 1.000000e+00 : f32
    %41 = vector.broadcast %cst_23 : f32 to vector<8x256xf32>
    %42 = arith.subf %40, %41 : vector<8x256xf32>
    %43 = arith.select %37, %35, %42 : vector<8x256xi1>, vector<8x256xf32>
    %c17_i32 = arith.constant 17 : i32
    %44 = tpu.dynamic_rotate %33 by %c17_i32 dim 1 : vector<8x256xf32>, i32 -> vector<8x256xf32>
    %c0_24 = arith.constant 0 : index
    %c0_25 = arith.constant 0 : index
    %c0_26 = arith.constant 0 : index
    %45 = vector.load %arg5[%c0_24, %c0_25, %c0_26] : memref<6x1x256xf32, #tpu.memory_space<vmem>>, vector<1x1x256xf32>
    %46 = vector.shape_cast %45 : vector<1x1x256xf32> to vector<1x256xf32>
    %47 = vector.broadcast %46 : vector<1x256xf32> to vector<8x256xf32>
    %48 = arith.mulf %44, %47 : vector<8x256xf32>
    %c0_27 = arith.constant 0 : index
    %c0_28 = arith.constant 0 : index
    %49 = vector.load %arg17[%c0_27, %c0_28] : memref<112x256xf32, #tpu.memory_space<vmem>>, vector<8x256xf32>
    tpu.vector_store %arg17[%c0_27, %c0_28], %48 {strides = array<i32>} : memref<112x256xf32, #tpu.memory_space<vmem>>, vector<8x256xf32>,
    %c16_i32 = arith.constant 16 : i32
    %50 = tpu.dynamic_rotate %33 by %c16_i32 dim 1 : vector<8x256xf32>, i32 -> vector<8x256xf32>
    %c1 = arith.constant 1 : index
    %c0_29 = arith.constant 0 : index
    %c0_30 = arith.constant 0 : index
    %51 = vector.load %arg5[%c1, %c0_29, %c0_30] : memref<6x1x256xf32, #tpu.memory_space<vmem>>, vector<1x1x256xf32>
    %52 = vector.shape_cast %51 : vector<1x1x256xf32> to vector<1x256xf32>
    %53 = vector.broadcast %52 : vector<1x256xf32> to vector<8x256xf32>
    %54 = arith.mulf %50, %53 : vector<8x256xf32>
    %c8 = arith.constant 8 : index
    %c0_31 = arith.constant 0 : index
    %55 = vector.load %arg17[%c8, %c0_31] : memref<112x256xf32, #tpu.memory_space<vmem>>, vector<8x256xf32>
    tpu.vector_store %arg17[%c8, %c0_31], %54 {strides = array<i32>} : memref<112x256xf32, #tpu.memory_space<vmem>>, vector<8x256xf32>,
    %c15_i32 = arith.constant 15 : i32
    %56 = tpu.dynamic_rotate %33 by %c15_i32 dim 1 : vector<8x256xf32>, i32 -> vector<8x256xf32>
    %c2 = arith.constant 2 : index
    %c0_32 = arith.constant 0 : index
    %c0_33 = arith.constant 0 : index
    %57 = vector.load %arg5[%c2, %c0_32, %c0_33] : memref<6x1x256xf32, #tpu.memory_space<vmem>>, vector<1x1x256xf32>
    %58 = vector.shape_cast %57 : vector<1x1x256xf32> to vector<1x256xf32>
    %59 = vector.broadcast %58 : vector<1x256xf32> to vector<8x256xf32>
    %60 = arith.mulf %56, %59 : vector<8x256xf32>
    %c16 = arith.constant 16 : index
    %c0_34 = arith.constant 0 : index
    %61 = vector.load %arg17[%c16, %c0_34] : memref<112x256xf32, #tpu.memory_space<vmem>>, vector<8x256xf32>
    tpu.vector_store %arg17[%c16, %c0_34], %60 {strides = array<i32>} : memref<112x256xf32, #tpu.memory_space<vmem>>, vector<8x256xf32>,
    %c1_i32 = arith.constant 1 : i32
    %62 = tpu.dynamic_rotate %33 by %c1_i32 dim 1 : vector<8x256xf32>, i32 -> vector<8x256xf32>
    %c3 = arith.constant 3 : index
    %c0_35 = arith.constant 0 : index
    %c0_36 = arith.constant 0 : index
    %63 = vector.load %arg5[%c3, %c0_35, %c0_36] : memref<6x1x256xf32, #tpu.memory_space<vmem>>, vector<1x1x256xf32>
    %64 = vector.shape_cast %63 : vector<1x1x256xf32> to vector<1x256xf32>
    %65 = vector.broadcast %64 : vector<1x256xf32> to vector<8x256xf32>
    %66 = arith.mulf %62, %65 : vector<8x256xf32>
    %c24 = arith.constant 24 : index
    %c0_37 = arith.constant 0 : index
    %67 = vector.load %arg17[%c24, %c0_37] : memref<112x256xf32, #tpu.memory_space<vmem>>, vector<8x256xf32>
    tpu.vector_store %arg17[%c24, %c0_37], %66 {strides = array<i32>} : memref<112x256xf32, #tpu.memory_space<vmem>>, vector<8x256xf32>,
    %c32 = arith.constant 32 : index
    %c0_38 = arith.constant 0 : index
    %68 = vector.load %arg17[%c32, %c0_38] : memref<112x256xf32, #tpu.memory_space<vmem>>, vector<8x256xf32>
    tpu.vector_store %arg17[%c32, %c0_38], %33 {strides = array<i32>} : memref<112x256xf32, #tpu.memory_space<vmem>>, vector<8x256xf32>,
    %c255_i32 = arith.constant 255 : i32
    %69 = tpu.dynamic_rotate %33 by %c255_i32 dim 1 : vector<8x256xf32>, i32 -> vector<8x256xf32>
    %c5 = arith.constant 5 : index
    %c0_39 = arith.constant 0 : index
    %c0_40 = arith.constant 0 : index
    %70 = vector.load %arg5[%c5, %c0_39, %c0_40] : memref<6x1x256xf32, #tpu.memory_space<vmem>>, vector<1x1x256xf32>
    %71 = vector.shape_cast %70 : vector<1x1x256xf32> to vector<1x256xf32>
    %72 = vector.broadcast %71 : vector<1x256xf32> to vector<8x256xf32>
    %73 = arith.mulf %69, %72 : vector<8x256xf32>
    %c40 = arith.constant 40 : index
    %c0_41 = arith.constant 0 : index
    %74 = vector.load %arg17[%c40, %c0_41] : memref<112x256xf32, #tpu.memory_space<vmem>>, vector<8x256xf32>
    tpu.vector_store %arg17[%c40, %c0_41], %73 {strides = array<i32>} : memref<112x256xf32, #tpu.memory_space<vmem>>, vector<8x256xf32>,
    %c17_i32_42 = arith.constant 17 : i32
    %75 = tpu.dynamic_rotate %43 by %c17_i32_42 dim 1 : vector<8x256xf32>, i32 -> vector<8x256xf32>
    %c0_43 = arith.constant 0 : index
    %c0_44 = arith.constant 0 : index
    %c0_45 = arith.constant 0 : index
    %76 = vector.load %arg5[%c0_43, %c0_44, %c0_45] : memref<6x1x256xf32, #tpu.memory_space<vmem>>, vector<1x1x256xf32>
    %77 = vector.shape_cast %76 : vector<1x1x256xf32> to vector<1x256xf32>
    %78 = vector.broadcast %77 : vector<1x256xf32> to vector<8x256xf32>
    %79 = arith.mulf %75, %78 : vector<8x256xf32>
    %c48 = arith.constant 48 : index
    %c0_46 = arith.constant 0 : index
    %80 = vector.load %arg17[%c48, %c0_46] : memref<112x256xf32, #tpu.memory_space<vmem>>, vector<8x256xf32>
    tpu.vector_store %arg17[%c48, %c0_46], %79 {strides = array<i32>} : memref<112x256xf32, #tpu.memory_space<vmem>>, vector<8x256xf32>,
    %c16_i32_47 = arith.constant 16 : i32
    %81 = tpu.dynamic_rotate %43 by %c16_i32_47 dim 1 : vector<8x256xf32>, i32 -> vector<8x256xf32>
    %c1_48 = arith.constant 1 : index
    %c0_49 = arith.constant 0 : index
    %c0_50 = arith.constant 0 : index
    %82 = vector.load %arg5[%c1_48, %c0_49, %c0_50] : memref<6x1x256xf32, #tpu.memory_space<vmem>>, vector<1x1x256xf32>
    %83 = vector.shape_cast %82 : vector<1x1x256xf32> to vector<1x256xf32>
    %84 = vector.broadcast %83 : vector<1x256xf32> to vector<8x256xf32>
    %85 = arith.mulf %81, %84 : vector<8x256xf32>
    %c56 = arith.constant 56 : index
    %c0_51 = arith.constant 0 : index
    %86 = vector.load %arg17[%c56, %c0_51] : memref<112x256xf32, #tpu.memory_space<vmem>>, vector<8x256xf32>
    tpu.vector_store %arg17[%c56, %c0_51], %85 {strides = array<i32>} : memref<112x256xf32, #tpu.memory_space<vmem>>, vector<8x256xf32>,
    %c15_i32_52 = arith.constant 15 : i32
    %87 = tpu.dynamic_rotate %43 by %c15_i32_52 dim 1 : vector<8x256xf32>, i32 -> vector<8x256xf32>
    %c2_53 = arith.constant 2 : index
    %c0_54 = arith.constant 0 : index
    %c0_55 = arith.constant 0 : index
    %88 = vector.load %arg5[%c2_53, %c0_54, %c0_55] : memref<6x1x256xf32, #tpu.memory_space<vmem>>, vector<1x1x256xf32>
    %89 = vector.shape_cast %88 : vector<1x1x256xf32> to vector<1x256xf32>
    %90 = vector.broadcast %89 : vector<1x256xf32> to vector<8x256xf32>
    %91 = arith.mulf %87, %90 : vector<8x256xf32>
    %c64 = arith.constant 64 : index
    %c0_56 = arith.constant 0 : index
    %92 = vector.load %arg17[%c64, %c0_56] : memref<112x256xf32, #tpu.memory_space<vmem>>, vector<8x256xf32>
    tpu.vector_store %arg17[%c64, %c0_56], %91 {strides = array<i32>} : memref<112x256xf32, #tpu.memory_space<vmem>>, vector<8x256xf32>,
    %c1_i32_57 = arith.constant 1 : i32
    %93 = tpu.dynamic_rotate %43 by %c1_i32_57 dim 1 : vector<8x256xf32>, i32 -> vector<8x256xf32>
    %c3_58 = arith.constant 3 : index
    %c0_59 = arith.constant 0 : index
    %c0_60 = arith.constant 0 : index
    %94 = vector.load %arg5[%c3_58, %c0_59, %c0_60] : memref<6x1x256xf32, #tpu.memory_space<vmem>>, vector<1x1x256xf32>
    %95 = vector.shape_cast %94 : vector<1x1x256xf32> to vector<1x256xf32>
    %96 = vector.broadcast %95 : vector<1x256xf32> to vector<8x256xf32>
    %97 = arith.mulf %93, %96 : vector<8x256xf32>
    %c72 = arith.constant 72 : index
    %c0_61 = arith.constant 0 : index
    %98 = vector.load %arg17[%c72, %c0_61] : memref<112x256xf32, #tpu.memory_space<vmem>>, vector<8x256xf32>
    tpu.vector_store %arg17[%c72, %c0_61], %97 {strides = array<i32>} : memref<112x256xf32, #tpu.memory_space<vmem>>, vector<8x256xf32>,
    %c80 = arith.constant 80 : index
    %c0_62 = arith.constant 0 : index
    %99 = vector.load %arg17[%c80, %c0_62] : memref<112x256xf32, #tpu.memory_space<vmem>>, vector<8x256xf32>
    tpu.vector_store %arg17[%c80, %c0_62], %43 {strides = array<i32>} : memref<112x256xf32, #tpu.memory_space<vmem>>, vector<8x256xf32>,
    %c255_i32_63 = arith.constant 255 : i32
    %100 = tpu.dynamic_rotate %43 by %c255_i32_63 dim 1 : vector<8x256xf32>, i32 -> vector<8x256xf32>
    %c5_64 = arith.constant 5 : index
    %c0_65 = arith.constant 0 : index
    %c0_66 = arith.constant 0 : index
    %101 = vector.load %arg5[%c5_64, %c0_65, %c0_66] : memref<6x1x256xf32, #tpu.memory_space<vmem>>, vector<1x1x256xf32>
    %102 = vector.shape_cast %101 : vector<1x1x256xf32> to vector<1x256xf32>
    %103 = vector.broadcast %102 : vector<1x256xf32> to vector<8x256xf32>
    %104 = arith.mulf %100, %103 : vector<8x256xf32>
    %c88 = arith.constant 88 : index
    %c0_67 = arith.constant 0 : index
    %105 = vector.load %arg17[%c88, %c0_67] : memref<112x256xf32, #tpu.memory_space<vmem>>, vector<8x256xf32>
    tpu.vector_store %arg17[%c88, %c0_67], %104 {strides = array<i32>} : memref<112x256xf32, #tpu.memory_space<vmem>>, vector<8x256xf32>,
    %c96 = arith.constant 96 : index
    %c0_68 = arith.constant 0 : index
    %106 = vector.load %arg17[%c96, %c0_68] : memref<112x256xf32, #tpu.memory_space<vmem>>, vector<8x256xf32>
    tpu.vector_store %arg17[%c96, %c0_68], %15 {strides = array<i32>} : memref<112x256xf32, #tpu.memory_space<vmem>>, vector<8x256xf32>,
    %c104 = arith.constant 104 : index
    %c0_69 = arith.constant 0 : index
    %107 = vector.load %arg17[%c104, %c0_69] : memref<112x256xf32, #tpu.memory_space<vmem>>, vector<8x256xf32>
    tpu.vector_store %arg17[%c104, %c0_69], %25 {strides = array<i32>} : memref<112x256xf32, #tpu.memory_space<vmem>>, vector<8x256xf32>,
    %c0_70 = arith.constant 0 : index
    %c0_71 = arith.constant 0 : index
    %108 = vector.load %arg7[%c0_70, %c0_71] : memref<8x112xf32, #tpu.memory_space<vmem>>, vector<8x112xf32>
    %c0_72 = arith.constant 0 : index
    %c0_73 = arith.constant 0 : index
    %109 = vector.load %arg17[%c0_72, %c0_73] : memref<112x256xf32, #tpu.memory_space<vmem>>, vector<112x256xf32>
    %cst_74 = arith.constant dense<0.000000e+00> : vector<8x256xf32>
    %110 = tpu.matmul %108, %109, %cst_74 {dimension_numbers = #tpu.dot_dimension_numbers<[1], [0], [0], [1], [0, 0, 1, 1], [], []>} : vector<8x112xf32>, vector<112x256xf32>, vector<8x256xf32> -> vector<8x256xf32>
    %c0_75 = arith.constant 0 : index
    %c0_76 = arith.constant 0 : index
    %111 = vector.load %arg8[%c0_75, %c0_76] : memref<8x1xf32, #tpu.memory_space<vmem>>, vector<8x1xf32>
    %112 = vector.broadcast %111 : vector<8x1xf32> to vector<8x256xf32>
    %113 = arith.addf %110, %112 : vector<8x256xf32>
    %cst_77 = arith.constant 0.000000e+00 : f32
    %114 = vector.broadcast %cst_77 : f32 to vector<8x256xf32>
    %115 = arith.cmpf ogt, %113, %114 : vector<8x256xf32>
    %cst_78 = arith.constant 0.000000e+00 : f32
    %116 = vector.broadcast %cst_78 : f32 to vector<8x256xf32>
    %117 = arith.minimumf %113, %116 : vector<8x256xf32>
    %118 = math.exp %117 : vector<8x256xf32>
    %cst_79 = arith.constant 1.000000e+00 : f32
    %119 = vector.broadcast %cst_79 : f32 to vector<8x256xf32>
    %120 = arith.subf %118, %119 : vector<8x256xf32>
    %121 = arith.select %115, %113, %120 : vector<8x256xi1>, vector<8x256xf32>
    %cst_80 = arith.constant 0.000000e+00 : f32
    %122 = vector.broadcast %cst_80 : f32 to vector<8x256xf32>
    %123 = arith.subf %122, %113 : vector<8x256xf32>
    %cst_81 = arith.constant 0.000000e+00 : f32
    %124 = vector.broadcast %cst_81 : f32 to vector<8x256xf32>
    %125 = arith.cmpf ogt, %123, %124 : vector<8x256xf32>
    %cst_82 = arith.constant 0.000000e+00 : f32
    %126 = vector.broadcast %cst_82 : f32 to vector<8x256xf32>
    %127 = arith.minimumf %123, %126 : vector<8x256xf32>
    %128 = math.exp %127 : vector<8x256xf32>
    %cst_83 = arith.constant 1.000000e+00 : f32
    %129 = vector.broadcast %cst_83 : f32 to vector<8x256xf32>
    %130 = arith.subf %128, %129 : vector<8x256xf32>
    %131 = arith.select %125, %123, %130 : vector<8x256xi1>, vector<8x256xf32>
    %c17_i32_84 = arith.constant 17 : i32
    %132 = tpu.dynamic_rotate %121 by %c17_i32_84 dim 1 : vector<8x256xf32>, i32 -> vector<8x256xf32>
    %c0_85 = arith.constant 0 : index
    %c0_86 = arith.constant 0 : index
    %c0_87 = arith.constant 0 : index
    %133 = vector.load %arg5[%c0_85, %c0_86, %c0_87] : memref<6x1x256xf32, #tpu.memory_space<vmem>>, vector<1x1x256xf32>
    %134 = vector.shape_cast %133 : vector<1x1x256xf32> to vector<1x256xf32>
    %135 = vector.broadcast %134 : vector<1x256xf32> to vector<8x256xf32>
    %136 = arith.mulf %132, %135 : vector<8x256xf32>
    %c0_88 = arith.constant 0 : index
    %c0_89 = arith.constant 0 : index
    %137 = vector.load %arg17[%c0_88, %c0_89] : memref<112x256xf32, #tpu.memory_space<vmem>>, vector<8x256xf32>
    tpu.vector_store %arg17[%c0_88, %c0_89], %136 {strides = array<i32>} : memref<112x256xf32, #tpu.memory_space<vmem>>, vector<8x256xf32>,
    %c16_i32_90 = arith.constant 16 : i32
    %138 = tpu.dynamic_rotate %121 by %c16_i32_90 dim 1 : vector<8x256xf32>, i32 -> vector<8x256xf32>
    %c1_91 = arith.constant 1 : index
    %c0_92 = arith.constant 0 : index
    %c0_93 = arith.constant 0 : index
    %139 = vector.load %arg5[%c1_91, %c0_92, %c0_93] : memref<6x1x256xf32, #tpu.memory_space<vmem>>, vector<1x1x256xf32>
    %140 = vector.shape_cast %139 : vector<1x1x256xf32> to vector<1x256xf32>
    %141 = vector.broadcast %140 : vector<1x256xf32> to vector<8x256xf32>
    %142 = arith.mulf %138, %141 : vector<8x256xf32>
    %c8_94 = arith.constant 8 : index
    %c0_95 = arith.constant 0 : index
    %143 = vector.load %arg17[%c8_94, %c0_95] : memref<112x256xf32, #tpu.memory_space<vmem>>, vector<8x256xf32>
    tpu.vector_store %arg17[%c8_94, %c0_95], %142 {strides = array<i32>} : memref<112x256xf32, #tpu.memory_space<vmem>>, vector<8x256xf32>,
    %c15_i32_96 = arith.constant 15 : i32
    %144 = tpu.dynamic_rotate %121 by %c15_i32_96 dim 1 : vector<8x256xf32>, i32 -> vector<8x256xf32>
    %c2_97 = arith.constant 2 : index
    %c0_98 = arith.constant 0 : index
    %c0_99 = arith.constant 0 : index
    %145 = vector.load %arg5[%c2_97, %c0_98, %c0_99] : memref<6x1x256xf32, #tpu.memory_space<vmem>>, vector<1x1x256xf32>
    %146 = vector.shape_cast %145 : vector<1x1x256xf32> to vector<1x256xf32>
    %147 = vector.broadcast %146 : vector<1x256xf32> to vector<8x256xf32>
    %148 = arith.mulf %144, %147 : vector<8x256xf32>
    %c16_100 = arith.constant 16 : index
    %c0_101 = arith.constant 0 : index
    %149 = vector.load %arg17[%c16_100, %c0_101] : memref<112x256xf32, #tpu.memory_space<vmem>>, vector<8x256xf32>
    tpu.vector_store %arg17[%c16_100, %c0_101], %148 {strides = array<i32>} : memref<112x256xf32, #tpu.memory_space<vmem>>, vector<8x256xf32>,
    %c1_i32_102 = arith.constant 1 : i32
    %150 = tpu.dynamic_rotate %121 by %c1_i32_102 dim 1 : vector<8x256xf32>, i32 -> vector<8x256xf32>
    %c3_103 = arith.constant 3 : index
    %c0_104 = arith.constant 0 : index
    %c0_105 = arith.constant 0 : index
    %151 = vector.load %arg5[%c3_103, %c0_104, %c0_105] : memref<6x1x256xf32, #tpu.memory_space<vmem>>, vector<1x1x256xf32>
    %152 = vector.shape_cast %151 : vector<1x1x256xf32> to vector<1x256xf32>
    %153 = vector.broadcast %152 : vector<1x256xf32> to vector<8x256xf32>
    %154 = arith.mulf %150, %153 : vector<8x256xf32>
    %c24_106 = arith.constant 24 : index
    %c0_107 = arith.constant 0 : index
    %155 = vector.load %arg17[%c24_106, %c0_107] : memref<112x256xf32, #tpu.memory_space<vmem>>, vector<8x256xf32>
    tpu.vector_store %arg17[%c24_106, %c0_107], %154 {strides = array<i32>} : memref<112x256xf32, #tpu.memory_space<vmem>>, vector<8x256xf32>,
    %c32_108 = arith.constant 32 : index
    %c0_109 = arith.constant 0 : index
    %156 = vector.load %arg17[%c32_108, %c0_109] : memref<112x256xf32, #tpu.memory_space<vmem>>, vector<8x256xf32>
    tpu.vector_store %arg17[%c32_108, %c0_109], %121 {strides = array<i32>} : memref<112x256xf32, #tpu.memory_space<vmem>>, vector<8x256xf32>,
    %c255_i32_110 = arith.constant 255 : i32
    %157 = tpu.dynamic_rotate %121 by %c255_i32_110 dim 1 : vector<8x256xf32>, i32 -> vector<8x256xf32>
    %c5_111 = arith.constant 5 : index
    %c0_112 = arith.constant 0 : index
    %c0_113 = arith.constant 0 : index
    %158 = vector.load %arg5[%c5_111, %c0_112, %c0_113] : memref<6x1x256xf32, #tpu.memory_space<vmem>>, vector<1x1x256xf32>
    %159 = vector.shape_cast %158 : vector<1x1x256xf32> to vector<1x256xf32>
    %160 = vector.broadcast %159 : vector<1x256xf32> to vector<8x256xf32>
    %161 = arith.mulf %157, %160 : vector<8x256xf32>
    %c40_114 = arith.constant 40 : index
    %c0_115 = arith.constant 0 : index
    %162 = vector.load %arg17[%c40_114, %c0_115] : memref<112x256xf32, #tpu.memory_space<vmem>>, vector<8x256xf32>
    tpu.vector_store %arg17[%c40_114, %c0_115], %161 {strides = array<i32>} : memref<112x256xf32, #tpu.memory_space<vmem>>, vector<8x256xf32>,
    %c17_i32_116 = arith.constant 17 : i32
    %163 = tpu.dynamic_rotate %131 by %c17_i32_116 dim 1 : vector<8x256xf32>, i32 -> vector<8x256xf32>
    %c0_117 = arith.constant 0 : index
    %c0_118 = arith.constant 0 : index
    %c0_119 = arith.constant 0 : index
    %164 = vector.load %arg5[%c0_117, %c0_118, %c0_119] : memref<6x1x256xf32, #tpu.memory_space<vmem>>, vector<1x1x256xf32>
    %165 = vector.shape_cast %164 : vector<1x1x256xf32> to vector<1x256xf32>
    %166 = vector.broadcast %165 : vector<1x256xf32> to vector<8x256xf32>
    %167 = arith.mulf %163, %166 : vector<8x256xf32>
    %c48_120 = arith.constant 48 : index
    %c0_121 = arith.constant 0 : index
    %168 = vector.load %arg17[%c48_120, %c0_121] : memref<112x256xf32, #tpu.memory_space<vmem>>, vector<8x256xf32>
    tpu.vector_store %arg17[%c48_120, %c0_121], %167 {strides = array<i32>} : memref<112x256xf32, #tpu.memory_space<vmem>>, vector<8x256xf32>,
    %c16_i32_122 = arith.constant 16 : i32
    %169 = tpu.dynamic_rotate %131 by %c16_i32_122 dim 1 : vector<8x256xf32>, i32 -> vector<8x256xf32>
    %c1_123 = arith.constant 1 : index
    %c0_124 = arith.constant 0 : index
    %c0_125 = arith.constant 0 : index
    %170 = vector.load %arg5[%c1_123, %c0_124, %c0_125] : memref<6x1x256xf32, #tpu.memory_space<vmem>>, vector<1x1x256xf32>
    %171 = vector.shape_cast %170 : vector<1x1x256xf32> to vector<1x256xf32>
    %172 = vector.broadcast %171 : vector<1x256xf32> to vector<8x256xf32>
    %173 = arith.mulf %169, %172 : vector<8x256xf32>
    %c56_126 = arith.constant 56 : index
    %c0_127 = arith.constant 0 : index
    %174 = vector.load %arg17[%c56_126, %c0_127] : memref<112x256xf32, #tpu.memory_space<vmem>>, vector<8x256xf32>
    tpu.vector_store %arg17[%c56_126, %c0_127], %173 {strides = array<i32>} : memref<112x256xf32, #tpu.memory_space<vmem>>, vector<8x256xf32>,
    %c15_i32_128 = arith.constant 15 : i32
    %175 = tpu.dynamic_rotate %131 by %c15_i32_128 dim 1 : vector<8x256xf32>, i32 -> vector<8x256xf32>
    %c2_129 = arith.constant 2 : index
    %c0_130 = arith.constant 0 : index
    %c0_131 = arith.constant 0 : index
    %176 = vector.load %arg5[%c2_129, %c0_130, %c0_131] : memref<6x1x256xf32, #tpu.memory_space<vmem>>, vector<1x1x256xf32>
    %177 = vector.shape_cast %176 : vector<1x1x256xf32> to vector<1x256xf32>
    %178 = vector.broadcast %177 : vector<1x256xf32> to vector<8x256xf32>
    %179 = arith.mulf %175, %178 : vector<8x256xf32>
    %c64_132 = arith.constant 64 : index
    %c0_133 = arith.constant 0 : index
    %180 = vector.load %arg17[%c64_132, %c0_133] : memref<112x256xf32, #tpu.memory_space<vmem>>, vector<8x256xf32>
    tpu.vector_store %arg17[%c64_132, %c0_133], %179 {strides = array<i32>} : memref<112x256xf32, #tpu.memory_space<vmem>>, vector<8x256xf32>,
    %c1_i32_134 = arith.constant 1 : i32
    %181 = tpu.dynamic_rotate %131 by %c1_i32_134 dim 1 : vector<8x256xf32>, i32 -> vector<8x256xf32>
    %c3_135 = arith.constant 3 : index
    %c0_136 = arith.constant 0 : index
    %c0_137 = arith.constant 0 : index
    %182 = vector.load %arg5[%c3_135, %c0_136, %c0_137] : memref<6x1x256xf32, #tpu.memory_space<vmem>>, vector<1x1x256xf32>
    %183 = vector.shape_cast %182 : vector<1x1x256xf32> to vector<1x256xf32>
    %184 = vector.broadcast %183 : vector<1x256xf32> to vector<8x256xf32>
    %185 = arith.mulf %181, %184 : vector<8x256xf32>
    %c72_138 = arith.constant 72 : index
    %c0_139 = arith.constant 0 : index
    %186 = vector.load %arg17[%c72_138, %c0_139] : memref<112x256xf32, #tpu.memory_space<vmem>>, vector<8x256xf32>
    tpu.vector_store %arg17[%c72_138, %c0_139], %185 {strides = array<i32>} : memref<112x256xf32, #tpu.memory_space<vmem>>, vector<8x256xf32>,
    %c80_140 = arith.constant 80 : index
    %c0_141 = arith.constant 0 : index
    %187 = vector.load %arg17[%c80_140, %c0_141] : memref<112x256xf32, #tpu.memory_space<vmem>>, vector<8x256xf32>
    tpu.vector_store %arg17[%c80_140, %c0_141], %131 {strides = array<i32>} : memref<112x256xf32, #tpu.memory_space<vmem>>, vector<8x256xf32>,
    %c255_i32_142 = arith.constant 255 : i32
    %188 = tpu.dynamic_rotate %131 by %c255_i32_142 dim 1 : vector<8x256xf32>, i32 -> vector<8x256xf32>
    %c5_143 = arith.constant 5 : index
    %c0_144 = arith.constant 0 : index
    %c0_145 = arith.constant 0 : index
    %189 = vector.load %arg5[%c5_143, %c0_144, %c0_145] : memref<6x1x256xf32, #tpu.memory_space<vmem>>, vector<1x1x256xf32>
    %190 = vector.shape_cast %189 : vector<1x1x256xf32> to vector<1x256xf32>
    %191 = vector.broadcast %190 : vector<1x256xf32> to vector<8x256xf32>
    %192 = arith.mulf %188, %191 : vector<8x256xf32>
    %c88_146 = arith.constant 88 : index
    %c0_147 = arith.constant 0 : index
    %193 = vector.load %arg17[%c88_146, %c0_147] : memref<112x256xf32, #tpu.memory_space<vmem>>, vector<8x256xf32>
    tpu.vector_store %arg17[%c88_146, %c0_147], %192 {strides = array<i32>} : memref<112x256xf32, #tpu.memory_space<vmem>>, vector<8x256xf32>,
    %c0_148 = arith.constant 0 : index
    %c0_149 = arith.constant 0 : index
    %194 = vector.load %arg9[%c0_148, %c0_149] : memref<16x96xf32, #tpu.memory_space<vmem>>, vector<16x96xf32>
    %c0_150 = arith.constant 0 : index
    %c0_151 = arith.constant 0 : index
    %195 = vector.load %arg17[%c0_150, %c0_151] : memref<112x256xf32, #tpu.memory_space<vmem>>, vector<96x256xf32>
    %cst_152 = arith.constant dense<0.000000e+00> : vector<16x256xf32>
    %196 = tpu.matmul %194, %195, %cst_152 {dimension_numbers = #tpu.dot_dimension_numbers<[1], [0], [0], [1], [0, 0, 1, 1], [], []>} : vector<16x96xf32>, vector<96x256xf32>, vector<16x256xf32> -> vector<16x256xf32>
    %c0_153 = arith.constant 0 : index
    %c0_154 = arith.constant 0 : index
    %197 = vector.load %arg10[%c0_153, %c0_154] : memref<16x1xf32, #tpu.memory_space<vmem>>, vector<16x1xf32>
    %198 = vector.broadcast %197 : vector<16x1xf32> to vector<16x256xf32>
    %199 = arith.addf %196, %198 : vector<16x256xf32>
    %200 = vector.extract_strided_slice %199 {offsets = [0, 0], sizes = [8, 256], strides = [1, 1]} : vector<16x256xf32> to vector<8x256xf32>
    %201 = vector.extract_strided_slice %199 {offsets = [8, 0], sizes = [8, 256], strides = [1, 1]} : vector<16x256xf32> to vector<8x256xf32>
    %cst_155 = arith.constant 0.000000e+00 : f32
    %202 = vector.broadcast %cst_155 : f32 to vector<8x256xf32>
    %203 = arith.subf %202, %201 : vector<8x256xf32>
    %204 = math.exp %203 : vector<8x256xf32>
    %cst_156 = arith.constant 1.000000e+00 : f32
    %205 = vector.broadcast %cst_156 : f32 to vector<8x256xf32>
    %206 = arith.addf %205, %204 : vector<8x256xf32>
    %cst_157 = arith.constant 1.000000e+00 : f32
    %207 = vector.broadcast %cst_157 : f32 to vector<8x256xf32>
    %208 = arith.divf %207, %206 : vector<8x256xf32>
    %209 = arith.mulf %200, %208 : vector<8x256xf32>
    %210 = arith.addf %1, %209 : vector<8x256xf32>
    %c0_158 = arith.constant 0 : index
    %c0_159 = arith.constant 0 : index
    %c0_160 = arith.constant 0 : index
    %211 = vector.load %arg15[%c0_158, %c0_159, %c0_160] : memref<1x8x256xf32, #tpu.memory_space<vmem>>, vector<1x8x256xf32>
    %212 = vector.shape_cast %211 : vector<1x8x256xf32> to vector<8x256xf32>
    %213 = vector.shape_cast %210 : vector<8x256xf32> to vector<1x8x256xf32>
    tpu.vector_store %arg15[%c0_158, %c0_159, %c0_160], %213 {strides = array<i32>} : memref<1x8x256xf32, #tpu.memory_space<vmem>>, vector<1x8x256xf32>,
    %cst_161 = arith.constant 0.000000e+00 : f32
    %214 = vector.broadcast %cst_161 : f32 to vector<8x256xf32>
    %215 = arith.cmpf ogt, %210, %214 : vector<8x256xf32>
    %cst_162 = arith.constant 0.000000e+00 : f32
    %216 = vector.broadcast %cst_162 : f32 to vector<8x256xf32>
    %217 = arith.minimumf %210, %216 : vector<8x256xf32>
    %218 = math.exp %217 : vector<8x256xf32>
    %cst_163 = arith.constant 1.000000e+00 : f32
    %219 = vector.broadcast %cst_163 : f32 to vector<8x256xf32>
    %220 = arith.subf %218, %219 : vector<8x256xf32>
    %221 = arith.select %215, %210, %220 : vector<8x256xi1>, vector<8x256xf32>
    %cst_164 = arith.constant 0.000000e+00 : f32
    %222 = vector.broadcast %cst_164 : f32 to vector<8x256xf32>
    %223 = arith.cmpf ogt, %7, %222 : vector<8x256xf32>
    %cst_165 = arith.constant 0.000000e+00 : f32
    %224 = vector.broadcast %cst_165 : f32 to vector<8x256xf32>
    %225 = arith.minimumf %7, %224 : vector<8x256xf32>
    %226 = math.exp %225 : vector<8x256xf32>
    %cst_166 = arith.constant 1.000000e+00 : f32
    %227 = vector.broadcast %cst_166 : f32 to vector<8x256xf32>
    %228 = arith.subf %226, %227 : vector<8x256xf32>
    %229 = arith.select %223, %7, %228 : vector<8x256xi1>, vector<8x256xf32>
    %cst_167 = arith.constant 0.000000e+00 : f32
    %230 = vector.broadcast %cst_167 : f32 to vector<8x256xf32>
    %231 = arith.subf %230, %210 : vector<8x256xf32>
    %cst_168 = arith.constant 0.000000e+00 : f32
    %232 = vector.broadcast %cst_168 : f32 to vector<8x256xf32>
    %233 = arith.cmpf ogt, %231, %232 : vector<8x256xf32>
    %cst_169 = arith.constant 0.000000e+00 : f32
    %234 = vector.broadcast %cst_169 : f32 to vector<8x256xf32>
    %235 = arith.minimumf %231, %234 : vector<8x256xf32>
    %236 = math.exp %235 : vector<8x256xf32>
    %cst_170 = arith.constant 1.000000e+00 : f32
    %237 = vector.broadcast %cst_170 : f32 to vector<8x256xf32>
    %238 = arith.subf %236, %237 : vector<8x256xf32>
    %239 = arith.select %233, %231, %238 : vector<8x256xi1>, vector<8x256xf32>
    %cst_171 = arith.constant 0.000000e+00 : f32
    %240 = vector.broadcast %cst_171 : f32 to vector<8x256xf32>
    %241 = arith.subf %240, %7 : vector<8x256xf32>
    %cst_172 = arith.constant 0.000000e+00 : f32
    %242 = vector.broadcast %cst_172 : f32 to vector<8x256xf32>
    %243 = arith.cmpf ogt, %241, %242 : vector<8x256xf32>
    %cst_173 = arith.constant 0.000000e+00 : f32
    %244 = vector.broadcast %cst_173 : f32 to vector<8x256xf32>
    %245 = arith.minimumf %241, %244 : vector<8x256xf32>
    %246 = math.exp %245 : vector<8x256xf32>
    %cst_174 = arith.constant 1.000000e+00 : f32
    %247 = vector.broadcast %cst_174 : f32 to vector<8x256xf32>
    %248 = arith.subf %246, %247 : vector<8x256xf32>
    %249 = arith.select %243, %241, %248 : vector<8x256xi1>, vector<8x256xf32>
    %cst_175 = arith.constant 0.000000e+00 : f32
    %250 = vector.broadcast %cst_175 : f32 to vector<8x256xf32>
    %251 = arith.cmpf ogt, %5, %250 : vector<8x256xf32>
    %cst_176 = arith.constant 0.000000e+00 : f32
    %252 = vector.broadcast %cst_176 : f32 to vector<8x256xf32>
    %253 = arith.minimumf %5, %252 : vector<8x256xf32>
    %254 = math.exp %253 : vector<8x256xf32>
    %cst_177 = arith.constant 1.000000e+00 : f32
    %255 = vector.broadcast %cst_177 : f32 to vector<8x256xf32>
    %256 = arith.subf %254, %255 : vector<8x256xf32>
    %257 = arith.select %251, %5, %256 : vector<8x256xi1>, vector<8x256xf32>
    %cst_178 = arith.constant 0.000000e+00 : f32
    %258 = vector.broadcast %cst_178 : f32 to vector<8x256xf32>
    %259 = arith.subf %258, %5 : vector<8x256xf32>
    %cst_179 = arith.constant 0.000000e+00 : f32
    %260 = vector.broadcast %cst_179 : f32 to vector<8x256xf32>
    %261 = arith.cmpf ogt, %259, %260 : vector<8x256xf32>
    %cst_180 = arith.constant 0.000000e+00 : f32
    %262 = vector.broadcast %cst_180 : f32 to vector<8x256xf32>
    %263 = arith.minimumf %259, %262 : vector<8x256xf32>
    %264 = math.exp %263 : vector<8x256xf32>
    %cst_181 = arith.constant 1.000000e+00 : f32
    %265 = vector.broadcast %cst_181 : f32 to vector<8x256xf32>
    %266 = arith.subf %264, %265 : vector<8x256xf32>
    %267 = arith.select %261, %259, %266 : vector<8x256xi1>, vector<8x256xf32>
    %c17_i32_182 = arith.constant 17 : i32
    %268 = tpu.dynamic_rotate %257 by %c17_i32_182 dim 1 : vector<8x256xf32>, i32 -> vector<8x256xf32>
    %c0_183 = arith.constant 0 : index
    %c0_184 = arith.constant 0 : index
    %c0_185 = arith.constant 0 : index
    %269 = vector.load %arg6[%c0_183, %c0_184, %c0_185] : memref<4x1x256xf32, #tpu.memory_space<vmem>>, vector<1x1x256xf32>
    %270 = vector.shape_cast %269 : vector<1x1x256xf32> to vector<1x256xf32>
    %271 = vector.broadcast %270 : vector<1x256xf32> to vector<8x256xf32>
    %272 = arith.mulf %268, %271 : vector<8x256xf32>
    %c0_186 = arith.constant 0 : index
    %c0_187 = arith.constant 0 : index
    %273 = vector.load %arg17[%c0_186, %c0_187] : memref<112x256xf32, #tpu.memory_space<vmem>>, vector<8x256xf32>
    tpu.vector_store %arg17[%c0_186, %c0_187], %272 {strides = array<i32>} : memref<112x256xf32, #tpu.memory_space<vmem>>, vector<8x256xf32>,
    %c16_i32_188 = arith.constant 16 : i32
    %274 = tpu.dynamic_rotate %257 by %c16_i32_188 dim 1 : vector<8x256xf32>, i32 -> vector<8x256xf32>
    %c1_189 = arith.constant 1 : index
    %c0_190 = arith.constant 0 : index
    %c0_191 = arith.constant 0 : index
    %275 = vector.load %arg6[%c1_189, %c0_190, %c0_191] : memref<4x1x256xf32, #tpu.memory_space<vmem>>, vector<1x1x256xf32>
    %276 = vector.shape_cast %275 : vector<1x1x256xf32> to vector<1x256xf32>
    %277 = vector.broadcast %276 : vector<1x256xf32> to vector<8x256xf32>
    %278 = arith.mulf %274, %277 : vector<8x256xf32>
    %c8_192 = arith.constant 8 : index
    %c0_193 = arith.constant 0 : index
    %279 = vector.load %arg17[%c8_192, %c0_193] : memref<112x256xf32, #tpu.memory_space<vmem>>, vector<8x256xf32>
    tpu.vector_store %arg17[%c8_192, %c0_193], %278 {strides = array<i32>} : memref<112x256xf32, #tpu.memory_space<vmem>>, vector<8x256xf32>,
    %c1_i32_194 = arith.constant 1 : i32
    %280 = tpu.dynamic_rotate %257 by %c1_i32_194 dim 1 : vector<8x256xf32>, i32 -> vector<8x256xf32>
    %c2_195 = arith.constant 2 : index
    %c0_196 = arith.constant 0 : index
    %c0_197 = arith.constant 0 : index
    %281 = vector.load %arg6[%c2_195, %c0_196, %c0_197] : memref<4x1x256xf32, #tpu.memory_space<vmem>>, vector<1x1x256xf32>
    %282 = vector.shape_cast %281 : vector<1x1x256xf32> to vector<1x256xf32>
    %283 = vector.broadcast %282 : vector<1x256xf32> to vector<8x256xf32>
    %284 = arith.mulf %280, %283 : vector<8x256xf32>
    %c16_198 = arith.constant 16 : index
    %c0_199 = arith.constant 0 : index
    %285 = vector.load %arg17[%c16_198, %c0_199] : memref<112x256xf32, #tpu.memory_space<vmem>>, vector<8x256xf32>
    tpu.vector_store %arg17[%c16_198, %c0_199], %284 {strides = array<i32>} : memref<112x256xf32, #tpu.memory_space<vmem>>, vector<8x256xf32>,
    %c24_200 = arith.constant 24 : index
    %c0_201 = arith.constant 0 : index
    %286 = vector.load %arg17[%c24_200, %c0_201] : memref<112x256xf32, #tpu.memory_space<vmem>>, vector<8x256xf32>
    tpu.vector_store %arg17[%c24_200, %c0_201], %257 {strides = array<i32>} : memref<112x256xf32, #tpu.memory_space<vmem>>, vector<8x256xf32>,
    %c17_i32_202 = arith.constant 17 : i32
    %287 = tpu.dynamic_rotate %267 by %c17_i32_202 dim 1 : vector<8x256xf32>, i32 -> vector<8x256xf32>
    %c0_203 = arith.constant 0 : index
    %c0_204 = arith.constant 0 : index
    %c0_205 = arith.constant 0 : index
    %288 = vector.load %arg6[%c0_203, %c0_204, %c0_205] : memref<4x1x256xf32, #tpu.memory_space<vmem>>, vector<1x1x256xf32>
    %289 = vector.shape_cast %288 : vector<1x1x256xf32> to vector<1x256xf32>
    %290 = vector.broadcast %289 : vector<1x256xf32> to vector<8x256xf32>
    %291 = arith.mulf %287, %290 : vector<8x256xf32>
    %c32_206 = arith.constant 32 : index
    %c0_207 = arith.constant 0 : index
    %292 = vector.load %arg17[%c32_206, %c0_207] : memref<112x256xf32, #tpu.memory_space<vmem>>, vector<8x256xf32>
    tpu.vector_store %arg17[%c32_206, %c0_207], %291 {strides = array<i32>} : memref<112x256xf32, #tpu.memory_space<vmem>>, vector<8x256xf32>,
    %c16_i32_208 = arith.constant 16 : i32
    %293 = tpu.dynamic_rotate %267 by %c16_i32_208 dim 1 : vector<8x256xf32>, i32 -> vector<8x256xf32>
    %c1_209 = arith.constant 1 : index
    %c0_210 = arith.constant 0 : index
    %c0_211 = arith.constant 0 : index
    %294 = vector.load %arg6[%c1_209, %c0_210, %c0_211] : memref<4x1x256xf32, #tpu.memory_space<vmem>>, vector<1x1x256xf32>
    %295 = vector.shape_cast %294 : vector<1x1x256xf32> to vector<1x256xf32>
    %296 = vector.broadcast %295 : vector<1x256xf32> to vector<8x256xf32>
    %297 = arith.mulf %293, %296 : vector<8x256xf32>
    %c40_212 = arith.constant 40 : index
    %c0_213 = arith.constant 0 : index
    %298 = vector.load %arg17[%c40_212, %c0_213] : memref<112x256xf32, #tpu.memory_space<vmem>>, vector<8x256xf32>
    tpu.vector_store %arg17[%c40_212, %c0_213], %297 {strides = array<i32>} : memref<112x256xf32, #tpu.memory_space<vmem>>, vector<8x256xf32>,
    %c1_i32_214 = arith.constant 1 : i32
    %299 = tpu.dynamic_rotate %267 by %c1_i32_214 dim 1 : vector<8x256xf32>, i32 -> vector<8x256xf32>
    %c2_215 = arith.constant 2 : index
    %c0_216 = arith.constant 0 : index
    %c0_217 = arith.constant 0 : index
    %300 = vector.load %arg6[%c2_215, %c0_216, %c0_217] : memref<4x1x256xf32, #tpu.memory_space<vmem>>, vector<1x1x256xf32>
    %301 = vector.shape_cast %300 : vector<1x1x256xf32> to vector<1x256xf32>
    %302 = vector.broadcast %301 : vector<1x256xf32> to vector<8x256xf32>
    %303 = arith.mulf %299, %302 : vector<8x256xf32>
    %c48_218 = arith.constant 48 : index
    %c0_219 = arith.constant 0 : index
    %304 = vector.load %arg17[%c48_218, %c0_219] : memref<112x256xf32, #tpu.memory_space<vmem>>, vector<8x256xf32>
    tpu.vector_store %arg17[%c48_218, %c0_219], %303 {strides = array<i32>} : memref<112x256xf32, #tpu.memory_space<vmem>>, vector<8x256xf32>,
    %c56_220 = arith.constant 56 : index
    %c0_221 = arith.constant 0 : index
    %305 = vector.load %arg17[%c56_220, %c0_221] : memref<112x256xf32, #tpu.memory_space<vmem>>, vector<8x256xf32>
    tpu.vector_store %arg17[%c56_220, %c0_221], %267 {strides = array<i32>} : memref<112x256xf32, #tpu.memory_space<vmem>>, vector<8x256xf32>,
    %c64_222 = arith.constant 64 : index
    %c0_223 = arith.constant 0 : index
    %306 = vector.load %arg17[%c64_222, %c0_223] : memref<112x256xf32, #tpu.memory_space<vmem>>, vector<8x256xf32>
    tpu.vector_store %arg17[%c64_222, %c0_223], %221 {strides = array<i32>} : memref<112x256xf32, #tpu.memory_space<vmem>>, vector<8x256xf32>,
    %c72_224 = arith.constant 72 : index
    %c0_225 = arith.constant 0 : index
    %307 = vector.load %arg17[%c72_224, %c0_225] : memref<112x256xf32, #tpu.memory_space<vmem>>, vector<8x256xf32>
    tpu.vector_store %arg17[%c72_224, %c0_225], %229 {strides = array<i32>} : memref<112x256xf32, #tpu.memory_space<vmem>>, vector<8x256xf32>,
    %c80_226 = arith.constant 80 : index
    %c0_227 = arith.constant 0 : index
    %308 = vector.load %arg17[%c80_226, %c0_227] : memref<112x256xf32, #tpu.memory_space<vmem>>, vector<8x256xf32>
    tpu.vector_store %arg17[%c80_226, %c0_227], %239 {strides = array<i32>} : memref<112x256xf32, #tpu.memory_space<vmem>>, vector<8x256xf32>,
    %c88_228 = arith.constant 88 : index
    %c0_229 = arith.constant 0 : index
    %309 = vector.load %arg17[%c88_228, %c0_229] : memref<112x256xf32, #tpu.memory_space<vmem>>, vector<8x256xf32>
    tpu.vector_store %arg17[%c88_228, %c0_229], %249 {strides = array<i32>} : memref<112x256xf32, #tpu.memory_space<vmem>>, vector<8x256xf32>,
    %c0_230 = arith.constant 0 : index
    %c0_231 = arith.constant 0 : index
    %310 = vector.load %arg11[%c0_230, %c0_231] : memref<8x96xf32, #tpu.memory_space<vmem>>, vector<8x96xf32>
    %c0_232 = arith.constant 0 : index
    %c0_233 = arith.constant 0 : index
    %311 = vector.load %arg17[%c0_232, %c0_233] : memref<112x256xf32, #tpu.memory_space<vmem>>, vector<96x256xf32>
    %cst_234 = arith.constant dense<0.000000e+00> : vector<8x256xf32>
    %312 = tpu.matmul %310, %311, %cst_234 {dimension_numbers = #tpu.dot_dimension_numbers<[1], [0], [0], [1], [0, 0, 1, 1], [], []>} : vector<8x96xf32>, vector<96x256xf32>, vector<8x256xf32> -> vector<8x256xf32>
    %c0_235 = arith.constant 0 : index
    %c0_236 = arith.constant 0 : index
    %313 = vector.load %arg12[%c0_235, %c0_236] : memref<8x1xf32, #tpu.memory_space<vmem>>, vector<8x1xf32>
    %314 = vector.broadcast %313 : vector<8x1xf32> to vector<8x256xf32>
    %315 = arith.addf %312, %314 : vector<8x256xf32>
    %cst_237 = arith.constant 0.000000e+00 : f32
    %316 = vector.broadcast %cst_237 : f32 to vector<8x256xf32>
    %317 = arith.cmpf ogt, %315, %316 : vector<8x256xf32>
    %cst_238 = arith.constant 0.000000e+00 : f32
    %318 = vector.broadcast %cst_238 : f32 to vector<8x256xf32>
    %319 = arith.minimumf %315, %318 : vector<8x256xf32>
    %320 = math.exp %319 : vector<8x256xf32>
    %cst_239 = arith.constant 1.000000e+00 : f32
    %321 = vector.broadcast %cst_239 : f32 to vector<8x256xf32>
    %322 = arith.subf %320, %321 : vector<8x256xf32>
    %323 = arith.select %317, %315, %322 : vector<8x256xi1>, vector<8x256xf32>
    %cst_240 = arith.constant 0.000000e+00 : f32
    %324 = vector.broadcast %cst_240 : f32 to vector<8x256xf32>
    %325 = arith.subf %324, %315 : vector<8x256xf32>
    %cst_241 = arith.constant 0.000000e+00 : f32
    %326 = vector.broadcast %cst_241 : f32 to vector<8x256xf32>
    %327 = arith.cmpf ogt, %325, %326 : vector<8x256xf32>
    %cst_242 = arith.constant 0.000000e+00 : f32
    %328 = vector.broadcast %cst_242 : f32 to vector<8x256xf32>
    %329 = arith.minimumf %325, %328 : vector<8x256xf32>
    %330 = math.exp %329 : vector<8x256xf32>
    %cst_243 = arith.constant 1.000000e+00 : f32
    %331 = vector.broadcast %cst_243 : f32 to vector<8x256xf32>
    %332 = arith.subf %330, %331 : vector<8x256xf32>
    %333 = arith.select %327, %325, %332 : vector<8x256xi1>, vector<8x256xf32>
    %c17_i32_244 = arith.constant 17 : i32
    %334 = tpu.dynamic_rotate %323 by %c17_i32_244 dim 1 : vector<8x256xf32>, i32 -> vector<8x256xf32>
    %c0_245 = arith.constant 0 : index
    %c0_246 = arith.constant 0 : index
    %c0_247 = arith.constant 0 : index
    %335 = vector.load %arg6[%c0_245, %c0_246, %c0_247] : memref<4x1x256xf32, #tpu.memory_space<vmem>>, vector<1x1x256xf32>
    %336 = vector.shape_cast %335 : vector<1x1x256xf32> to vector<1x256xf32>
    %337 = vector.broadcast %336 : vector<1x256xf32> to vector<8x256xf32>
    %338 = arith.mulf %334, %337 : vector<8x256xf32>
    %c0_248 = arith.constant 0 : index
    %c0_249 = arith.constant 0 : index
    %339 = vector.load %arg17[%c0_248, %c0_249] : memref<112x256xf32, #tpu.memory_space<vmem>>, vector<8x256xf32>
    tpu.vector_store %arg17[%c0_248, %c0_249], %338 {strides = array<i32>} : memref<112x256xf32, #tpu.memory_space<vmem>>, vector<8x256xf32>,
    %c16_i32_250 = arith.constant 16 : i32
    %340 = tpu.dynamic_rotate %323 by %c16_i32_250 dim 1 : vector<8x256xf32>, i32 -> vector<8x256xf32>
    %c1_251 = arith.constant 1 : index
    %c0_252 = arith.constant 0 : index
    %c0_253 = arith.constant 0 : index
    %341 = vector.load %arg6[%c1_251, %c0_252, %c0_253] : memref<4x1x256xf32, #tpu.memory_space<vmem>>, vector<1x1x256xf32>
    %342 = vector.shape_cast %341 : vector<1x1x256xf32> to vector<1x256xf32>
    %343 = vector.broadcast %342 : vector<1x256xf32> to vector<8x256xf32>
    %344 = arith.mulf %340, %343 : vector<8x256xf32>
    %c8_254 = arith.constant 8 : index
    %c0_255 = arith.constant 0 : index
    %345 = vector.load %arg17[%c8_254, %c0_255] : memref<112x256xf32, #tpu.memory_space<vmem>>, vector<8x256xf32>
    tpu.vector_store %arg17[%c8_254, %c0_255], %344 {strides = array<i32>} : memref<112x256xf32, #tpu.memory_space<vmem>>, vector<8x256xf32>,
    %c1_i32_256 = arith.constant 1 : i32
    %346 = tpu.dynamic_rotate %323 by %c1_i32_256 dim 1 : vector<8x256xf32>, i32 -> vector<8x256xf32>
    %c2_257 = arith.constant 2 : index
    %c0_258 = arith.constant 0 : index
    %c0_259 = arith.constant 0 : index
    %347 = vector.load %arg6[%c2_257, %c0_258, %c0_259] : memref<4x1x256xf32, #tpu.memory_space<vmem>>, vector<1x1x256xf32>
    %348 = vector.shape_cast %347 : vector<1x1x256xf32> to vector<1x256xf32>
    %349 = vector.broadcast %348 : vector<1x256xf32> to vector<8x256xf32>
    %350 = arith.mulf %346, %349 : vector<8x256xf32>
    %c16_260 = arith.constant 16 : index
    %c0_261 = arith.constant 0 : index
    %351 = vector.load %arg17[%c16_260, %c0_261] : memref<112x256xf32, #tpu.memory_space<vmem>>, vector<8x256xf32>
    tpu.vector_store %arg17[%c16_260, %c0_261], %350 {strides = array<i32>} : memref<112x256xf32, #tpu.memory_space<vmem>>, vector<8x256xf32>,
    %c24_262 = arith.constant 24 : index
    %c0_263 = arith.constant 0 : index
    %352 = vector.load %arg17[%c24_262, %c0_263] : memref<112x256xf32, #tpu.memory_space<vmem>>, vector<8x256xf32>
    tpu.vector_store %arg17[%c24_262, %c0_263], %323 {strides = array<i32>} : memref<112x256xf32, #tpu.memory_space<vmem>>, vector<8x256xf32>,
    %c17_i32_264 = arith.constant 17 : i32
    %353 = tpu.dynamic_rotate %333 by %c17_i32_264 dim 1 : vector<8x256xf32>, i32 -> vector<8x256xf32>
    %c0_265 = arith.constant 0 : index
    %c0_266 = arith.constant 0 : index
    %c0_267 = arith.constant 0 : index
    %354 = vector.load %arg6[%c0_265, %c0_266, %c0_267] : memref<4x1x256xf32, #tpu.memory_space<vmem>>, vector<1x1x256xf32>
    %355 = vector.shape_cast %354 : vector<1x1x256xf32> to vector<1x256xf32>
    %356 = vector.broadcast %355 : vector<1x256xf32> to vector<8x256xf32>
    %357 = arith.mulf %353, %356 : vector<8x256xf32>
    %c32_268 = arith.constant 32 : index
    %c0_269 = arith.constant 0 : index
    %358 = vector.load %arg17[%c32_268, %c0_269] : memref<112x256xf32, #tpu.memory_space<vmem>>, vector<8x256xf32>
    tpu.vector_store %arg17[%c32_268, %c0_269], %357 {strides = array<i32>} : memref<112x256xf32, #tpu.memory_space<vmem>>, vector<8x256xf32>,
    %c16_i32_270 = arith.constant 16 : i32
    %359 = tpu.dynamic_rotate %333 by %c16_i32_270 dim 1 : vector<8x256xf32>, i32 -> vector<8x256xf32>
    %c1_271 = arith.constant 1 : index
    %c0_272 = arith.constant 0 : index
    %c0_273 = arith.constant 0 : index
    %360 = vector.load %arg6[%c1_271, %c0_272, %c0_273] : memref<4x1x256xf32, #tpu.memory_space<vmem>>, vector<1x1x256xf32>
    %361 = vector.shape_cast %360 : vector<1x1x256xf32> to vector<1x256xf32>
    %362 = vector.broadcast %361 : vector<1x256xf32> to vector<8x256xf32>
    %363 = arith.mulf %359, %362 : vector<8x256xf32>
    %c40_274 = arith.constant 40 : index
    %c0_275 = arith.constant 0 : index
    %364 = vector.load %arg17[%c40_274, %c0_275] : memref<112x256xf32, #tpu.memory_space<vmem>>, vector<8x256xf32>
    tpu.vector_store %arg17[%c40_274, %c0_275], %363 {strides = array<i32>} : memref<112x256xf32, #tpu.memory_space<vmem>>, vector<8x256xf32>,
    %c1_i32_276 = arith.constant 1 : i32
    %365 = tpu.dynamic_rotate %333 by %c1_i32_276 dim 1 : vector<8x256xf32>, i32 -> vector<8x256xf32>
    %c2_277 = arith.constant 2 : index
    %c0_278 = arith.constant 0 : index
    %c0_279 = arith.constant 0 : index
    %366 = vector.load %arg6[%c2_277, %c0_278, %c0_279] : memref<4x1x256xf32, #tpu.memory_space<vmem>>, vector<1x1x256xf32>
    %367 = vector.shape_cast %366 : vector<1x1x256xf32> to vector<1x256xf32>
    %368 = vector.broadcast %367 : vector<1x256xf32> to vector<8x256xf32>
    %369 = arith.mulf %365, %368 : vector<8x256xf32>
    %c48_280 = arith.constant 48 : index
    %c0_281 = arith.constant 0 : index
    %370 = vector.load %arg17[%c48_280, %c0_281] : memref<112x256xf32, #tpu.memory_space<vmem>>, vector<8x256xf32>
    tpu.vector_store %arg17[%c48_280, %c0_281], %369 {strides = array<i32>} : memref<112x256xf32, #tpu.memory_space<vmem>>, vector<8x256xf32>,
    %c56_282 = arith.constant 56 : index
    %c0_283 = arith.constant 0 : index
    %371 = vector.load %arg17[%c56_282, %c0_283] : memref<112x256xf32, #tpu.memory_space<vmem>>, vector<8x256xf32>
    tpu.vector_store %arg17[%c56_282, %c0_283], %333 {strides = array<i32>} : memref<112x256xf32, #tpu.memory_space<vmem>>, vector<8x256xf32>,
    %c0_284 = arith.constant 0 : index
    %c0_285 = arith.constant 0 : index
    %372 = vector.load %arg13[%c0_284, %c0_285] : memref<16x64xf32, #tpu.memory_space<vmem>>, vector<16x64xf32>
    %c0_286 = arith.constant 0 : index
    %c0_287 = arith.constant 0 : index
    %373 = vector.load %arg17[%c0_286, %c0_287] : memref<112x256xf32, #tpu.memory_space<vmem>>, vector<64x256xf32>
    %cst_288 = arith.constant dense<0.000000e+00> : vector<16x256xf32>
    %374 = tpu.matmul %372, %373, %cst_288 {dimension_numbers = #tpu.dot_dimension_numbers<[1], [0], [0], [1], [0, 0, 1, 1], [], []>} : vector<16x64xf32>, vector<64x256xf32>, vector<16x256xf32> -> vector<16x256xf32>
    %c0_289 = arith.constant 0 : index
    %c0_290 = arith.constant 0 : index
    %375 = vector.load %arg14[%c0_289, %c0_290] : memref<16x1xf32, #tpu.memory_space<vmem>>, vector<16x1xf32>
    %376 = vector.broadcast %375 : vector<16x1xf32> to vector<16x256xf32>
    %377 = arith.addf %374, %376 : vector<16x256xf32>
    %378 = vector.extract_strided_slice %377 {offsets = [0, 0], sizes = [8, 256], strides = [1, 1]} : vector<16x256xf32> to vector<8x256xf32>
    %379 = vector.extract_strided_slice %377 {offsets = [8, 0], sizes = [8, 256], strides = [1, 1]} : vector<16x256xf32> to vector<8x256xf32>
    %cst_291 = arith.constant 0.000000e+00 : f32
    %380 = vector.broadcast %cst_291 : f32 to vector<8x256xf32>
    %381 = arith.subf %380, %379 : vector<8x256xf32>
    %382 = math.exp %381 : vector<8x256xf32>
    %cst_292 = arith.constant 1.000000e+00 : f32
    %383 = vector.broadcast %cst_292 : f32 to vector<8x256xf32>
    %384 = arith.addf %383, %382 : vector<8x256xf32>
    %cst_293 = arith.constant 1.000000e+00 : f32
    %385 = vector.broadcast %cst_293 : f32 to vector<8x256xf32>
    %386 = arith.divf %385, %384 : vector<8x256xf32>
    %387 = arith.mulf %378, %386 : vector<8x256xf32>
    %388 = arith.addf %5, %387 : vector<8x256xf32>
    %c0_294 = arith.constant 0 : index
    %c0_295 = arith.constant 0 : index
    %c0_296 = arith.constant 0 : index
    %389 = vector.load %arg16[%c0_294, %c0_295, %c0_296] : memref<1x8x256xf32, #tpu.memory_space<vmem>>, vector<1x8x256xf32>
    %390 = vector.shape_cast %389 : vector<1x8x256xf32> to vector<8x256xf32>
    %391 = vector.shape_cast %388 : vector<8x256xf32> to vector<1x8x256xf32>
    tpu.vector_store %arg16[%c0_294, %c0_295, %c0_296], %391 {strides = array<i32>} : memref<1x8x256xf32, #tpu.memory_space<vmem>>, vector<1x8x256xf32>,
    return
  }
  func.func @transform_0(%arg0: i32) -> (i32, i32, i32) {
    %c0_i32 = arith.constant 0 : i32
    %c0_i32_0 = arith.constant 0 : i32
    %c0_i32_1 = arith.constant 0 : i32
    return %arg0, %c0_i32, %c0_i32_0 : i32, i32, i32
  }
  func.func @transform_1(%arg0: i32) -> (i32, i32, i32) {
    %c0_i32 = arith.constant 0 : i32
    %c0_i32_0 = arith.constant 0 : i32
    %c0_i32_1 = arith.constant 0 : i32
    return %arg0, %c0_i32, %c0_i32_0 : i32, i32, i32
  }
  func.func @transform_2(%arg0: i32) -> (i32, i32, i32) {
    %c0_i32 = arith.constant 0 : i32
    %c0_i32_0 = arith.constant 0 : i32
    %c0_i32_1 = arith.constant 0 : i32
    return %arg0, %c0_i32, %c0_i32_0 : i32, i32, i32
  }
  func.func @transform_3(%arg0: i32) -> (i32, i32, i32) {
    %c0_i32 = arith.constant 0 : i32
    %c0_i32_0 = arith.constant 0 : i32
    %c0_i32_1 = arith.constant 0 : i32
    return %arg0, %c0_i32, %c0_i32_0 : i32, i32, i32
  }
  func.func @transform_4(%arg0: i32) -> (i32, i32, i32) {
    %c0_i32 = arith.constant 0 : i32
    %c0_i32_0 = arith.constant 0 : i32
    %c0_i32_1 = arith.constant 0 : i32
    %c0_i32_2 = arith.constant 0 : i32
    return %c0_i32, %c0_i32_0, %c0_i32_1 : i32, i32, i32
  }
  func.func @transform_5(%arg0: i32) -> (i32, i32, i32) {
    %c0_i32 = arith.constant 0 : i32
    %c0_i32_0 = arith.constant 0 : i32
    %c0_i32_1 = arith.constant 0 : i32
    %c0_i32_2 = arith.constant 0 : i32
    return %c0_i32, %c0_i32_0, %c0_i32_1 : i32, i32, i32
  }
  func.func @transform_6(%arg0: i32) -> (i32, i32) {
    %c0_i32 = arith.constant 0 : i32
    %c0_i32_0 = arith.constant 0 : i32
    %c0_i32_1 = arith.constant 0 : i32
    return %c0_i32, %c0_i32_0 : i32, i32
  }
  func.func @transform_7(%arg0: i32) -> (i32, i32) {
    %c0_i32 = arith.constant 0 : i32
    %c0_i32_0 = arith.constant 0 : i32
    %c0_i32_1 = arith.constant 0 : i32
    return %c0_i32, %c0_i32_0 : i32, i32
  }
  func.func @transform_8(%arg0: i32) -> (i32, i32) {
    %c0_i32 = arith.constant 0 : i32
    %c0_i32_0 = arith.constant 0 : i32
    %c0_i32_1 = arith.constant 0 : i32
    return %c0_i32, %c0_i32_0 : i32, i32
  }
  func.func @transform_9(%arg0: i32) -> (i32, i32) {
    %c0_i32 = arith.constant 0 : i32
    %c0_i32_0 = arith.constant 0 : i32
    %c0_i32_1 = arith.constant 0 : i32
    return %c0_i32, %c0_i32_0 : i32, i32
  }
  func.func @transform_10(%arg0: i32) -> (i32, i32) {
    %c0_i32 = arith.constant 0 : i32
    %c0_i32_0 = arith.constant 0 : i32
    %c0_i32_1 = arith.constant 0 : i32
    return %c0_i32, %c0_i32_0 : i32, i32
  }
  func.func @transform_11(%arg0: i32) -> (i32, i32) {
    %c0_i32 = arith.constant 0 : i32
    %c0_i32_0 = arith.constant 0 : i32
    %c0_i32_1 = arith.constant 0 : i32
    return %c0_i32, %c0_i32_0 : i32, i32
  }
  func.func @transform_12(%arg0: i32) -> (i32, i32) {
    %c0_i32 = arith.constant 0 : i32
    %c0_i32_0 = arith.constant 0 : i32
    %c0_i32_1 = arith.constant 0 : i32
    return %c0_i32, %c0_i32_0 : i32, i32
  }
  func.func @transform_13(%arg0: i32) -> (i32, i32) {
    %c0_i32 = arith.constant 0 : i32
    %c0_i32_0 = arith.constant 0 : i32
    %c0_i32_1 = arith.constant 0 : i32
    return %c0_i32, %c0_i32_0 : i32, i32
  }
  func.func @transform_14(%arg0: i32) -> (i32, i32, i32) {
    %c0_i32 = arith.constant 0 : i32
    %c0_i32_0 = arith.constant 0 : i32
    %c0_i32_1 = arith.constant 0 : i32
    return %arg0, %c0_i32, %c0_i32_0 : i32, i32, i32
  }
  func.func @transform_15(%arg0: i32) -> (i32, i32, i32) {
    %c0_i32 = arith.constant 0 : i32
    %c0_i32_0 = arith.constant 0 : i32
    %c0_i32_1 = arith.constant 0 : i32
    return %arg0, %c0_i32, %c0_i32_0 : i32, i32, i32
  }
}

</mosaic_0001>

<llo_original>
// kernel: tpu_custom_call.1
$region0: #{tpu_custom_call.1}
  #allocation0 [shape = 'u32[]', space=smem, size = 0x4, offset = 0x4, fixed_abs, tag = 'smem constant byte address 0x4 - core index']
  #allocation1 [shape = 'u32[72,128]{1,0:T(1,128)}', space=vmem, size = 0x9000, scoped, tag = 'internal scratch']
  #allocation2 [shape = 'f32[112,256]{1,0:T(8,128)}', space=vmem, size = 0x1c000, scoped, tag = 'scratch operand']
  %s0 = inlined_call_operand.vmem [shape: f32[2,8,256], index: 0, kind: input, shape index: {}]
  %s1 = inlined_call_operand.hbm [shape: f32[2,8,256], index: 1, kind: input, shape index: {}]
  %s2 = inlined_call_operand.hbm [shape: f32[2,8,256], index: 2, kind: input, shape index: {}]
  %s3 = inlined_call_operand.hbm [shape: f32[2,8,256], index: 3, kind: input, shape index: {}]
  %s4 = inlined_call_operand.hbm [shape: f32[6,1,256], index: 4, kind: input, shape index: {}]
  %s5 = inlined_call_operand.hbm [shape: f32[4,1,256], index: 5, kind: input, shape index: {}]
  %s6 = inlined_call_operand.hbm [shape: f32[8,112], index: 6, kind: input, shape index: {}]
  %s7 = inlined_call_operand.vmem [shape: f32[8,1], index: 7, kind: input, shape index: {}]
  %s8 = inlined_call_operand.vmem [shape: f32[16,96], index: 8, kind: input, shape index: {}]
  %s9 = inlined_call_operand.vmem [shape: f32[16,1], index: 9, kind: input, shape index: {}]
  %s10 = inlined_call_operand.vmem [shape: f32[8,96], index: 10, kind: input, shape index: {}]
  %s11 = inlined_call_operand.vmem [shape: f32[8,1], index: 11, kind: input, shape index: {}]
  %s12 = inlined_call_operand.hbm [shape: f32[16,64], index: 12, kind: input, shape index: {}]
  %s13 = inlined_call_operand.vmem [shape: f32[16,1], index: 13, kind: input, shape index: {}]
  %s14 = inlined_call_operand.hbm [shape: f32[2,8,256], index: 14, kind: output, shape index: {0}]
  %s15 = inlined_call_operand.hbm [shape: f32[2,8,256], index: 15, kind: output, shape index: {1}]
  %16 = xla_tuple %s14, %s15
  %s17 = sld [smem:[#allocation0]]
  $region125: #{tpu_custom_call.1} parent=0
    _
  %s19 = ssub.s32 1, %s17
  %s20 = scalar_select 0, %s19, %s17
  $region1: #{tpu_custom_call.1} parent=0
    #allocation3 [shape = 'u8[16384]{0}', space=vmem, size = 0x4000, scoped, tag = 'input window, operand 1']
    #allocation4 [shape = 's32[2]{0}', space=sflag, size = 0x8, scoped, tag = 'scoped memory for tpu_custom_call.1']
    #allocation5 [shape = 's32[2]{0}', space=sflag, size = 0x8, scoped, tag = 'scoped memory for tpu_custom_call.1']
    #allocation6 [shape = 'u8[16384]{0}', space=vmem, size = 0x4000, scoped, tag = 'input window, operand 2']
    #allocation7 [shape = 's32[2]{0}', space=sflag, size = 0x8, scoped, tag = 'scoped memory for tpu_custom_call.1']
    #allocation8 [shape = 'u8[16384]{0}', space=vmem, size = 0x4000, scoped, tag = 'input window, operand 3']
    #allocation9 [shape = 'u8[6144]{0}', space=vmem, size = 0x1800, scoped, tag = 'input window, operand 4, single buffered']
    #allocation10 [shape = 's32[1]{0}', space=sflag, size = 0x4, scoped, tag = 'scoped memory for tpu_custom_call.1']
    #allocation11 [shape = 'u8[4096]{0}', space=vmem, size = 0x1000, scoped, tag = 'input window, operand 5, single buffered']
    #allocation12 [shape = 'u8[4096]{0}', space=vmem, size = 0x1000, scoped, tag = 'input window, operand 6, single buffered']
    #allocation13 [shape = 's32[1]{0}', space=sflag, size = 0x4, scoped, tag = 'scoped memory for tpu_custom_call.1']
    #allocation14 [shape = 'u8[8192]{0}', space=vmem, size = 0x2000, scoped, tag = 'input window, operand 12, single buffered']
    #allocation15 [shape = 'u8[16384]{0}', space=vmem, size = 0x4000, scoped, tag = 'output window, operand 0']
    #allocation16 [shape = 'u8[16384]{0}', space=vmem, size = 0x4000, scoped, tag = 'output window, operand 1']
    #allocation17 [shape = 's32[2]{0}', space=sflag, size = 0x8, scoped, tag = 'scoped memory for tpu_custom_call.1']
    %21 = vsyncpa [#allocation4], 0
    %s22 = scalar_lea.sflag [#allocation4], 1
    %23 = vsyncpa %s22, 0
    %24 = vsyncpa [#allocation7], 0
    %s25 = scalar_lea.sflag [#allocation7], 1
    %26 = vsyncpa %s25, 0
    %27 = vsyncpa [#allocation10], 0
    %28 = vsyncpa [#allocation13], 0
    %29 = vsyncpa [#allocation5], 0
    %s30 = scalar_lea.sflag [#allocation5], 1
    %31 = vsyncpa %s30, 0
    %32 = vsyncpa [#allocation17], 0
    %s33 = scalar_lea.sflag [#allocation17], 1
    %34 = vsyncpa %s33, 0
    loop: start=0, step=1, limit=4
    $region2: #{tpu_custom_call.1} parent=1 // loop_pre_header
      _
    $region3: #{tpu_custom_call.1} parent=1 // loop_header
      %s36 = sphi 0, %s40
      %p37 = scmp.ge.s32.totalorder %s36, 4
      %s46 = sphi 0, %s48
      %s49 = sphi 0, %s46
      %s50 = sphi 0, %s49
      %s66 = sphi 0, %s50
      %s72 = sphi 0, %s74
      %s75 = sphi 0, %s72
      %s76 = sphi 0, %s75
      %s92 = sphi 0, %s76
      %s98 = sphi 0, %s100
      %s101 = sphi 0, %s98
      %s102 = sphi 0, %s101
      %s118 = sphi 0, %s102
      %s124 = sphi 0, %s126
      %s127 = sphi 0, %s124
      %s128 = sphi 0, %s127
      %s144 = sphi 0, %s128
      %s148 = sphi 0, %s148
      %s150 = sphi 0, %s148
      %s151 = sphi 0, %s150
      %s165 = sphi 0, %s151
      %s169 = sphi 0, %s169
      %s171 = sphi 0, %s169
      %s172 = sphi 0, %s171
      %s186 = sphi 0, %s172
      %s190 = sphi 0, %s190
      %s192 = sphi 0, %s190
      %s193 = sphi 0, %s192
      %s207 = sphi 0, %s193
      %s211 = sphi 0, %s211
      %s213 = sphi 0, %s211
      %s214 = sphi 0, %s213
      %s228 = sphi 0, %s214
      %s232 = sphi 0, %s232
      %s234 = sphi 0, %s232
      %s235 = sphi 0, %s234
      %s249 = sphi 0, %s235
      %s253 = sphi 0, %s253
      %s255 = sphi 0, %s253
      %s256 = sphi 0, %s255
      %s270 = sphi 0, %s256
      %s274 = sphi 0, %s274
      %s276 = sphi 0, %s274
      %s277 = sphi 0, %s276
      %s291 = sphi 0, %s277
      %s295 = sphi 0, %s295
      %s297 = sphi 0, %s295
      %s298 = sphi 0, %s297
      %s312 = sphi 0, %s298
      %s316 = sphi 0, %s316
      %s318 = sphi 0, %s316
      %s319 = sphi 0, %s318
      %s333 = sphi 0, %s319
      %s337 = sphi 0, %s337
      %s339 = sphi 0, %s337
      %s340 = sphi 0, %s339
      %s354 = sphi 0, %s340
      %s360 = sphi 0, %s362
      %s363 = sphi 0, %s360
      %s364 = sphi 0, %s363
      %s380 = sphi 0, %s364
      %s386 = sphi 0, %s388
      %s389 = sphi 0, %s386
      %s390 = sphi 0, %s389
      %s406 = sphi 0, %s390
    $region4: #{tpu_custom_call.1} parent=1 // loop_header_branch
      %39 = sbr.rel (%p37) target = $region8
    $region5: #{tpu_custom_call.1} parent=1 // loop_body
      %s41 = ssub.s32 %s36, 1
      %s42 = ssub.s32 %s36, 2
      %s43 = sadd.s32 %s36, 1
      %s44 = ssub.s32 %s36, %s43
      %p45 = scmp.eq.s32.totalorder %s44, 0
      %s47 = sadd.s32 %s46, 1
      %s48 = scalar_select %p45, %s46, %s47
      %p51 = pneg %p45
      %p52 = scmp.eq.s32.totalorder %s36, 1
      %p53 = por %p51, %p52
      %p54 = scmp.ne.s32.totalorder %s46, %s49
      %p55 = scmp.eq.s32.totalorder %s36, 0
      %p56 = por %p54, %p55
      %p57 = scmp.ne.s32.totalorder %s46, %s49
      %p58 = scmp.eq.s32.totalorder %s41, 1
      %p59 = por %p57, %p58
      %p60 = scmp.ne.s32.totalorder %s49, %s50
      %p61 = scmp.eq.s32.totalorder %s41, 0
      %p62 = por %p60, %p61
      %p63 = scmp.ne.s32.totalorder %s49, %s50
      %p64 = scmp.eq.s32.totalorder %s42, 1
      %p65 = por %p63, %p64
      %p67 = scmp.ne.s32.totalorder %s50, %s66
      %p68 = scmp.eq.s32.totalorder %s42, 0
      %p69 = por %p67, %p68
      %s70 = ssub.s32 %s36, %s43
      %p71 = scmp.eq.s32.totalorder %s70, 0
      %s73 = sadd.s32 %s72, 1
      %s74 = scalar_select %p71, %s72, %s73
      %p77 = pneg %p71
      %p78 = scmp.eq.s32.totalorder %s36, 1
      %p79 = por %p77, %p78
      %p80 = scmp.ne.s32.totalorder %s72, %s75
      %p81 = scmp.eq.s32.totalorder %s36, 0
      %p82 = por %p80, %p81
      %p83 = scmp.ne.s32.totalorder %s72, %s75
      %p84 = scmp.eq.s32.totalorder %s41, 1
      %p85 = por %p83, %p84
      %p86 = scmp.ne.s32.totalorder %s75, %s76
      %p87 = scmp.eq.s32.totalorder %s41, 0
      %p88 = por %p86, %p87
      %p89 = scmp.ne.s32.totalorder %s75, %s76
      %p90 = scmp.eq.s32.totalorder %s42, 1
      %p91 = por %p89, %p90
      %p93 = scmp.ne.s32.totalorder %s76, %s92
      %p94 = scmp.eq.s32.totalorder %s42, 0
      %p95 = por %p93, %p94
      %s96 = ssub.s32 %s36, %s43
      %p97 = scmp.eq.s32.totalorder %s96, 0
      %s99 = sadd.s32 %s98, 1
      %s100 = scalar_select %p97, %s98, %s99
      %p103 = pneg %p97
      %p104 = scmp.eq.s32.totalorder %s36, 1
      %p105 = por %p103, %p104
      %p106 = scmp.ne.s32.totalorder %s98, %s101
      %p107 = scmp.eq.s32.totalorder %s36, 0
      %p108 = por %p106, %p107
      %p109 = scmp.ne.s32.totalorder %s98, %s101
      %p110 = scmp.eq.s32.totalorder %s41, 1
      %p111 = por %p109, %p110
      %p112 = scmp.ne.s32.totalorder %s101, %s102
      %p113 = scmp.eq.s32.totalorder %s41, 0
      %p114 = por %p112, %p113
      %p115 = scmp.ne.s32.totalorder %s101, %s102
      %p116 = scmp.eq.s32.totalorder %s42, 1
      %p117 = por %p115, %p116
      %p119 = scmp.ne.s32.totalorder %s102, %s118
      %p120 = scmp.eq.s32.totalorder %s42, 0
      %p121 = por %p119, %p120
      %s122 = ssub.s32 %s36, %s43
      %p123 = scmp.eq.s32.totalorder %s122, 0
      %s125 = sadd.s32 %s124, 1
      %s126 = scalar_select %p123, %s124, %s125
      %p129 = pneg %p123
      %p130 = scmp.eq.s32.totalorder %s36, 1
      %p131 = por %p129, %p130
      %p132 = scmp.ne.s32.totalorder %s124, %s127
      %p133 = scmp.eq.s32.totalorder %s36, 0
      %p134 = por %p132, %p133
      %p135 = scmp.ne.s32.totalorder %s124, %s127
      %p136 = scmp.eq.s32.totalorder %s41, 1
      %p137 = por %p135, %p136
      %p138 = scmp.ne.s32.totalorder %s127, %s128
      %p139 = scmp.eq.s32.totalorder %s41, 0
      %p140 = por %p138, %p139
      %p141 = scmp.ne.s32.totalorder %s127, %s128
      %p142 = scmp.eq.s32.totalorder %s42, 1
      %p143 = por %p141, %p142
      %p145 = scmp.ne.s32.totalorder %s128, %s144
      %p146 = scmp.eq.s32.totalorder %s42, 0
      %p147 = por %p145, %p146
      %s149 = sadd.s32 %s148, 1
      %p152 = scmp.eq.s32.totalorder %s36, 1
      %p153 = scmp.ne.s32.totalorder %s148, %s150
      %p154 = scmp.eq.s32.totalorder %s36, 0
      %p155 = por %p153, %p154
      %p156 = scmp.ne.s32.totalorder %s148, %s150
      %p157 = scmp.eq.s32.totalorder %s41, 1
      %p158 = por %p156, %p157
      %p159 = scmp.ne.s32.totalorder %s150, %s151
      %p160 = scmp.eq.s32.totalorder %s41, 0
      %p161 = por %p159, %p160
      %p162 = scmp.ne.s32.totalorder %s150, %s151
      %p163 = scmp.eq.s32.totalorder %s42, 1
      %p164 = por %p162, %p163
      %p166 = scmp.ne.s32.totalorder %s151, %s165
      %p167 = scmp.eq.s32.totalorder %s42, 0
      %p168 = por %p166, %p167
      %s170 = sadd.s32 %s169, 1
      %p173 = scmp.eq.s32.totalorder %s36, 1
      %p174 = scmp.ne.s32.totalorder %s169, %s171
      %p175 = scmp.eq.s32.totalorder %s36, 0
      %p176 = por %p174, %p175
      %p177 = scmp.ne.s32.totalorder %s169, %s171
      %p178 = scmp.eq.s32.totalorder %s41, 1
      %p179 = por %p177, %p178
      %p180 = scmp.ne.s32.totalorder %s171, %s172
      %p181 = scmp.eq.s32.totalorder %s41, 0
      %p182 = por %p180, %p181
      %p183 = scmp.ne.s32.totalorder %s171, %s172
      %p184 = scmp.eq.s32.totalorder %s42, 1
      %p185 = por %p183, %p184
      %p187 = scmp.ne.s32.totalorder %s172, %s186
      %p188 = scmp.eq.s32.totalorder %s42, 0
      %p189 = por %p187, %p188
      %s191 = sadd.s32 %s190, 1
      %p194 = scmp.eq.s32.totalorder %s36, 1
      %p195 = scmp.ne.s32.totalorder %s190, %s192
      %p196 = scmp.eq.s32.totalorder %s36, 0
      %p197 = por %p195, %p196
      %p198 = scmp.ne.s32.totalorder %s190, %s192
      %p199 = scmp.eq.s32.totalorder %s41, 1
      %p200 = por %p198, %p199
      %p201 = scmp.ne.s32.totalorder %s192, %s193
      %p202 = scmp.eq.s32.totalorder %s41, 0
      %p203 = por %p201, %p202
      %p204 = scmp.ne.s32.totalorder %s192, %s193
      %p205 = scmp.eq.s32.totalorder %s42, 1
      %p206 = por %p204, %p205
      %p208 = scmp.ne.s32.totalorder %s193, %s207
      %p209 = scmp.eq.s32.totalorder %s42, 0
      %p210 = por %p208, %p209
      %s212 = sadd.s32 %s211, 1
      %p215 = scmp.eq.s32.totalorder %s36, 1
      %p216 = scmp.ne.s32.totalorder %s211, %s213
      %p217 = scmp.eq.s32.totalorder %s36, 0
      %p218 = por %p216, %p217
      %p219 = scmp.ne.s32.totalorder %s211, %s213
      %p220 = scmp.eq.s32.totalorder %s41, 1
      %p221 = por %p219, %p220
      %p222 = scmp.ne.s32.totalorder %s213, %s214
      %p223 = scmp.eq.s32.totalorder %s41, 0
      %p224 = por %p222, %p223
      %p225 = scmp.ne.s32.totalorder %s213, %s214
      %p226 = scmp.eq.s32.totalorder %s42, 1
      %p227 = por %p225, %p226
      %p229 = scmp.ne.s32.totalorder %s214, %s228
      %p230 = scmp.eq.s32.totalorder %s42, 0
      %p231 = por %p229, %p230
      %s233 = sadd.s32 %s232, 1
      %p236 = scmp.eq.s32.totalorder %s36, 1
      %p237 = scmp.ne.s32.totalorder %s232, %s234
      %p238 = scmp.eq.s32.totalorder %s36, 0
      %p239 = por %p237, %p238
      %p240 = scmp.ne.s32.totalorder %s232, %s234
      %p241 = scmp.eq.s32.totalorder %s41, 1
      %p242 = por %p240, %p241
      %p243 = scmp.ne.s32.totalorder %s234, %s235
      %p244 = scmp.eq.s32.totalorder %s41, 0
      %p245 = por %p243, %p244
      %p246 = scmp.ne.s32.totalorder %s234, %s235
      %p247 = scmp.eq.s32.totalorder %s42, 1
      %p248 = por %p246, %p247
      %p250 = scmp.ne.s32.totalorder %s235, %s249
      %p251 = scmp.eq.s32.totalorder %s42, 0
      %p252 = por %p250, %p251
      %s254 = sadd.s32 %s253, 1
      %p257 = scmp.eq.s32.totalorder %s36, 1
      %p258 = scmp.ne.s32.totalorder %s253, %s255
      %p259 = scmp.eq.s32.totalorder %s36, 0
      %p260 = por %p258, %p259
      %p261 = scmp.ne.s32.totalorder %s253, %s255
      %p262 = scmp.eq.s32.totalorder %s41, 1
      %p263 = por %p261, %p262
      %p264 = scmp.ne.s32.totalorder %s255, %s256
      %p265 = scmp.eq.s32.totalorder %s41, 0
      %p266 = por %p264, %p265
      %p267 = scmp.ne.s32.totalorder %s255, %s256
      %p268 = scmp.eq.s32.totalorder %s42, 1
      %p269 = por %p267, %p268
      %p271 = scmp.ne.s32.totalorder %s256, %s270
      %p272 = scmp.eq.s32.totalorder %s42, 0
      %p273 = por %p271, %p272
      %s275 = sadd.s32 %s274, 1
      %p278 = scmp.eq.s32.totalorder %s36, 1
      %p279 = scmp.ne.s32.totalorder %s274, %s276
      %p280 = scmp.eq.s32.totalorder %s36, 0
      %p281 = por %p279, %p280
      %p282 = scmp.ne.s32.totalorder %s274, %s276
      %p283 = scmp.eq.s32.totalorder %s41, 1
      %p284 = por %p282, %p283
      %p285 = scmp.ne.s32.totalorder %s276, %s277
      %p286 = scmp.eq.s32.totalorder %s41, 0
      %p287 = por %p285, %p286
      %p288 = scmp.ne.s32.totalorder %s276, %s277
      %p289 = scmp.eq.s32.totalorder %s42, 1
      %p290 = por %p288, %p289
      %p292 = scmp.ne.s32.totalorder %s277, %s291
      %p293 = scmp.eq.s32.totalorder %s42, 0
      %p294 = por %p292, %p293
      %s296 = sadd.s32 %s295, 1
      %p299 = scmp.eq.s32.totalorder %s36, 1
      %p300 = scmp.ne.s32.totalorder %s295, %s297
      %p301 = scmp.eq.s32.totalorder %s36, 0
      %p302 = por %p300, %p301
      %p303 = scmp.ne.s32.totalorder %s295, %s297
      %p304 = scmp.eq.s32.totalorder %s41, 1
      %p305 = por %p303, %p304
      %p306 = scmp.ne.s32.totalorder %s297, %s298
      %p307 = scmp.eq.s32.totalorder %s41, 0
      %p308 = por %p306, %p307
      %p309 = scmp.ne.s32.totalorder %s297, %s298
      %p310 = scmp.eq.s32.totalorder %s42, 1
      %p311 = por %p309, %p310
      %p313 = scmp.ne.s32.totalorder %s298, %s312
      %p314 = scmp.eq.s32.totalorder %s42, 0
      %p315 = por %p313, %p314
      %s317 = sadd.s32 %s316, 1
      %p320 = scmp.eq.s32.totalorder %s36, 1
      %p321 = scmp.ne.s32.totalorder %s316, %s318
      %p322 = scmp.eq.s32.totalorder %s36, 0
      %p323 = por %p321, %p322
      %p324 = scmp.ne.s32.totalorder %s316, %s318
      %p325 = scmp.eq.s32.totalorder %s41, 1
      %p326 = por %p324, %p325
      %p327 = scmp.ne.s32.totalorder %s318, %s319
      %p328 = scmp.eq.s32.totalorder %s41, 0
      %p329 = por %p327, %p328
      %p330 = scmp.ne.s32.totalorder %s318, %s319
      %p331 = scmp.eq.s32.totalorder %s42, 1
      %p332 = por %p330, %p331
      %p334 = scmp.ne.s32.totalorder %s319, %s333
      %p335 = scmp.eq.s32.totalorder %s42, 0
      %p336 = por %p334, %p335
      %s338 = sadd.s32 %s337, 1
      %p341 = scmp.eq.s32.totalorder %s36, 1
      %p342 = scmp.ne.s32.totalorder %s337, %s339
      %p343 = scmp.eq.s32.totalorder %s36, 0
      %p344 = por %p342, %p343
      %p345 = scmp.ne.s32.totalorder %s337, %s339
      %p346 = scmp.eq.s32.totalorder %s41, 1
      %p347 = por %p345, %p346
      %p348 = scmp.ne.s32.totalorder %s339, %s340
      %p349 = scmp.eq.s32.totalorder %s41, 0
      %p350 = por %p348, %p349
      %p351 = scmp.ne.s32.totalorder %s339, %s340
      %p352 = scmp.eq.s32.totalorder %s42, 1
      %p353 = por %p351, %p352
      %p355 = scmp.ne.s32.totalorder %s340, %s354
      %p356 = scmp.eq.s32.totalorder %s42, 0
      %p357 = por %p355, %p356
      %s358 = ssub.s32 %s36, %s43
      %p359 = scmp.eq.s32.totalorder %s358, 0
      %s361 = sadd.s32 %s360, 1
      %s362 = scalar_select %p359, %s360, %s361
      %p365 = pneg %p359
      %p366 = scmp.eq.s32.totalorder %s36, 1
      %p367 = por %p365, %p366
      %p368 = scmp.ne.s32.totalorder %s360, %s363
      %p369 = scmp.eq.s32.totalorder %s36, 0
      %p370 = por %p368, %p369
      %p371 = scmp.ne.s32.totalorder %s360, %s363
      %p372 = scmp.eq.s32.totalorder %s41, 1
      %p373 = por %p371, %p372
      %p374 = scmp.ne.s32.totalorder %s363, %s364
      %p375 = scmp.eq.s32.totalorder %s41, 0
      %p376 = por %p374, %p375
      %p377 = scmp.ne.s32.totalorder %s363, %s364
      %p378 = scmp.eq.s32.totalorder %s42, 1
      %p379 = por %p377, %p378
      %p381 = scmp.ne.s32.totalorder %s364, %s380
      %p382 = scmp.eq.s32.totalorder %s42, 0
      %p383 = por %p381, %p382
      %s384 = ssub.s32 %s36, %s43
      %p385 = scmp.eq.s32.totalorder %s384, 0
      %s387 = sadd.s32 %s386, 1
      %s388 = scalar_select %p385, %s386, %s387
      %p391 = pneg %p385
      %p392 = scmp.eq.s32.totalorder %s36, 1
      %p393 = por %p391, %p392
      %p394 = scmp.ne.s32.totalorder %s386, %s389
      %p395 = scmp.eq.s32.totalorder %s36, 0
      %p396 = por %p394, %p395
      %p397 = scmp.ne.s32.totalorder %s386, %s389
      %p398 = scmp.eq.s32.totalorder %s41, 1
      %p399 = por %p397, %p398
      %p400 = scmp.ne.s32.totalorder %s389, %s390
      %p401 = scmp.eq.s32.totalorder %s41, 0
      %p402 = por %p400, %p401
      %p403 = scmp.ne.s32.totalorder %s389, %s390
      %p404 = scmp.eq.s32.totalorder %s42, 1
      %p405 = por %p403, %p404
      %p407 = scmp.ne.s32.totalorder %s390, %s406
      %p408 = scmp.eq.s32.totalorder %s42, 0
      %p409 = por %p407, %p408
      %p410 = scmp.le.s32.totalorder 1, %s36
      %p411 = scmp.lt.s32.totalorder %s36, 3
      %p412 = pnand %p410, %p411
      %p413 = pneg %p412
      // Predicated region
      $region9: #{tpu_custom_call.1} parent=5 // pred_check
        _
      $region10: #{tpu_custom_call.1} parent=5 // pred_check_branch
        %415 = sbr.rel (%p412) target = $region12
      $region11: #{tpu_custom_call.1} parent=5 // pred_region
        %s416 = ssub.s32 %s36, 1
        // Predicated region
        $region13: #{tpu_custom_call.1} parent=11 // pred_check
          %p417 = pneg %p161
        $region14: #{tpu_custom_call.1} parent=11 // pred_check_branch
          %419 = sbr.rel (%p417) target = $region16
        $region15: #{tpu_custom_call.1} parent=11 // pred_region
          %421 = vsyncadd [#allocation10], 0
          %s422 = sshll.u32 %s4, 4
          %s423 = int_to_ptr.hbm [resolvable:$true] %s422
          %s424 = sshll.u32 [#allocation9], 4
          %s425 = int_to_ptr.vmem [resolvable:$true] %s424
          %430 = dma.hbm_to_vmem [thread:$0]  %s423, 192, %s425, [#allocation10], 32, 32, 2
        $region16: #{tpu_custom_call.1} parent=11 // pred_fallthru
          _
        // Predicated region
        $region17: #{tpu_custom_call.1} parent=11 // pred_check
          %p431 = pneg %p182
        $region18: #{tpu_custom_call.1} parent=11 // pred_check_branch
          %433 = sbr.rel (%p431) target = $region20
        $region19: #{tpu_custom_call.1} parent=11 // pred_region
          %435 = vsyncadd [#allocation10], 0
          %s436 = sshll.u32 %s5, 4
          %s437 = int_to_ptr.hbm [resolvable:$true] %s436
          %s438 = sshll.u32 [#allocation11], 4
          %s439 = int_to_ptr.vmem [resolvable:$true] %s438
          %444 = dma.hbm_to_vmem [thread:$0]  %s437, 128, %s439, [#allocation10], 32, 32, 2
        $region20: #{tpu_custom_call.1} parent=11 // pred_fallthru
          _
        // Predicated region
        $region21: #{tpu_custom_call.1} parent=11 // pred_check
          %p445 = pneg %p203
        $region22: #{tpu_custom_call.1} parent=11 // pred_check_branch
          %447 = sbr.rel (%p445) target = $region24
        $region23: #{tpu_custom_call.1} parent=11 // pred_region
          %449 = vsyncadd [#allocation13], 0
          %s451 = sshll.u32 %s6, 4
          %s452 = int_to_ptr.hbm [resolvable:$true] %s451
          %s453 = sshll.u32 [#allocation12], 4
          %s454 = int_to_ptr.vmem [resolvable:$true] %s453
          %456 = dma.hbm_to_vmem [thread:$0]  %s452, 128, %s454, [#allocation13]
        $region24: #{tpu_custom_call.1} parent=11 // pred_fallthru
          _
        // Predicated region
        $region25: #{tpu_custom_call.1} parent=11 // pred_check
          %p457 = pneg %p224
        $region26: #{tpu_custom_call.1} parent=11 // pred_check_branch
          %459 = sbr.rel (%p457) target = $region28
        $region27: #{tpu_custom_call.1} parent=11 // pred_region
          _
        $region28: #{tpu_custom_call.1} parent=11 // pred_fallthru
          _
        // Predicated region
        $region29: #{tpu_custom_call.1} parent=11 // pred_check
          %p460 = pneg %p245
        $region30: #{tpu_custom_call.1} parent=11 // pred_check_branch
          %462 = sbr.rel (%p460) target = $region32
        $region31: #{tpu_custom_call.1} parent=11 // pred_region
          _
        $region32: #{tpu_custom_call.1} parent=11 // pred_fallthru
          _
        // Predicated region
        $region33: #{tpu_custom_call.1} parent=11 // pred_check
          %p463 = pneg %p266
        $region34: #{tpu_custom_call.1} parent=11 // pred_check_branch
          %465 = sbr.rel (%p463) target = $region36
        $region35: #{tpu_custom_call.1} parent=11 // pred_region
          _
        $region36: #{tpu_custom_call.1} parent=11 // pred_fallthru
          _
        // Predicated region
        $region37: #{tpu_custom_call.1} parent=11 // pred_check
          %p466 = pneg %p287
        $region38: #{tpu_custom_call.1} parent=11 // pred_check_branch
          %468 = sbr.rel (%p466) target = $region40
        $region39: #{tpu_custom_call.1} parent=11 // pred_region
          _
        $region40: #{tpu_custom_call.1} parent=11 // pred_fallthru
          _
        // Predicated region
        $region41: #{tpu_custom_call.1} parent=11 // pred_check
          %p469 = pneg %p308
        $region42: #{tpu_custom_call.1} parent=11 // pred_check_branch
          %471 = sbr.rel (%p469) target = $region44
        $region43: #{tpu_custom_call.1} parent=11 // pred_region
          _
        $region44: #{tpu_custom_call.1} parent=11 // pred_fallthru
          _
        // Predicated region
        $region45: #{tpu_custom_call.1} parent=11 // pred_check
          %p472 = pneg %p329
        $region46: #{tpu_custom_call.1} parent=11 // pred_check_branch
          %474 = sbr.rel (%p472) target = $region48
        $region47: #{tpu_custom_call.1} parent=11 // pred_region
          %476 = vsyncadd [#allocation13], 0
          %s477 = sshll.u32 %s12, 4
          %s478 = int_to_ptr.hbm [resolvable:$true] %s477
          %s479 = sshll.u32 [#allocation14], 4
          %s480 = int_to_ptr.vmem [resolvable:$true] %s479
          %485 = dma.hbm_to_vmem [thread:$0]  %s478, 256, %s480, [#allocation13], 128, 128, 8
        $region48: #{tpu_custom_call.1} parent=11 // pred_fallthru
          _
        // Predicated region
        $region49: #{tpu_custom_call.1} parent=11 // pred_check
          %p486 = pneg %p350
        $region50: #{tpu_custom_call.1} parent=11 // pred_check_branch
          %488 = sbr.rel (%p486) target = $region52
        $region51: #{tpu_custom_call.1} parent=11 // pred_region
          _
        $region52: #{tpu_custom_call.1} parent=11 // pred_fallthru
          _
      $region12: #{tpu_custom_call.1} parent=5 // pred_fallthru
        _
      %p489 = scmp.lt.s32.totalorder %s36, 2
      // Predicated region
      $region53: #{tpu_custom_call.1} parent=5 // pred_check
        %p490 = pneg %p489
      $region54: #{tpu_custom_call.1} parent=5 // pred_check_branch
        %492 = sbr.rel (%p490) target = $region56
      $region55: #{tpu_custom_call.1} parent=5 // pred_region
        // Predicated region
        $region57: #{tpu_custom_call.1} parent=55 // pred_check
          %p493 = pneg %p56
        $region58: #{tpu_custom_call.1} parent=55 // pred_check_branch
          %495 = sbr.rel (%p493) target = $region60
        $region59: #{tpu_custom_call.1} parent=55 // pred_region
          %p496 = scmp.lt.s32.totalorder %s36, 1
          %s497 = scalar_select %p496, %s36, 1
          %s498 = smul.addr %s497, 2
          %s499 = smul.addr %s498, 8
          %s500 = scalar_lea.vmem %s0, %s499
        $region60: #{tpu_custom_call.1} parent=55 // pred_fallthru
          _
        // Predicated region
        $region61: #{tpu_custom_call.1} parent=55 // pred_check
          %p501 = pneg %p82
        $region62: #{tpu_custom_call.1} parent=55 // pred_check_branch
          %503 = sbr.rel (%p501) target = $region64
        $region63: #{tpu_custom_call.1} parent=55 // pred_region
          %s504 = sand.u32 %s72, 1
          %s505 = scalar_lea.sflag [#allocation4], %s504
          %s506 = sand.u32 %s72, 1
          %s507 = smul.addr %s506, 16
          %s508 = scalar_lea.vmem [#allocation3], %s507
          %510 = vsyncadd %s505, 0
          %s511 = smul.addr %s36, 2
          %s512 = smul.addr %s511, 8
          %s513 = scalar_lea.hbm %s1, %s512
          %s515 = sshll.u32 %s513, 4
          %s516 = int_to_ptr.hbm [resolvable:$true] %s515
          %s517 = sshll.u32 %s508, 4
          %s518 = int_to_ptr.vmem [resolvable:$true] %s517
          %520 = dma.hbm_to_vmem [thread:$0]  %s516, 256, %s518, %s505
        $region64: #{tpu_custom_call.1} parent=55 // pred_fallthru
          _
        // Predicated region
        $region65: #{tpu_custom_call.1} parent=55 // pred_check
          %p521 = pneg %p108
        $region66: #{tpu_custom_call.1} parent=55 // pred_check_branch
          %523 = sbr.rel (%p521) target = $region68
        $region67: #{tpu_custom_call.1} parent=55 // pred_region
          %s524 = sand.u32 %s36, 1
          %s525 = scalar_lea.sflag [#allocation7], %s524
          %s526 = sand.u32 %s98, 1
          %s527 = smul.addr %s526, 16
          %s528 = scalar_lea.vmem [#allocation6], %s527
          %530 = vsyncadd %s525, 0
          %s531 = smul.addr %s36, 2
          %s532 = smul.addr %s531, 8
          %s533 = scalar_lea.hbm %s2, %s532
          %s535 = sshll.u32 %s533, 4
          %s536 = int_to_ptr.hbm [resolvable:$true] %s535
          %s537 = sshll.u32 %s528, 4
          %s538 = int_to_ptr.vmem [resolvable:$true] %s537
          %540 = dma.hbm_to_vmem [thread:$0]  %s536, 256, %s538, %s525
        $region68: #{tpu_custom_call.1} parent=55 // pred_fallthru
          _
        // Predicated region
        $region69: #{tpu_custom_call.1} parent=55 // pred_check
          %p541 = pneg %p134
        $region70: #{tpu_custom_call.1} parent=55 // pred_check_branch
          %543 = sbr.rel (%p541) target = $region72
        $region71: #{tpu_custom_call.1} parent=55 // pred_region
          %s544 = sand.u32 %s36, 1
          %s545 = scalar_lea.sflag [#allocation7], %s544
          %s546 = sand.u32 %s124, 1
          %s547 = smul.addr %s546, 16
          %s548 = scalar_lea.vmem [#allocation8], %s547
          %550 = vsyncadd %s545, 0
          %s551 = smul.addr %s36, 2
          %s552 = smul.addr %s551, 8
          %s553 = scalar_lea.hbm %s3, %s552
          %s555 = sshll.u32 %s553, 4
          %s556 = int_to_ptr.hbm [resolvable:$true] %s555
          %s557 = sshll.u32 %s548, 4
          %s558 = int_to_ptr.vmem [resolvable:$true] %s557
          %560 = dma.hbm_to_vmem [thread:$0]  %s556, 256, %s558, %s545
        $region72: #{tpu_custom_call.1} parent=55 // pred_fallthru
          _
      $region56: #{tpu_custom_call.1} parent=5 // pred_fallthru
        _
      %p561 = scmp.le.s32.totalorder 1, %s36
      %p562 = scmp.lt.s32.totalorder %s36, 3
      %p563 = pnand %p561, %p562
      %p564 = pneg %p563
      // Predicated region
      $region73: #{tpu_custom_call.1} parent=5 // pred_check
        _
      $region74: #{tpu_custom_call.1} parent=5 // pred_check_branch
        %566 = sbr.rel (%p563) target = $region76
      $region75: #{tpu_custom_call.1} parent=5 // pred_region
        %s567 = ssub.s32 %s36, 1
        %s568 = sand.u32 %s75, 1
        %s569 = scalar_lea.sflag [#allocation4], %s568
        %s570 = sand.u32 %s75, 1
        %s571 = smul.addr %s570, 16
        %s572 = scalar_lea.vmem [#allocation3], %s571
        // Predicated region
        $region77: #{tpu_custom_call.1} parent=75 // pred_check
          %p573 = pneg %p88
        $region78: #{tpu_custom_call.1} parent=75 // pred_check_branch
          %575 = sbr.rel (%p573) target = $region80
        $region79: #{tpu_custom_call.1} parent=75 // pred_region
          %577 = dma.done %s569, 256
        $region80: #{tpu_custom_call.1} parent=75 // pred_fallthru
          _
        %s578 = sand.u32 %s41, 1
        %s579 = scalar_lea.sflag [#allocation7], %s578
        %s580 = sand.u32 %s101, 1
        %s581 = smul.addr %s580, 16
        %s582 = scalar_lea.vmem [#allocation6], %s581
        // Predicated region
        $region81: #{tpu_custom_call.1} parent=75 // pred_check
          %p583 = pneg %p114
        $region82: #{tpu_custom_call.1} parent=75 // pred_check_branch
          %585 = sbr.rel (%p583) target = $region84
        $region83: #{tpu_custom_call.1} parent=75 // pred_region
          %587 = dma.done %s579, 256
        $region84: #{tpu_custom_call.1} parent=75 // pred_fallthru
          _
        %s588 = sand.u32 %s41, 1
        %s589 = scalar_lea.sflag [#allocation7], %s588
        %s590 = sand.u32 %s127, 1
        %s591 = smul.addr %s590, 16
        %s592 = scalar_lea.vmem [#allocation8], %s591
        // Predicated region
        $region85: #{tpu_custom_call.1} parent=75 // pred_check
          %p593 = pneg %p140
        $region86: #{tpu_custom_call.1} parent=75 // pred_check_branch
          %595 = sbr.rel (%p593) target = $region88
        $region87: #{tpu_custom_call.1} parent=75 // pred_region
          %597 = dma.done %s589, 256
        $region88: #{tpu_custom_call.1} parent=75 // pred_fallthru
          _
        // Predicated region
        $region89: #{tpu_custom_call.1} parent=75 // pred_check
          %p598 = pneg %p161
        $region90: #{tpu_custom_call.1} parent=75 // pred_check_branch
          %600 = sbr.rel (%p598) target = $region92
        $region91: #{tpu_custom_call.1} parent=75 // pred_region
          %602 = dma.done [#allocation10], 192
        $region92: #{tpu_custom_call.1} parent=75 // pred_fallthru
          _
        // Predicated region
        $region93: #{tpu_custom_call.1} parent=75 // pred_check
          %p603 = pneg %p182
        $region94: #{tpu_custom_call.1} parent=75 // pred_check_branch
          %605 = sbr.rel (%p603) target = $region96
        $region95: #{tpu_custom_call.1} parent=75 // pred_region
          %607 = dma.done [#allocation10], 128
        $region96: #{tpu_custom_call.1} parent=75 // pred_fallthru
          _
        // Predicated region
        $region97: #{tpu_custom_call.1} parent=75 // pred_check
          %p608 = pneg %p203
        $region98: #{tpu_custom_call.1} parent=75 // pred_check_branch
          %610 = sbr.rel (%p608) target = $region100
        $region99: #{tpu_custom_call.1} parent=75 // pred_region
          %612 = dma.done [#allocation13], 128
        $region100: #{tpu_custom_call.1} parent=75 // pred_fallthru
          _
        // Predicated region
        $region101: #{tpu_custom_call.1} parent=75 // pred_check
          %p613 = pneg %p329
        $region102: #{tpu_custom_call.1} parent=75 // pred_check_branch
          %615 = sbr.rel (%p613) target = $region104
        $region103: #{tpu_custom_call.1} parent=75 // pred_region
          %617 = dma.done [#allocation13], 256
        $region104: #{tpu_custom_call.1} parent=75 // pred_fallthru
          _
        %p618 = scmp.lt.s32.totalorder %s41, 1
        %s619 = scalar_select %p618, %s41, 1
        %s620 = smul.addr %s619, 2
        %s621 = smul.addr %s620, 8
        %s622 = scalar_lea.vmem %s0, %s621
        %p623 = pneg %p62
        %p624 = pneg %p59
        %s625 = sand.u32 %s75, 1
        %s626 = scalar_lea.sflag [#allocation4], %s625
        %s627 = sand.u32 %s75, 1
        %s628 = smul.addr %s627, 16
        %s629 = scalar_lea.vmem [#allocation3], %s628
        %p630 = pneg %p88
        %p631 = pneg %p85
        %s632 = sand.u32 %s41, 1
        %s633 = scalar_lea.sflag [#allocation7], %s632
        %s634 = sand.u32 %s101, 1
        %s635 = smul.addr %s634, 16
        %s636 = scalar_lea.vmem [#allocation6], %s635
        %p637 = pneg %p114
        %p638 = pneg %p111
        %s639 = sand.u32 %s41, 1
        %s640 = scalar_lea.sflag [#allocation7], %s639
        %s641 = sand.u32 %s127, 1
        %s642 = smul.addr %s641, 16
        %s643 = scalar_lea.vmem [#allocation8], %s642
        %p644 = pneg %p140
        %p645 = pneg %p137
        %p646 = pneg %p161
        %p647 = pneg %p158
        %p648 = pneg %p182
        %p649 = pneg %p179
        %p650 = pneg %p203
        %p651 = pneg %p200
        %p652 = pneg %p224
        %p653 = pneg %p221
        %p654 = pneg %p245
        %p655 = pneg %p242
        %p656 = pneg %p266
        %p657 = pneg %p263
        %p658 = pneg %p287
        %p659 = pneg %p284
        %p660 = pneg %p308
        %p661 = pneg %p305
        %p662 = pneg %p329
        %p663 = pneg %p326
        %p664 = pneg %p350
        %p665 = pneg %p347
        %p666 = pneg %p376
        %p667 = pneg %p373
        %s668 = sand.u32 %s363, 1
        %s669 = scalar_lea.sflag [#allocation5], %s668
        %s670 = sand.u32 %s363, 1
        %s671 = smul.addr %s670, 16
        %s672 = scalar_lea.vmem [#allocation15], %s671
        %p673 = pneg %p402
        %p674 = pneg %p399
        %s675 = sand.u32 %s389, 1
        %s676 = scalar_lea.sflag [#allocation17], %s675
        %s677 = sand.u32 %s389, 1
        %s678 = smul.addr %s677, 16
        %s679 = scalar_lea.vmem [#allocation16], %s678
        %p680 = scmp.lt.s32.totalorder %s41, 1
        %s681 = scalar_select %p680, %s41, 1
        %s682 = smul.addr %s681, 2
        %s683 = smul.addr %s682, 8
        %s684 = scalar_lea.vmem %s0, %s683
        %v685 = vld [vmem:[%s684] sm:$0xff]
        %v686 = vld [vmem:[%s684 + $0x8] sm:$0xff]
        %v687 = vld [vmem:[%s572] sm:$0xff]
        %v688 = vld [vmem:[%s572 + $0x8] sm:$0xff]
        %v689 = vld [vmem:[%s582] sm:$0xff]
        %v690 = vld [vmem:[%s582 + $0x8] sm:$0xff]
        %v691 = vld [vmem:[%s592] sm:$0xff]
        %v692 = vld [vmem:[%s592 + $0x8] sm:$0xff]
        %vm693 = vcmp.gt.f32.partialorder %v687, 0.0
        %vm694 = vcmp.gt.f32.partialorder %v688, 0.0
        %v695 = vmin.f32 %v687, 0.0
        %v696 = vmin.f32 %v688, 0.0
        %v697 = vmul.f32 %v695, 1.442695
        %v698 = vpow.pop %v697
        %v699 = vmul.f32 %v696, 1.442695
        %v700 = vpow.pop %v699
        %v701 = vsub.f32 %v698, 1.0
        %v702 = vsub.f32 %v700, 1.0
        %v703 = vsel %vm693, %v687, %v701
        %v704 = vsel %vm694, %v688, %v702
        %v705 = vsub.f32 0.0, %v687
        %v706 = vsub.f32 0.0, %v688
        %vm707 = vcmp.gt.f32.partialorder %v705, 0.0
        %vm708 = vcmp.gt.f32.partialorder %v706, 0.0
        %v709 = vmin.f32 %v705, 0.0
        %v710 = vmin.f32 %v706, 0.0
        %v711 = vmul.f32 %v709, 1.442695
        %v712 = vpow.pop %v711
        %v713 = vmul.f32 %v710, 1.442695
        %v714 = vpow.pop %v713
        %v715 = vsub.f32 %v712, 1.0
        %v716 = vsub.f32 %v714, 1.0
        %v717 = vsel %vm707, %v705, %v715
        %v718 = vsel %vm708, %v706, %v716
        %vm719 = vcmp.gt.f32.partialorder %v685, 0.0
        %vm720 = vcmp.gt.f32.partialorder %v686, 0.0
        %v721 = vmin.f32 %v685, 0.0
        %v722 = vmin.f32 %v686, 0.0
        %v723 = vmul.f32 %v721, 1.442695
        %v724 = vpow.pop %v723
        %v725 = vmul.f32 %v722, 1.442695
        %v726 = vpow.pop %v725
        %v727 = vsub.f32 %v724, 1.0
        %v728 = vsub.f32 %v726, 1.0
        %v729 = vsel %vm719, %v685, %v727
        %v730 = vsel %vm720, %v686, %v728
        %v731 = vsub.f32 0.0, %v685
        %v732 = vsub.f32 0.0, %v686
        %vm733 = vcmp.gt.f32.partialorder %v731, 0.0
        %vm734 = vcmp.gt.f32.partialorder %v732, 0.0
        %v735 = vmin.f32 %v731, 0.0
        %v736 = vmin.f32 %v732, 0.0
        %v737 = vmul.f32 %v735, 1.442695
        %v738 = vpow.pop %v737
        %v739 = vmul.f32 %v736, 1.442695
        %v740 = vpow.pop %v739
        %v741 = vsub.f32 %v738, 1.0
        %v742 = vsub.f32 %v740, 1.0
        %v743 = vsel %vm733, %v731, %v741
        %v744 = vsel %vm734, %v732, %v742
        %745 = vrot.lane.b32.xlu0 %v729, 17
        %v746 = vpop.permute.xlu0 %745
        %747 = vrot.lane.b32.xlu0 %v730, 17
        %v748 = vpop.permute.xlu0 %747
        %v749 = vlaneseq
        %v750 = vand.u32 %v749, 127
        %vm751 = vcmp.lt.s32.totalorder %v750, 17
        %v752 = vsel %vm751, %v746, %v748
        %v753 = vsel %vm751, %v748, %v746
        %v754 = vld [vmem:[#allocation9] sm:$0x3]
        %v756 = vperm.slane %v754, 0
        %v757 = vperm.slane %v754, 1
        %v760 = vmul.f32 %v753, %v756
        %v761 = vmul.f32 %v752, %v757
        %762 = vst [vmem:[#allocation2] sm:$0xff] %v760
        %763 = vst [vmem:[#allocation2 + $0x8] sm:$0xff] %v761
        %764 = vrot.lane.b32.xlu0 %v729, 16
        %v765 = vpop.permute.xlu0 %764
        %766 = vrot.lane.b32.xlu0 %v730, 16
        %v767 = vpop.permute.xlu0 %766
        %vm768 = vcmp.lt.s32.totalorder %v750, 16
        %v769 = vsel %vm768, %v765, %v767
        %v770 = vsel %vm768, %v767, %v765
        %s771 = scalar_lea.vmem [#allocation9], 2
        %v772 = vld [vmem:[%s771] sm:$0x3]
        %v774 = vperm.slane %v772, 0
        %v775 = vperm.slane %v772, 1
        %v778 = vmul.f32 %v770, %v774
        %v779 = vmul.f32 %v769, %v775
        %780 = vst [vmem:[#allocation2 + $0x10] sm:$0xff] %v778
        %781 = vst [vmem:[#allocation2 + $0x18] sm:$0xff] %v779
        %782 = vrot.lane.b32.xlu0 %v729, 15
        %v783 = vpop.permute.xlu0 %782
        %784 = vrot.lane.b32.xlu0 %v730, 15
        %v785 = vpop.permute.xlu0 %784
        %vm786 = vcmp.lt.s32.totalorder %v750, 15
        %v787 = vsel %vm786, %v783, %v785
        %v788 = vsel %vm786, %v785, %v783
        %s789 = scalar_lea.vmem [#allocation9], 4
        %v790 = vld [vmem:[%s789] sm:$0x3]
        %v792 = vperm.slane %v790, 0
        %v793 = vperm.slane %v790, 1
        %v796 = vmul.f32 %v788, %v792
        %v797 = vmul.f32 %v787, %v793
        %798 = vst [vmem:[#allocation2 + $0x20] sm:$0xff] %v796
        %799 = vst [vmem:[#allocation2 + $0x28] sm:$0xff] %v797
        %800 = vrot.lane.b32.xlu0 %v729, 1
        %v801 = vpop.permute.xlu0 %800
        %802 = vrot.lane.b32.xlu0 %v730, 1
        %v803 = vpop.permute.xlu0 %802
        %vm804 = vcmp.lt.s32.totalorder %v750, 1
        %v805 = vsel %vm804, %v801, %v803
        %v806 = vsel %vm804, %v803, %v801
        %s807 = scalar_lea.vmem [#allocation9], 6
        %v808 = vld [vmem:[%s807] sm:$0x3]
        %v810 = vperm.slane %v808, 0
        %v811 = vperm.slane %v808, 1
        %v814 = vmul.f32 %v806, %v810
        %v815 = vmul.f32 %v805, %v811
        %816 = vst [vmem:[#allocation2 + $0x30] sm:$0xff] %v814
        %817 = vst [vmem:[#allocation2 + $0x38] sm:$0xff] %v815
        %818 = vst [vmem:[#allocation2 + $0x40] sm:$0xff] %v729
        %819 = vst [vmem:[#allocation2 + $0x48] sm:$0xff] %v730
        %820 = vrot.lane.b32.xlu0 %v729, 127
        %v821 = vpop.permute.xlu0 %820
        %822 = vrot.lane.b32.xlu0 %v730, 127
        %v823 = vpop.permute.xlu0 %822
        %vm824 = vcmp.lt.s32.totalorder %v750, 127
        %v825 = vsel %vm824, %v821, %v823
        %v826 = vsel %vm824, %v823, %v821
        %s827 = scalar_lea.vmem [#allocation9], 10
        %v828 = vld [vmem:[%s827] sm:$0x3]
        %v830 = vperm.slane %v828, 0
        %v831 = vperm.slane %v828, 1
        %v834 = vmul.f32 %v825, %v830
        %v835 = vmul.f32 %v826, %v831
        %836 = vst [vmem:[#allocation2 + $0x50] sm:$0xff] %v834
        %837 = vst [vmem:[#allocation2 + $0x58] sm:$0xff] %v835
        %838 = vrot.lane.b32.xlu0 %v743, 17
        %v839 = vpop.permute.xlu0 %838
        %840 = vrot.lane.b32.xlu0 %v744, 17
        %v841 = vpop.permute.xlu0 %840
        %v842 = vsel %vm751, %v839, %v841
        %v843 = vsel %vm751, %v841, %v839
        %v844 = vld [vmem:[#allocation9] sm:$0x3]
        %v846 = vperm.slane %v844, 0
        %v847 = vperm.slane %v844, 1
        %v850 = vmul.f32 %v843, %v846
        %v851 = vmul.f32 %v842, %v847
        %852 = vst [vmem:[#allocation2 + $0x60] sm:$0xff] %v850
        %853 = vst [vmem:[#allocation2 + $0x68] sm:$0xff] %v851
        %854 = vrot.lane.b32.xlu0 %v743, 16
        %v855 = vpop.permute.xlu0 %854
        %856 = vrot.lane.b32.xlu0 %v744, 16
        %v857 = vpop.permute.xlu0 %856
        %v858 = vsel %vm768, %v855, %v857
        %v859 = vsel %vm768, %v857, %v855
        %v860 = vld [vmem:[%s771] sm:$0x3]
        %v862 = vperm.slane %v860, 0
        %v863 = vperm.slane %v860, 1
        %v866 = vmul.f32 %v859, %v862
        %v867 = vmul.f32 %v858, %v863
        %868 = vst [vmem:[#allocation2 + $0x70] sm:$0xff] %v866
        %869 = vst [vmem:[#allocation2 + $0x78] sm:$0xff] %v867
        %870 = vrot.lane.b32.xlu0 %v743, 15
        %v871 = vpop.permute.xlu0 %870
        %872 = vrot.lane.b32.xlu0 %v744, 15
        %v873 = vpop.permute.xlu0 %872
        %v874 = vsel %vm786, %v871, %v873
        %v875 = vsel %vm786, %v873, %v871
        %v876 = vld [vmem:[%s789] sm:$0x3]
        %v878 = vperm.slane %v876, 0
        %v879 = vperm.slane %v876, 1
        %v882 = vmul.f32 %v875, %v878
        %v883 = vmul.f32 %v874, %v879
        %884 = vst [vmem:[#allocation2 + $0x80] sm:$0xff] %v882
        %885 = vst [vmem:[#allocation2 + $0x88] sm:$0xff] %v883
        %886 = vrot.lane.b32.xlu0 %v743, 1
        %v887 = vpop.permute.xlu0 %886
        %888 = vrot.lane.b32.xlu0 %v744, 1
        %v889 = vpop.permute.xlu0 %888
        %v890 = vsel %vm804, %v887, %v889
        %v891 = vsel %vm804, %v889, %v887
        %v892 = vld [vmem:[%s807] sm:$0x3]
        %v894 = vperm.slane %v892, 0
        %v895 = vperm.slane %v892, 1
        %v898 = vmul.f32 %v891, %v894
        %v899 = vmul.f32 %v890, %v895
        %900 = vst [vmem:[#allocation2 + $0x90] sm:$0xff] %v898
        %901 = vst [vmem:[#allocation2 + $0x98] sm:$0xff] %v899
        %902 = vst [vmem:[#allocation2 + $0xa0] sm:$0xff] %v743
        %903 = vst [vmem:[#allocation2 + $0xa8] sm:$0xff] %v744
        %904 = vrot.lane.b32.xlu0 %v743, 127
        %v905 = vpop.permute.xlu0 %904
        %906 = vrot.lane.b32.xlu0 %v744, 127
        %v907 = vpop.permute.xlu0 %906
        %v908 = vsel %vm824, %v905, %v907
        %v909 = vsel %vm824, %v907, %v905
        %v910 = vld [vmem:[%s827] sm:$0x3]
        %v912 = vperm.slane %v910, 0
        %v913 = vperm.slane %v910, 1
        %v916 = vmul.f32 %v908, %v912
        %v917 = vmul.f32 %v909, %v913
        %918 = vst [vmem:[#allocation2 + $0xb0] sm:$0xff] %v916
        %919 = vst [vmem:[#allocation2 + $0xb8] sm:$0xff] %v917
        %920 = vst [vmem:[#allocation2 + $0xc0] sm:$0xff] %v703
        %921 = vst [vmem:[#allocation2 + $0xc8] sm:$0xff] %v704
        %922 = vst [vmem:[#allocation2 + $0xd0] sm:$0xff] %v717
        %923 = vst [vmem:[#allocation2 + $0xd8] sm:$0xff] %v718
        %v924 = vld [vmem:[#allocation12] sm:$0xff]
        %v925 = vld [vmem:[#allocation2] sm:$0xff]
        %v926 = vld [vmem:[#allocation2 + $0x8] sm:$0xff]
        %v927 = vld [vmem:[#allocation2 + $0x10] sm:$0xff]
        %v928 = vld [vmem:[#allocation2 + $0x18] sm:$0xff]
        %v929 = vld [vmem:[#allocation2 + $0x20] sm:$0xff]
        %v930 = vld [vmem:[#allocation2 + $0x28] sm:$0xff]
        %v931 = vld [vmem:[#allocation2 + $0x30] sm:$0xff]
        %v932 = vld [vmem:[#allocation2 + $0x38] sm:$0xff]
        %v933 = vld [vmem:[#allocation2 + $0x40] sm:$0xff]
        %v934 = vld [vmem:[#allocation2 + $0x48] sm:$0xff]
        %v935 = vld [vmem:[#allocation2 + $0x50] sm:$0xff]
        %v936 = vld [vmem:[#allocation2 + $0x58] sm:$0xff]
        %v937 = vld [vmem:[#allocation2 + $0x60] sm:$0xff]
        %v938 = vld [vmem:[#allocation2 + $0x68] sm:$0xff]
        %v939 = vld [vmem:[#allocation2 + $0x70] sm:$0xff]
        %v940 = vld [vmem:[#allocation2 + $0x78] sm:$0xff]
        %v941 = vld [vmem:[#allocation2 + $0x80] sm:$0xff]
        %v942 = vld [vmem:[#allocation2 + $0x88] sm:$0xff]
        %v943 = vld [vmem:[#allocation2 + $0x90] sm:$0xff]
        %v944 = vld [vmem:[#allocation2 + $0x98] sm:$0xff]
        %v945 = vld [vmem:[#allocation2 + $0xa0] sm:$0xff]
        %v946 = vld [vmem:[#allocation2 + $0xa8] sm:$0xff]
        %v947 = vld [vmem:[#allocation2 + $0xb0] sm:$0xff]
        %v948 = vld [vmem:[#allocation2 + $0xb8] sm:$0xff]
        %v949 = vld [vmem:[#allocation2 + $0xc0] sm:$0xff]
        %v950 = vld [vmem:[#allocation2 + $0xc8] sm:$0xff]
        %v951 = vld [vmem:[#allocation2 + $0xd0] sm:$0xff]
        %v952 = vld [vmem:[#allocation2 + $0xd8] sm:$0xff]
        %v953 = vld [vmem:[%s7] sm:$0xff]
        %955 = vset.pattern.permute.xlu0 0
        %956 = vperm.xlu0 %955, %v953
        %v957 = vpop.permute.xlu0 %956
        %vm959 = vcmask 916480
        %v961 = vsel %vm959, %v924, 0
        %963 = vmatpush.msra.mxu0 0.0
        %964 = vmatpush.msra.mxu0 0.0
        %965 = vmatpush.msra.mxu0 %v951
        %966 = vmatpush.msra.mxu0 %v949
        %967 = vmatpush.msra.mxu0 %v947
        %968 = vmatpush.msra.mxu0 %v945
        %969 = vmatpush.msra.mxu0 %v943
        %970 = vmatpush.msra.mxu0 %v941
        %971 = vmatpush.msra.mxu0 %v939
        %972 = vmatpush.msra.mxu0 %v937
        %973 = vmatpush.msra.mxu0 %v935
        %974 = vmatpush.msra.mxu0 %v933
        %975 = vmatpush.msra.mxu0 %v931
        %976 = vmatpush.msra.mxu0 %v929
        %977 = vmatpush.msra.mxu0 %v927
        %978 = vmatpush.msra.mxu0 %v925
        %979 = vmatmul.f32.gmra.mxu0 %v961
        %v980 = vpop.f32.mrf.mxu0
        %v981 = vadd.f32 %v957, %v980
        %982 = vdwg.mxu0
        %983 = vmatpush.msra.mxu0 0.0
        %984 = vmatpush.msra.mxu0 0.0
        %985 = vmatpush.msra.mxu0 %v952
        %986 = vmatpush.msra.mxu0 %v950
        %987 = vmatpush.msra.mxu0 %v948
        %988 = vmatpush.msra.mxu0 %v946
        %989 = vmatpush.msra.mxu0 %v944
        %990 = vmatpush.msra.mxu0 %v942
        %991 = vmatpush.msra.mxu0 %v940
        %992 = vmatpush.msra.mxu0 %v938
        %993 = vmatpush.msra.mxu0 %v936
        %994 = vmatpush.msra.mxu0 %v934
        %995 = vmatpush.msra.mxu0 %v932
        %996 = vmatpush.msra.mxu0 %v930
        %997 = vmatpush.msra.mxu0 %v928
        %998 = vmatpush.msra.mxu0 %v926
        %999 = vmatmul.f32.gmra.mxu0 %v961
        %v1000 = vpop.f32.mrf.mxu0
        %v1001 = vadd.f32 %v957, %v1000
        %1002 = vdwg.mxu0
        %vm1003 = vcmp.gt.f32.partialorder %v981, 0.0
        %vm1004 = vcmp.gt.f32.partialorder %v1001, 0.0
        %v1005 = vmin.f32 %v981, 0.0
        %v1006 = vmin.f32 %v1001, 0.0
        %v1007 = vmul.f32 %v1005, 1.442695
        %v1008 = vpow.pop %v1007
        %v1009 = vmul.f32 %v1006, 1.442695
        %v1010 = vpow.pop %v1009
        %v1011 = vsub.f32 %v1008, 1.0
        %v1012 = vsub.f32 %v1010, 1.0
        %v1013 = vsel %vm1003, %v981, %v1011
        %v1014 = vsel %vm1004, %v1001, %v1012
        %v1015 = vsub.f32 0.0, %v981
        %v1016 = vsub.f32 0.0, %v1001
        %vm1017 = vcmp.gt.f32.partialorder %v1015, 0.0
        %vm1018 = vcmp.gt.f32.partialorder %v1016, 0.0
        %v1019 = vmin.f32 %v1015, 0.0
        %v1020 = vmin.f32 %v1016, 0.0
        %v1021 = vmul.f32 %v1019, 1.442695
        %v1022 = vpow.pop %v1021
        %v1023 = vmul.f32 %v1020, 1.442695
        %v1024 = vpow.pop %v1023
        %v1025 = vsub.f32 %v1022, 1.0
        %v1026 = vsub.f32 %v1024, 1.0
        %v1027 = vsel %vm1017, %v1015, %v1025
        %v1028 = vsel %vm1018, %v1016, %v1026
        %1029 = vrot.lane.b32.xlu0 %v1013, 17
        %v1030 = vpop.permute.xlu0 %1029
        %1031 = vrot.lane.b32.xlu0 %v1014, 17
        %v1032 = vpop.permute.xlu0 %1031
        %v1033 = vsel %vm751, %v1030, %v1032
        %v1034 = vsel %vm751, %v1032, %v1030
        %v1035 = vld [vmem:[#allocation9] sm:$0x3]
        %v1037 = vperm.slane %v1035, 0
        %v1038 = vperm.slane %v1035, 1
        %v1041 = vmul.f32 %v1034, %v1037
        %v1042 = vmul.f32 %v1033, %v1038
        %1043 = vst [vmem:[#allocation2] sm:$0xff] %v1041
        %1044 = vst [vmem:[#allocation2 + $0x8] sm:$0xff] %v1042
        %1045 = vrot.lane.b32.xlu0 %v1013, 16
        %v1046 = vpop.permute.xlu0 %1045
        %1047 = vrot.lane.b32.xlu0 %v1014, 16
        %v1048 = vpop.permute.xlu0 %1047
        %v1049 = vsel %vm768, %v1046, %v1048
        %v1050 = vsel %vm768, %v1048, %v1046
        %v1051 = vld [vmem:[%s771] sm:$0x3]
        %v1053 = vperm.slane %v1051, 0
        %v1054 = vperm.slane %v1051, 1
        %v1057 = vmul.f32 %v1050, %v1053
        %v1058 = vmul.f32 %v1049, %v1054
        %1059 = vst [vmem:[#allocation2 + $0x10] sm:$0xff] %v1057
        %1060 = vst [vmem:[#allocation2 + $0x18] sm:$0xff] %v1058
        %1061 = vrot.lane.b32.xlu0 %v1013, 15
        %v1062 = vpop.permute.xlu0 %1061
        %1063 = vrot.lane.b32.xlu0 %v1014, 15
        %v1064 = vpop.permute.xlu0 %1063
        %v1065 = vsel %vm786, %v1062, %v1064
        %v1066 = vsel %vm786, %v1064, %v1062
        %v1067 = vld [vmem:[%s789] sm:$0x3]
        %v1069 = vperm.slane %v1067, 0
        %v1070 = vperm.slane %v1067, 1
        %v1073 = vmul.f32 %v1066, %v1069
        %v1074 = vmul.f32 %v1065, %v1070
        %1075 = vst [vmem:[#allocation2 + $0x20] sm:$0xff] %v1073
        %1076 = vst [vmem:[#allocation2 + $0x28] sm:$0xff] %v1074
        %1077 = vrot.lane.b32.xlu0 %v1013, 1
        %v1078 = vpop.permute.xlu0 %1077
        %1079 = vrot.lane.b32.xlu0 %v1014, 1
        %v1080 = vpop.permute.xlu0 %1079
        %v1081 = vsel %vm804, %v1078, %v1080
        %v1082 = vsel %vm804, %v1080, %v1078
        %v1083 = vld [vmem:[%s807] sm:$0x3]
        %v1085 = vperm.slane %v1083, 0
        %v1086 = vperm.slane %v1083, 1
        %v1089 = vmul.f32 %v1082, %v1085
        %v1090 = vmul.f32 %v1081, %v1086
        %1091 = vst [vmem:[#allocation2 + $0x30] sm:$0xff] %v1089
        %1092 = vst [vmem:[#allocation2 + $0x38] sm:$0xff] %v1090
        %1093 = vst [vmem:[#allocation2 + $0x40] sm:$0xff] %v1013
        %1094 = vst [vmem:[#allocation2 + $0x48] sm:$0xff] %v1014
        %1095 = vrot.lane.b32.xlu0 %v1013, 127
        %v1096 = vpop.permute.xlu0 %1095
        %1097 = vrot.lane.b32.xlu0 %v1014, 127
        %v1098 = vpop.permute.xlu0 %1097
        %v1099 = vsel %vm824, %v1096, %v1098
        %v1100 = vsel %vm824, %v1098, %v1096
        %v1101 = vld [vmem:[%s827] sm:$0x3]
        %v1103 = vperm.slane %v1101, 0
        %v1104 = vperm.slane %v1101, 1
        %v1107 = vmul.f32 %v1099, %v1103
        %v1108 = vmul.f32 %v1100, %v1104
        %1109 = vst [vmem:[#allocation2 + $0x50] sm:$0xff] %v1107
        %1110 = vst [vmem:[#allocation2 + $0x58] sm:$0xff] %v1108
        %1111 = vrot.lane.b32.xlu0 %v1027, 17
        %v1112 = vpop.permute.xlu0 %1111
        %1113 = vrot.lane.b32.xlu0 %v1028, 17
        %v1114 = vpop.permute.xlu0 %1113
        %v1115 = vsel %vm751, %v1112, %v1114
        %v1116 = vsel %vm751, %v1114, %v1112
        %v1117 = vld [vmem:[#allocation9] sm:$0x3]
        %v1119 = vperm.slane %v1117, 0
        %v1120 = vperm.slane %v1117, 1
        %v1123 = vmul.f32 %v1116, %v1119
        %v1124 = vmul.f32 %v1115, %v1120
        %1125 = vst [vmem:[#allocation2 + $0x60] sm:$0xff] %v1123
        %1126 = vst [vmem:[#allocation2 + $0x68] sm:$0xff] %v1124
        %1127 = vrot.lane.b32.xlu0 %v1027, 16
        %v1128 = vpop.permute.xlu0 %1127
        %1129 = vrot.lane.b32.xlu0 %v1028, 16
        %v1130 = vpop.permute.xlu0 %1129
        %v1131 = vsel %vm768, %v1128, %v1130
        %v1132 = vsel %vm768, %v1130, %v1128
        %v1133 = vld [vmem:[%s771] sm:$0x3]
        %v1135 = vperm.slane %v1133, 0
        %v1136 = vperm.slane %v1133, 1
        %v1139 = vmul.f32 %v1132, %v1135
        %v1140 = vmul.f32 %v1131, %v1136
        %1141 = vst [vmem:[#allocation2 + $0x70] sm:$0xff] %v1139
        %1142 = vst [vmem:[#allocation2 + $0x78] sm:$0xff] %v1140
        %1143 = vrot.lane.b32.xlu0 %v1027, 15
        %v1144 = vpop.permute.xlu0 %1143
        %1145 = vrot.lane.b32.xlu0 %v1028, 15
        %v1146 = vpop.permute.xlu0 %1145
        %v1147 = vsel %vm786, %v1144, %v1146
        %v1148 = vsel %vm786, %v1146, %v1144
        %v1149 = vld [vmem:[%s789] sm:$0x3]
        %v1151 = vperm.slane %v1149, 0
        %v1152 = vperm.slane %v1149, 1
        %v1155 = vmul.f32 %v1148, %v1151
        %v1156 = vmul.f32 %v1147, %v1152
        %1157 = vst [vmem:[#allocation2 + $0x80] sm:$0xff] %v1155
        %1158 = vst [vmem:[#allocation2 + $0x88] sm:$0xff] %v1156
        %1159 = vrot.lane.b32.xlu0 %v1027, 1
        %v1160 = vpop.permute.xlu0 %1159
        %1161 = vrot.lane.b32.xlu0 %v1028, 1
        %v1162 = vpop.permute.xlu0 %1161
        %v1163 = vsel %vm804, %v1160, %v1162
        %v1164 = vsel %vm804, %v1162, %v1160
        %v1165 = vld [vmem:[%s807] sm:$0x3]
        %v1167 = vperm.slane %v1165, 0
        %v1168 = vperm.slane %v1165, 1
        %v1171 = vmul.f32 %v1164, %v1167
        %v1172 = vmul.f32 %v1163, %v1168
        %1173 = vst [vmem:[#allocation2 + $0x90] sm:$0xff] %v1171
        %1174 = vst [vmem:[#allocation2 + $0x98] sm:$0xff] %v1172
        %1175 = vst [vmem:[#allocation2 + $0xa0] sm:$0xff] %v1027
        %1176 = vst [vmem:[#allocation2 + $0xa8] sm:$0xff] %v1028
        %1177 = vrot.lane.b32.xlu0 %v1027, 127
        %v1178 = vpop.permute.xlu0 %1177
        %1179 = vrot.lane.b32.xlu0 %v1028, 127
        %v1180 = vpop.permute.xlu0 %1179
        %v1181 = vsel %vm824, %v1178, %v1180
        %v1182 = vsel %vm824, %v1180, %v1178
        %v1183 = vld [vmem:[%s827] sm:$0x3]
        %v1185 = vperm.slane %v1183, 0
        %v1186 = vperm.slane %v1183, 1
        %v1189 = vmul.f32 %v1181, %v1185
        %v1190 = vmul.f32 %v1182, %v1186
        %1191 = vst [vmem:[#allocation2 + $0xb0] sm:$0xff] %v1189
        %1192 = vst [vmem:[#allocation2 + $0xb8] sm:$0xff] %v1190
        %v1193 = vld [vmem:[%s8] sm:$0xff]
        %v1194 = vld [vmem:[%s8 + $0x8] sm:$0xff]
        %v1195 = vld [vmem:[#allocation2] sm:$0xff]
        %v1196 = vld [vmem:[#allocation2 + $0x8] sm:$0xff]
        %v1197 = vld [vmem:[#allocation2 + $0x10] sm:$0xff]
        %v1198 = vld [vmem:[#allocation2 + $0x18] sm:$0xff]
        %v1199 = vld [vmem:[#allocation2 + $0x20] sm:$0xff]
        %v1200 = vld [vmem:[#allocation2 + $0x28] sm:$0xff]
        %v1201 = vld [vmem:[#allocation2 + $0x30] sm:$0xff]
        %v1202 = vld [vmem:[#allocation2 + $0x38] sm:$0xff]
        %v1203 = vld [vmem:[#allocation2 + $0x40] sm:$0xff]
        %v1204 = vld [vmem:[#allocation2 + $0x48] sm:$0xff]
        %v1205 = vld [vmem:[#allocation2 + $0x50] sm:$0xff]
        %v1206 = vld [vmem:[#allocation2 + $0x58] sm:$0xff]
        %v1207 = vld [vmem:[#allocation2 + $0x60] sm:$0xff]
        %v1208 = vld [vmem:[#allocation2 + $0x68] sm:$0xff]
        %v1209 = vld [vmem:[#allocation2 + $0x70] sm:$0xff]
        %v1210 = vld [vmem:[#allocation2 + $0x78] sm:$0xff]
        %v1211 = vld [vmem:[#allocation2 + $0x80] sm:$0xff]
        %v1212 = vld [vmem:[#allocation2 + $0x88] sm:$0xff]
        %v1213 = vld [vmem:[#allocation2 + $0x90] sm:$0xff]
        %v1214 = vld [vmem:[#allocation2 + $0x98] sm:$0xff]
        %v1215 = vld [vmem:[#allocation2 + $0xa0] sm:$0xff]
        %v1216 = vld [vmem:[#allocation2 + $0xa8] sm:$0xff]
        %v1217 = vld [vmem:[#allocation2 + $0xb0] sm:$0xff]
        %v1218 = vld [vmem:[#allocation2 + $0xb8] sm:$0xff]
        %v1219 = vld [vmem:[%s9] sm:$0xff]
        %v1220 = vld [vmem:[%s9 + $0x8] sm:$0xff]
        %1222 = vset.pattern.permute.xlu0 0
        %1223 = vperm.xlu0 %1222, %v1219
        %v1224 = vpop.permute.xlu0 %1223
        %1227 = vset.pattern.permute.xlu0 0
        %1228 = vperm.xlu0 %1227, %v1220
        %v1229 = vpop.permute.xlu0 %1228
        %vm1231 = vcmask 785408
        %v1233 = vsel %vm1231, %v1193, 0
        %v1236 = vsel %vm1231, %v1194, 0
        %1238 = vmatpush.msra.mxu0 0.0
        %1239 = vmatpush.msra.mxu0 0.0
        %1240 = vmatpush.msra.mxu0 0.0
        %1241 = vmatpush.msra.mxu0 0.0
        %1242 = vmatpush.msra.mxu0 %v1217
        %1243 = vmatpush.msra.mxu0 %v1215
        %1244 = vmatpush.msra.mxu0 %v1213
        %1245 = vmatpush.msra.mxu0 %v1211
        %1246 = vmatpush.msra.mxu0 %v1209
        %1247 = vmatpush.msra.mxu0 %v1207
        %1248 = vmatpush.msra.mxu0 %v1205
        %1249 = vmatpush.msra.mxu0 %v1203
        %1250 = vmatpush.msra.mxu0 %v1201
        %1251 = vmatpush.msra.mxu0 %v1199
        %1252 = vmatpush.msra.mxu0 %v1197
        %1253 = vmatpush.msra.mxu0 %v1195
        %1254 = vmatmul.f32.gmra.mxu0 %v1233
        %v1255 = vpop.f32.mrf.mxu0
        %v1256 = vadd.f32 %v1224, %v1255
        %1257 = vmatmul.f32.gmra.mxu0 %v1236
        %v1258 = vpop.f32.mrf.mxu0
        %v1259 = vadd.f32 %v1229, %v1258
        %1260 = vdwg.mxu0
        %1261 = vmatpush.msra.mxu0 0.0
        %1262 = vmatpush.msra.mxu0 0.0
        %1263 = vmatpush.msra.mxu0 0.0
        %1264 = vmatpush.msra.mxu0 0.0
        %1265 = vmatpush.msra.mxu0 %v1218
        %1266 = vmatpush.msra.mxu0 %v1216
        %1267 = vmatpush.msra.mxu0 %v1214
        %1268 = vmatpush.msra.mxu0 %v1212
        %1269 = vmatpush.msra.mxu0 %v1210
        %1270 = vmatpush.msra.mxu0 %v1208
        %1271 = vmatpush.msra.mxu0 %v1206
        %1272 = vmatpush.msra.mxu0 %v1204
        %1273 = vmatpush.msra.mxu0 %v1202
        %1274 = vmatpush.msra.mxu0 %v1200
        %1275 = vmatpush.msra.mxu0 %v1198
        %1276 = vmatpush.msra.mxu0 %v1196
        %1277 = vmatmul.f32.gmra.mxu0 %v1233
        %v1278 = vpop.f32.mrf.mxu0
        %v1279 = vadd.f32 %v1224, %v1278
        %1280 = vmatmul.f32.gmra.mxu0 %v1236
        %v1281 = vpop.f32.mrf.mxu0
        %v1282 = vadd.f32 %v1229, %v1281
        %1283 = vdwg.mxu0
        %v1284 = vsub.f32 0.0, %v1259
        %v1285 = vsub.f32 0.0, %v1282
        %v1286 = vmul.f32 %v1284, 1.442695
        %v1287 = vpow.pop %v1286
        %v1288 = vmul.f32 %v1285, 1.442695
        %v1289 = vpow.pop %v1288
        %v1290 = vadd.f32 %v1287, 1.0
        %v1291 = vadd.f32 %v1289, 1.0
        %v1292 = vrcp.pop %v1290
        %v1293 = vmul.f32 %v1290, %v1292
        %v1294 = vsub.f32 1.0, %v1293
        %v1295 = vmul.f32 %v1292, %v1294
        %v1296 = vadd.f32 %v1292, %v1295
        %vm1297 = vweird.f32 %v1290
        %vm1298 = vweird.f32 %v1292
        %vm1299 = vmor %vm1297, %vm1298
        %v1300 = vsel %vm1299, %v1292, %v1296
        %v1301 = vand.u32 2147483647, %v1290
        %vm1302 = vcmp.eq.f32.partialorder %v1301, 8.507059e+37
        %v1303 = vand.u32 %v1290, 2147483648
        %v1304 = vor.u32 1.1754944e-38, %v1303
        %v1305 = vsel %vm1302, %v1304, %v1300
        %v1306 = vmul.f32 1.0, %v1305
        %v1307 = vrcp.pop %v1291
        %v1308 = vmul.f32 %v1291, %v1307
        %v1309 = vsub.f32 1.0, %v1308
        %v1310 = vmul.f32 %v1307, %v1309
        %v1311 = vadd.f32 %v1307, %v1310
        %vm1312 = vweird.f32 %v1291
        %vm1313 = vweird.f32 %v1307
        %vm1314 = vmor %vm1312, %vm1313
        %v1315 = vsel %vm1314, %v1307, %v1311
        %v1316 = vand.u32 2147483647, %v1291
        %vm1317 = vcmp.eq.f32.partialorder %v1316, 8.507059e+37
        %v1318 = vand.u32 %v1291, 2147483648
        %v1319 = vor.u32 1.1754944e-38, %v1318
        %v1320 = vsel %vm1317, %v1319, %v1315
        %v1321 = vmul.f32 1.0, %v1320
        %v1322 = vmul.f32 %v1256, %v1306
        %v1323 = vmul.f32 %v1279, %v1321
        %v1324 = vadd.f32 %v685, %v1322
        %v1325 = vadd.f32 %v686, %v1323
        %1326 = vst [vmem:[%s672] sm:$0xff] %v1324
        %1327 = vst [vmem:[%s672 + $0x8] sm:$0xff] %v1325
        %vm1328 = vcmp.gt.f32.partialorder %v1324, 0.0
        %vm1329 = vcmp.gt.f32.partialorder %v1325, 0.0
        %v1330 = vmin.f32 %v1324, 0.0
        %v1331 = vmin.f32 %v1325, 0.0
        %v1332 = vmul.f32 %v1330, 1.442695
        %v1333 = vpow.pop %v1332
        %v1334 = vmul.f32 %v1331, 1.442695
        %v1335 = vpow.pop %v1334
        %v1336 = vsub.f32 %v1333, 1.0
        %v1337 = vsub.f32 %v1335, 1.0
        %v1338 = vsel %vm1328, %v1324, %v1336
        %v1339 = vsel %vm1329, %v1325, %v1337
        %vm1340 = vcmp.gt.f32.partialorder %v691, 0.0
        %vm1341 = vcmp.gt.f32.partialorder %v692, 0.0
        %v1342 = vmin.f32 %v691, 0.0
        %v1343 = vmin.f32 %v692, 0.0
        %v1344 = vmul.f32 %v1342, 1.442695
        %v1345 = vpow.pop %v1344
        %v1346 = vmul.f32 %v1343, 1.442695
        %v1347 = vpow.pop %v1346
        %v1348 = vsub.f32 %v1345, 1.0
        %v1349 = vsub.f32 %v1347, 1.0
        %v1350 = vsel %vm1340, %v691, %v1348
        %v1351 = vsel %vm1341, %v692, %v1349
        %v1352 = vsub.f32 0.0, %v1324
        %v1353 = vsub.f32 0.0, %v1325
        %vm1354 = vcmp.gt.f32.partialorder %v1352, 0.0
        %vm1355 = vcmp.gt.f32.partialorder %v1353, 0.0
        %v1356 = vmin.f32 %v1352, 0.0
        %v1357 = vmin.f32 %v1353, 0.0
        %v1358 = vmul.f32 %v1356, 1.442695
        %v1359 = vpow.pop %v1358
        %v1360 = vmul.f32 %v1357, 1.442695
        %v1361 = vpow.pop %v1360
        %v1362 = vsub.f32 %v1359, 1.0
        %v1363 = vsub.f32 %v1361, 1.0
        %v1364 = vsel %vm1354, %v1352, %v1362
        %v1365 = vsel %vm1355, %v1353, %v1363
        %v1366 = vsub.f32 0.0, %v691
        %v1367 = vsub.f32 0.0, %v692
        %vm1368 = vcmp.gt.f32.partialorder %v1366, 0.0
        %vm1369 = vcmp.gt.f32.partialorder %v1367, 0.0
        %v1370 = vmin.f32 %v1366, 0.0
        %v1371 = vmin.f32 %v1367, 0.0
        %v1372 = vmul.f32 %v1370, 1.442695
        %v1373 = vpow.pop %v1372
        %v1374 = vmul.f32 %v1371, 1.442695
        %v1375 = vpow.pop %v1374
        %v1376 = vsub.f32 %v1373, 1.0
        %v1377 = vsub.f32 %v1375, 1.0
        %v1378 = vsel %vm1368, %v1366, %v1376
        %v1379 = vsel %vm1369, %v1367, %v1377
        %vm1380 = vcmp.gt.f32.partialorder %v689, 0.0
        %vm1381 = vcmp.gt.f32.partialorder %v690, 0.0
        %v1382 = vmin.f32 %v689, 0.0
        %v1383 = vmin.f32 %v690, 0.0
        %v1384 = vmul.f32 %v1382, 1.442695
        %v1385 = vpow.pop %v1384
        %v1386 = vmul.f32 %v1383, 1.442695
        %v1387 = vpow.pop %v1386
        %v1388 = vsub.f32 %v1385, 1.0
        %v1389 = vsub.f32 %v1387, 1.0
        %v1390 = vsel %vm1380, %v689, %v1388
        %v1391 = vsel %vm1381, %v690, %v1389
        %v1392 = vsub.f32 0.0, %v689
        %v1393 = vsub.f32 0.0, %v690
        %vm1394 = vcmp.gt.f32.partialorder %v1392, 0.0
        %vm1395 = vcmp.gt.f32.partialorder %v1393, 0.0
        %v1396 = vmin.f32 %v1392, 0.0
        %v1397 = vmin.f32 %v1393, 0.0
        %v1398 = vmul.f32 %v1396, 1.442695
        %v1399 = vpow.pop %v1398
        %v1400 = vmul.f32 %v1397, 1.442695
        %v1401 = vpow.pop %v1400
        %v1402 = vsub.f32 %v1399, 1.0
        %v1403 = vsub.f32 %v1401, 1.0
        %v1404 = vsel %vm1394, %v1392, %v1402
        %v1405 = vsel %vm1395, %v1393, %v1403
        %1406 = vrot.lane.b32.xlu0 %v1390, 17
        %v1407 = vpop.permute.xlu0 %1406
        %1408 = vrot.lane.b32.xlu0 %v1391, 17
        %v1409 = vpop.permute.xlu0 %1408
        %v1410 = vsel %vm751, %v1407, %v1409
        %v1411 = vsel %vm751, %v1409, %v1407
        %v1412 = vld [vmem:[#allocation11] sm:$0x3]
        %v1414 = vperm.slane %v1412, 0
        %v1415 = vperm.slane %v1412, 1
        %v1418 = vmul.f32 %v1411, %v1414
        %v1419 = vmul.f32 %v1410, %v1415
        %1420 = vst [vmem:[#allocation2] sm:$0xff] %v1418
        %1421 = vst [vmem:[#allocation2 + $0x8] sm:$0xff] %v1419
        %1422 = vrot.lane.b32.xlu0 %v1390, 16
        %v1423 = vpop.permute.xlu0 %1422
        %1424 = vrot.lane.b32.xlu0 %v1391, 16
        %v1425 = vpop.permute.xlu0 %1424
        %v1426 = vsel %vm768, %v1423, %v1425
        %v1427 = vsel %vm768, %v1425, %v1423
        %s1428 = scalar_lea.vmem [#allocation11], 2
        %v1429 = vld [vmem:[%s1428] sm:$0x3]
        %v1431 = vperm.slane %v1429, 0
        %v1432 = vperm.slane %v1429, 1
        %v1435 = vmul.f32 %v1427, %v1431
        %v1436 = vmul.f32 %v1426, %v1432
        %1437 = vst [vmem:[#allocation2 + $0x10] sm:$0xff] %v1435
        %1438 = vst [vmem:[#allocation2 + $0x18] sm:$0xff] %v1436
        %1439 = vrot.lane.b32.xlu0 %v1390, 1
        %v1440 = vpop.permute.xlu0 %1439
        %1441 = vrot.lane.b32.xlu0 %v1391, 1
        %v1442 = vpop.permute.xlu0 %1441
        %v1443 = vsel %vm804, %v1440, %v1442
        %v1444 = vsel %vm804, %v1442, %v1440
        %s1445 = scalar_lea.vmem [#allocation11], 4
        %v1446 = vld [vmem:[%s1445] sm:$0x3]
        %v1448 = vperm.slane %v1446, 0
        %v1449 = vperm.slane %v1446, 1
        %v1452 = vmul.f32 %v1444, %v1448
        %v1453 = vmul.f32 %v1443, %v1449
        %1454 = vst [vmem:[#allocation2 + $0x20] sm:$0xff] %v1452
        %1455 = vst [vmem:[#allocation2 + $0x28] sm:$0xff] %v1453
        %1456 = vst [vmem:[#allocation2 + $0x30] sm:$0xff] %v1390
        %1457 = vst [vmem:[#allocation2 + $0x38] sm:$0xff] %v1391
        %1458 = vrot.lane.b32.xlu0 %v1404, 17
        %v1459 = vpop.permute.xlu0 %1458
        %1460 = vrot.lane.b32.xlu0 %v1405, 17
        %v1461 = vpop.permute.xlu0 %1460
        %v1462 = vsel %vm751, %v1459, %v1461
        %v1463 = vsel %vm751, %v1461, %v1459
        %v1464 = vld [vmem:[#allocation11] sm:$0x3]
        %v1466 = vperm.slane %v1464, 0
        %v1467 = vperm.slane %v1464, 1
        %v1470 = vmul.f32 %v1463, %v1466
        %v1471 = vmul.f32 %v1462, %v1467
        %1472 = vst [vmem:[#allocation2 + $0x40] sm:$0xff] %v1470
        %1473 = vst [vmem:[#allocation2 + $0x48] sm:$0xff] %v1471
        %1474 = vrot.lane.b32.xlu0 %v1404, 16
        %v1475 = vpop.permute.xlu0 %1474
        %1476 = vrot.lane.b32.xlu0 %v1405, 16
        %v1477 = vpop.permute.xlu0 %1476
        %v1478 = vsel %vm768, %v1475, %v1477
        %v1479 = vsel %vm768, %v1477, %v1475
        %v1480 = vld [vmem:[%s1428] sm:$0x3]
        %v1482 = vperm.slane %v1480, 0
        %v1483 = vperm.slane %v1480, 1
        %v1486 = vmul.f32 %v1479, %v1482
        %v1487 = vmul.f32 %v1478, %v1483
        %1488 = vst [vmem:[#allocation2 + $0x50] sm:$0xff] %v1486
        %1489 = vst [vmem:[#allocation2 + $0x58] sm:$0xff] %v1487
        %1490 = vrot.lane.b32.xlu0 %v1404, 1
        %v1491 = vpop.permute.xlu0 %1490
        %1492 = vrot.lane.b32.xlu0 %v1405, 1
        %v1493 = vpop.permute.xlu0 %1492
        %v1494 = vsel %vm804, %v1491, %v1493
        %v1495 = vsel %vm804, %v1493, %v1491
        %v1496 = vld [vmem:[%s1445] sm:$0x3]
        %v1498 = vperm.slane %v1496, 0
        %v1499 = vperm.slane %v1496, 1
        %v1502 = vmul.f32 %v1495, %v1498
        %v1503 = vmul.f32 %v1494, %v1499
        %1504 = vst [vmem:[#allocation2 + $0x60] sm:$0xff] %v1502
        %1505 = vst [vmem:[#allocation2 + $0x68] sm:$0xff] %v1503
        %1506 = vst [vmem:[#allocation2 + $0x70] sm:$0xff] %v1404
        %1507 = vst [vmem:[#allocation2 + $0x78] sm:$0xff] %v1405
        %1508 = vst [vmem:[#allocation2 + $0x80] sm:$0xff] %v1338
        %1509 = vst [vmem:[#allocation2 + $0x88] sm:$0xff] %v1339
        %1510 = vst [vmem:[#allocation2 + $0x90] sm:$0xff] %v1350
        %1511 = vst [vmem:[#allocation2 + $0x98] sm:$0xff] %v1351
        %1512 = vst [vmem:[#allocation2 + $0xa0] sm:$0xff] %v1364
        %1513 = vst [vmem:[#allocation2 + $0xa8] sm:$0xff] %v1365
        %1514 = vst [vmem:[#allocation2 + $0xb0] sm:$0xff] %v1378
        %1515 = vst [vmem:[#allocation2 + $0xb8] sm:$0xff] %v1379
        %v1516 = vld [vmem:[%s10] sm:$0xff]
        %v1517 = vld [vmem:[#allocation2] sm:$0xff]
        %v1518 = vld [vmem:[#allocation2 + $0x8] sm:$0xff]
        %v1519 = vld [vmem:[#allocation2 + $0x10] sm:$0xff]
        %v1520 = vld [vmem:[#allocation2 + $0x18] sm:$0xff]
        %v1521 = vld [vmem:[#allocation2 + $0x20] sm:$0xff]
        %v1522 = vld [vmem:[#allocation2 + $0x28] sm:$0xff]
        %v1523 = vld [vmem:[#allocation2 + $0x30] sm:$0xff]
        %v1524 = vld [vmem:[#allocation2 + $0x38] sm:$0xff]
        %v1525 = vld [vmem:[#allocation2 + $0x40] sm:$0xff]
        %v1526 = vld [vmem:[#allocation2 + $0x48] sm:$0xff]
        %v1527 = vld [vmem:[#allocation2 + $0x50] sm:$0xff]
        %v1528 = vld [vmem:[#allocation2 + $0x58] sm:$0xff]
        %v1529 = vld [vmem:[#allocation2 + $0x60] sm:$0xff]
        %v1530 = vld [vmem:[#allocation2 + $0x68] sm:$0xff]
        %v1531 = vld [vmem:[#allocation2 + $0x70] sm:$0xff]
        %v1532 = vld [vmem:[#allocation2 + $0x78] sm:$0xff]
        %v1533 = vld [vmem:[#allocation2 + $0x80] sm:$0xff]
        %v1534 = vld [vmem:[#allocation2 + $0x88] sm:$0xff]
        %v1535 = vld [vmem:[#allocation2 + $0x90] sm:$0xff]
        %v1536 = vld [vmem:[#allocation2 + $0x98] sm:$0xff]
        %v1537 = vld [vmem:[#allocation2 + $0xa0] sm:$0xff]
        %v1538 = vld [vmem:[#allocation2 + $0xa8] sm:$0xff]
        %v1539 = vld [vmem:[#allocation2 + $0xb0] sm:$0xff]
        %v1540 = vld [vmem:[#allocation2 + $0xb8] sm:$0xff]
        %v1541 = vld [vmem:[%s11] sm:$0xff]
        %1543 = vset.pattern.permute.xlu0 0
        %1544 = vperm.xlu0 %1543, %v1541
        %v1545 = vpop.permute.xlu0 %1544
        %v1548 = vsel %vm1231, %v1516, 0
        %1550 = vmatpush.msra.mxu0 0.0
        %1551 = vmatpush.msra.mxu0 0.0
        %1552 = vmatpush.msra.mxu0 0.0
        %1553 = vmatpush.msra.mxu0 0.0
        %1554 = vmatpush.msra.mxu0 %v1539
        %1555 = vmatpush.msra.mxu0 %v1537
        %1556 = vmatpush.msra.mxu0 %v1535
        %1557 = vmatpush.msra.mxu0 %v1533
        %1558 = vmatpush.msra.mxu0 %v1531
        %1559 = vmatpush.msra.mxu0 %v1529
        %1560 = vmatpush.msra.mxu0 %v1527
        %1561 = vmatpush.msra.mxu0 %v1525
        %1562 = vmatpush.msra.mxu0 %v1523
        %1563 = vmatpush.msra.mxu0 %v1521
        %1564 = vmatpush.msra.mxu0 %v1519
        %1565 = vmatpush.msra.mxu0 %v1517
        %1566 = vmatmul.f32.gmra.mxu0 %v1548
        %v1567 = vpop.f32.mrf.mxu0
        %v1568 = vadd.f32 %v1545, %v1567
        %1569 = vdwg.mxu0
        %1570 = vmatpush.msra.mxu0 0.0
        %1571 = vmatpush.msra.mxu0 0.0
        %1572 = vmatpush.msra.mxu0 0.0
        %1573 = vmatpush.msra.mxu0 0.0
        %1574 = vmatpush.msra.mxu0 %v1540
        %1575 = vmatpush.msra.mxu0 %v1538
        %1576 = vmatpush.msra.mxu0 %v1536
        %1577 = vmatpush.msra.mxu0 %v1534
        %1578 = vmatpush.msra.mxu0 %v1532
        %1579 = vmatpush.msra.mxu0 %v1530
        %1580 = vmatpush.msra.mxu0 %v1528
        %1581 = vmatpush.msra.mxu0 %v1526
        %1582 = vmatpush.msra.mxu0 %v1524
        %1583 = vmatpush.msra.mxu0 %v1522
        %1584 = vmatpush.msra.mxu0 %v1520
        %1585 = vmatpush.msra.mxu0 %v1518
        %1586 = vmatmul.f32.gmra.mxu0 %v1548
        %v1587 = vpop.f32.mrf.mxu0
        %v1588 = vadd.f32 %v1545, %v1587
        %1589 = vdwg.mxu0
        %vm1590 = vcmp.gt.f32.partialorder %v1568, 0.0
        %vm1591 = vcmp.gt.f32.partialorder %v1588, 0.0
        %v1592 = vmin.f32 %v1568, 0.0
        %v1593 = vmin.f32 %v1588, 0.0
        %v1594 = vmul.f32 %v1592, 1.442695
        %v1595 = vpow.pop %v1594
        %v1596 = vmul.f32 %v1593, 1.442695
        %v1597 = vpow.pop %v1596
        %v1598 = vsub.f32 %v1595, 1.0
        %v1599 = vsub.f32 %v1597, 1.0
        %v1600 = vsel %vm1590, %v1568, %v1598
        %v1601 = vsel %vm1591, %v1588, %v1599
        %v1602 = vsub.f32 0.0, %v1568
        %v1603 = vsub.f32 0.0, %v1588
        %vm1604 = vcmp.gt.f32.partialorder %v1602, 0.0
        %vm1605 = vcmp.gt.f32.partialorder %v1603, 0.0
        %v1606 = vmin.f32 %v1602, 0.0
        %v1607 = vmin.f32 %v1603, 0.0
        %v1608 = vmul.f32 %v1606, 1.442695
        %v1609 = vpow.pop %v1608
        %v1610 = vmul.f32 %v1607, 1.442695
        %v1611 = vpow.pop %v1610
        %v1612 = vsub.f32 %v1609, 1.0
        %v1613 = vsub.f32 %v1611, 1.0
        %v1614 = vsel %vm1604, %v1602, %v1612
        %v1615 = vsel %vm1605, %v1603, %v1613
        %1616 = vrot.lane.b32.xlu0 %v1600, 17
        %v1617 = vpop.permute.xlu0 %1616
        %1618 = vrot.lane.b32.xlu0 %v1601, 17
        %v1619 = vpop.permute.xlu0 %1618
        %v1620 = vsel %vm751, %v1617, %v1619
        %v1621 = vsel %vm751, %v1619, %v1617
        %v1622 = vld [vmem:[#allocation11] sm:$0x3]
        %v1624 = vperm.slane %v1622, 0
        %v1625 = vperm.slane %v1622, 1
        %v1628 = vmul.f32 %v1621, %v1624
        %v1629 = vmul.f32 %v1620, %v1625
        %1630 = vst [vmem:[#allocation2] sm:$0xff] %v1628
        %1631 = vst [vmem:[#allocation2 + $0x8] sm:$0xff] %v1629
        %1632 = vrot.lane.b32.xlu0 %v1600, 16
        %v1633 = vpop.permute.xlu0 %1632
        %1634 = vrot.lane.b32.xlu0 %v1601, 16
        %v1635 = vpop.permute.xlu0 %1634
        %v1636 = vsel %vm768, %v1633, %v1635
        %v1637 = vsel %vm768, %v1635, %v1633
        %v1638 = vld [vmem:[%s1428] sm:$0x3]
        %v1640 = vperm.slane %v1638, 0
        %v1641 = vperm.slane %v1638, 1
        %v1644 = vmul.f32 %v1637, %v1640
        %v1645 = vmul.f32 %v1636, %v1641
        %1646 = vst [vmem:[#allocation2 + $0x10] sm:$0xff] %v1644
        %1647 = vst [vmem:[#allocation2 + $0x18] sm:$0xff] %v1645
        %1648 = vrot.lane.b32.xlu0 %v1600, 1
        %v1649 = vpop.permute.xlu0 %1648
        %1650 = vrot.lane.b32.xlu0 %v1601, 1
        %v1651 = vpop.permute.xlu0 %1650
        %v1652 = vsel %vm804, %v1649, %v1651
        %v1653 = vsel %vm804, %v1651, %v1649
        %v1654 = vld [vmem:[%s1445] sm:$0x3]
        %v1656 = vperm.slane %v1654, 0
        %v1657 = vperm.slane %v1654, 1
        %v1660 = vmul.f32 %v1653, %v1656
        %v1661 = vmul.f32 %v1652, %v1657
        %1662 = vst [vmem:[#allocation2 + $0x20] sm:$0xff] %v1660
        %1663 = vst [vmem:[#allocation2 + $0x28] sm:$0xff] %v1661
        %1664 = vst [vmem:[#allocation2 + $0x30] sm:$0xff] %v1600
        %1665 = vst [vmem:[#allocation2 + $0x38] sm:$0xff] %v1601
        %1666 = vrot.lane.b32.xlu0 %v1614, 17
        %v1667 = vpop.permute.xlu0 %1666
        %1668 = vrot.lane.b32.xlu0 %v1615, 17
        %v1669 = vpop.permute.xlu0 %1668
        %v1670 = vsel %vm751, %v1667, %v1669
        %v1671 = vsel %vm751, %v1669, %v1667
        %v1672 = vld [vmem:[#allocation11] sm:$0x3]
        %v1674 = vperm.slane %v1672, 0
        %v1675 = vperm.slane %v1672, 1
        %v1678 = vmul.f32 %v1671, %v1674
        %v1679 = vmul.f32 %v1670, %v1675
        %1680 = vst [vmem:[#allocation2 + $0x40] sm:$0xff] %v1678
        %1681 = vst [vmem:[#allocation2 + $0x48] sm:$0xff] %v1679
        %1682 = vrot.lane.b32.xlu0 %v1614, 16
        %v1683 = vpop.permute.xlu0 %1682
        %1684 = vrot.lane.b32.xlu0 %v1615, 16
        %v1685 = vpop.permute.xlu0 %1684
        %v1686 = vsel %vm768, %v1683, %v1685
        %v1687 = vsel %vm768, %v1685, %v1683
        %v1688 = vld [vmem:[%s1428] sm:$0x3]
        %v1690 = vperm.slane %v1688, 0
        %v1691 = vperm.slane %v1688, 1
        %v1694 = vmul.f32 %v1687, %v1690
        %v1695 = vmul.f32 %v1686, %v1691
        %1696 = vst [vmem:[#allocation2 + $0x50] sm:$0xff] %v1694
        %1697 = vst [vmem:[#allocation2 + $0x58] sm:$0xff] %v1695
        %1698 = vrot.lane.b32.xlu0 %v1614, 1
        %v1699 = vpop.permute.xlu0 %1698
        %1700 = vrot.lane.b32.xlu0 %v1615, 1
        %v1701 = vpop.permute.xlu0 %1700
        %v1702 = vsel %vm804, %v1699, %v1701
        %v1703 = vsel %vm804, %v1701, %v1699
        %v1704 = vld [vmem:[%s1445] sm:$0x3]
        %v1706 = vperm.slane %v1704, 0
        %v1707 = vperm.slane %v1704, 1
        %v1710 = vmul.f32 %v1703, %v1706
        %v1711 = vmul.f32 %v1702, %v1707
        %1712 = vst [vmem:[#allocation2 + $0x60] sm:$0xff] %v1710
        %1713 = vst [vmem:[#allocation2 + $0x68] sm:$0xff] %v1711
        %1714 = vst [vmem:[#allocation2 + $0x70] sm:$0xff] %v1614
        %1715 = vst [vmem:[#allocation2 + $0x78] sm:$0xff] %v1615
        %v1716 = vld [vmem:[#allocation14] sm:$0xff]
        %v1717 = vld [vmem:[#allocation14 + $0x8] sm:$0xff]
        %v1718 = vld [vmem:[#allocation2] sm:$0xff]
        %v1719 = vld [vmem:[#allocation2 + $0x8] sm:$0xff]
        %v1720 = vld [vmem:[#allocation2 + $0x10] sm:$0xff]
        %v1721 = vld [vmem:[#allocation2 + $0x18] sm:$0xff]
        %v1722 = vld [vmem:[#allocation2 + $0x20] sm:$0xff]
        %v1723 = vld [vmem:[#allocation2 + $0x28] sm:$0xff]
        %v1724 = vld [vmem:[#allocation2 + $0x30] sm:$0xff]
        %v1725 = vld [vmem:[#allocation2 + $0x38] sm:$0xff]
        %v1726 = vld [vmem:[#allocation2 + $0x40] sm:$0xff]
        %v1727 = vld [vmem:[#allocation2 + $0x48] sm:$0xff]
        %v1728 = vld [vmem:[#allocation2 + $0x50] sm:$0xff]
        %v1729 = vld [vmem:[#allocation2 + $0x58] sm:$0xff]
        %v1730 = vld [vmem:[#allocation2 + $0x60] sm:$0xff]
        %v1731 = vld [vmem:[#allocation2 + $0x68] sm:$0xff]
        %v1732 = vld [vmem:[#allocation2 + $0x70] sm:$0xff]
        %v1733 = vld [vmem:[#allocation2 + $0x78] sm:$0xff]
        %v1734 = vld [vmem:[%s13] sm:$0xff]
        %v1735 = vld [vmem:[%s13 + $0x8] sm:$0xff]
        %1737 = vset.pattern.permute.xlu0 0
        %1738 = vperm.xlu0 %1737, %v1734
        %v1739 = vpop.permute.xlu0 %1738
        %1742 = vset.pattern.permute.xlu0 0
        %1743 = vperm.xlu0 %1742, %v1735
        %v1744 = vpop.permute.xlu0 %1743
        %vm1746 = vcmask 523264
        %v1748 = vsel %vm1746, %v1716, 0
        %v1751 = vsel %vm1746, %v1717, 0
        %1753 = vmatpush.msra.mxu0 0.0
        %1754 = vmatpush.msra.mxu0 0.0
        %1755 = vmatpush.msra.mxu0 0.0
        %1756 = vmatpush.msra.mxu0 0.0
        %1757 = vmatpush.msra.mxu0 0.0
        %1758 = vmatpush.msra.mxu0 0.0
        %1759 = vmatpush.msra.mxu0 0.0
        %1760 = vmatpush.msra.mxu0 0.0
        %1761 = vmatpush.msra.mxu0 %v1732
        %1762 = vmatpush.msra.mxu0 %v1730
        %1763 = vmatpush.msra.mxu0 %v1728
        %1764 = vmatpush.msra.mxu0 %v1726
        %1765 = vmatpush.msra.mxu0 %v1724
        %1766 = vmatpush.msra.mxu0 %v1722
        %1767 = vmatpush.msra.mxu0 %v1720
        %1768 = vmatpush.msra.mxu0 %v1718
        %1769 = vmatmul.f32.gmra.mxu0 %v1748
        %v1770 = vpop.f32.mrf.mxu0
        %v1771 = vadd.f32 %v1739, %v1770
        %1772 = vmatmul.f32.gmra.mxu0 %v1751
        %v1773 = vpop.f32.mrf.mxu0
        %v1774 = vadd.f32 %v1744, %v1773
        %1775 = vdwg.mxu0
        %1776 = vmatpush.msra.mxu0 0.0
        %1777 = vmatpush.msra.mxu0 0.0
        %1778 = vmatpush.msra.mxu0 0.0
        %1779 = vmatpush.msra.mxu0 0.0
        %1780 = vmatpush.msra.mxu0 0.0
        %1781 = vmatpush.msra.mxu0 0.0
        %1782 = vmatpush.msra.mxu0 0.0
        %1783 = vmatpush.msra.mxu0 0.0
        %1784 = vmatpush.msra.mxu0 %v1733
        %1785 = vmatpush.msra.mxu0 %v1731
        %1786 = vmatpush.msra.mxu0 %v1729
        %1787 = vmatpush.msra.mxu0 %v1727
        %1788 = vmatpush.msra.mxu0 %v1725
        %1789 = vmatpush.msra.mxu0 %v1723
        %1790 = vmatpush.msra.mxu0 %v1721
        %1791 = vmatpush.msra.mxu0 %v1719
        %1792 = vmatmul.f32.gmra.mxu0 %v1748
        %v1793 = vpop.f32.mrf.mxu0
        %v1794 = vadd.f32 %v1739, %v1793
        %1795 = vmatmul.f32.gmra.mxu0 %v1751
        %v1796 = vpop.f32.mrf.mxu0
        %v1797 = vadd.f32 %v1744, %v1796
        %1798 = vdwg.mxu0
        %v1799 = vsub.f32 0.0, %v1774
        %v1800 = vsub.f32 0.0, %v1797
        %v1801 = vmul.f32 %v1799, 1.442695
        %v1802 = vpow.pop %v1801
        %v1803 = vmul.f32 %v1800, 1.442695
        %v1804 = vpow.pop %v1803
        %v1805 = vadd.f32 %v1802, 1.0
        %v1806 = vadd.f32 %v1804, 1.0
        %v1807 = vrcp.pop %v1805
        %v1808 = vmul.f32 %v1805, %v1807
        %v1809 = vsub.f32 1.0, %v1808
        %v1810 = vmul.f32 %v1807, %v1809
        %v1811 = vadd.f32 %v1807, %v1810
        %vm1812 = vweird.f32 %v1805
        %vm1813 = vweird.f32 %v1807
        %vm1814 = vmor %vm1812, %vm1813
        %v1815 = vsel %vm1814, %v1807, %v1811
        %v1816 = vand.u32 2147483647, %v1805
        %vm1817 = vcmp.eq.f32.partialorder %v1816, 8.507059e+37
        %v1818 = vand.u32 %v1805, 2147483648
        %v1819 = vor.u32 1.1754944e-38, %v1818
        %v1820 = vsel %vm1817, %v1819, %v1815
        %v1821 = vmul.f32 1.0, %v1820
        %v1822 = vrcp.pop %v1806
        %v1823 = vmul.f32 %v1806, %v1822
        %v1824 = vsub.f32 1.0, %v1823
        %v1825 = vmul.f32 %v1822, %v1824
        %v1826 = vadd.f32 %v1822, %v1825
        %vm1827 = vweird.f32 %v1806
        %vm1828 = vweird.f32 %v1822
        %vm1829 = vmor %vm1827, %vm1828
        %v1830 = vsel %vm1829, %v1822, %v1826
        %v1831 = vand.u32 2147483647, %v1806
        %vm1832 = vcmp.eq.f32.partialorder %v1831, 8.507059e+37
        %v1833 = vand.u32 %v1806, 2147483648
        %v1834 = vor.u32 1.1754944e-38, %v1833
        %v1835 = vsel %vm1832, %v1834, %v1830
        %v1836 = vmul.f32 1.0, %v1835
        %v1837 = vmul.f32 %v1771, %v1821
        %v1838 = vmul.f32 %v1794, %v1836
        %v1839 = vadd.f32 %v689, %v1837
        %v1840 = vadd.f32 %v690, %v1838
        %1841 = vst [vmem:[%s679] sm:$0xff] %v1839
        %1842 = vst [vmem:[%s679 + $0x8] sm:$0xff] %v1840
        %s1843 = sand.u32 %s363, 1
        %s1844 = scalar_lea.sflag [#allocation5], %s1843
        %s1845 = sand.u32 %s363, 1
        %s1846 = smul.addr %s1845, 16
        %s1847 = scalar_lea.vmem [#allocation15], %s1846
        %s1848 = sand.u32 %s389, 1
        %s1849 = scalar_lea.sflag [#allocation17], %s1848
        %s1850 = sand.u32 %s389, 1
        %s1851 = smul.addr %s1850, 16
        %s1852 = scalar_lea.vmem [#allocation16], %s1851
        // Predicated region
        $region105: #{tpu_custom_call.1} parent=75 // pred_check
          %p1853 = pneg %p373
        $region106: #{tpu_custom_call.1} parent=75 // pred_check_branch
          %1855 = sbr.rel (%p1853) target = $region108
        $region107: #{tpu_custom_call.1} parent=75 // pred_region
          %1857 = vsyncadd %s1844, 0
          %s1858 = smul.addr %s41, 2
          %s1859 = smul.addr %s1858, 8
          %s1860 = scalar_lea.hbm %s14, %s1859
          %s1862 = sshll.u32 %s1847, 4
          %s1863 = int_to_ptr.vmem [resolvable:$true] %s1862
          %s1864 = sshll.u32 %s1860, 4
          %s1865 = int_to_ptr.hbm [resolvable:$true] %s1864
          %1867 = dma.vmem_to_hbm [thread:$0]  %s1863, 256, %s1865, %s1844
        $region108: #{tpu_custom_call.1} parent=75 // pred_fallthru
          _
        // Predicated region
        $region109: #{tpu_custom_call.1} parent=75 // pred_check
          %p1868 = pneg %p399
        $region110: #{tpu_custom_call.1} parent=75 // pred_check_branch
          %1870 = sbr.rel (%p1868) target = $region112
        $region111: #{tpu_custom_call.1} parent=75 // pred_region
          %1872 = vsyncadd %s1849, 0
          %s1873 = smul.addr %s41, 2
          %s1874 = smul.addr %s1873, 8
          %s1875 = scalar_lea.hbm %s15, %s1874
          %s1877 = sshll.u32 %s1852, 4
          %s1878 = int_to_ptr.vmem [resolvable:$true] %s1877
          %s1879 = sshll.u32 %s1875, 4
          %s1880 = int_to_ptr.hbm [resolvable:$true] %s1879
          %1882 = dma.vmem_to_hbm [thread:$0]  %s1878, 256, %s1880, %s1849
        $region112: #{tpu_custom_call.1} parent=75 // pred_fallthru
          _
      $region76: #{tpu_custom_call.1} parent=5 // pred_fallthru
        _
      %p1883 = scmp.le.s32.totalorder 2, %s36
      // Predicated region
      $region113: #{tpu_custom_call.1} parent=5 // pred_check
        %p1884 = pneg %p1883
      $region114: #{tpu_custom_call.1} parent=5 // pred_check_branch
        %1886 = sbr.rel (%p1884) target = $region116
      $region115: #{tpu_custom_call.1} parent=5 // pred_region
        %s1887 = ssub.s32 %s36, 2
        // Predicated region
        $region117: #{tpu_custom_call.1} parent=115 // pred_check
          %p1888 = pneg %p379
        $region118: #{tpu_custom_call.1} parent=115 // pred_check_branch
          %1890 = sbr.rel (%p1888) target = $region120
        $region119: #{tpu_custom_call.1} parent=115 // pred_region
          %s1891 = sand.u32 %s364, 1
          %s1892 = scalar_lea.sflag [#allocation5], %s1891
          %s1893 = sand.u32 %s364, 1
          %s1894 = smul.addr %s1893, 16
          %s1895 = scalar_lea.vmem [#allocation15], %s1894
          %1897 = dma.done %s1892, 256
        $region120: #{tpu_custom_call.1} parent=115 // pred_fallthru
          _
        // Predicated region
        $region121: #{tpu_custom_call.1} parent=115 // pred_check
          %p1898 = pneg %p405
        $region122: #{tpu_custom_call.1} parent=115 // pred_check_branch
          %1900 = sbr.rel (%p1898) target = $region124
        $region123: #{tpu_custom_call.1} parent=115 // pred_region
          %s1901 = sand.u32 %s390, 1
          %s1902 = scalar_lea.sflag [#allocation17], %s1901
          %s1903 = sand.u32 %s390, 1
          %s1904 = smul.addr %s1903, 16
          %s1905 = scalar_lea.vmem [#allocation16], %s1904
          %1907 = dma.done %s1902, 256
        $region124: #{tpu_custom_call.1} parent=115 // pred_fallthru
          _
      $region116: #{tpu_custom_call.1} parent=5 // pred_fallthru
        _
    $region6: #{tpu_custom_call.1} parent=1 // loop_footer
      %s40 = sadd.s32 1, %s36
    $region7: #{tpu_custom_call.1} parent=1 // loop_footer_branch
      %35 = sbr.rel target = $region3
    $region8: #{tpu_custom_call.1} parent=1 // loop_exit
      _
    %1908 = vsyncpa [#allocation4], 1
    %s1909 = scalar_lea.sflag [#allocation4], 1
    %1910 = vsyncpa %s1909, 1
    %1911 = vsyncpa [#allocation7], 1
    %s1912 = scalar_lea.sflag [#allocation7], 1
    %1913 = vsyncpa %s1912, 1
    %1914 = vsyncpa [#allocation10], 1
    %1915 = vsyncpa [#allocation13], 1
    %1916 = vsyncpa [#allocation5], 1
    %s1917 = scalar_lea.sflag [#allocation5], 1
    %1918 = vsyncpa %s1917, 1
    %1919 = vsyncpa [#allocation17], 1
    %s1920 = scalar_lea.sflag [#allocation17], 1
    %1921 = vsyncpa %s1920, 1

</llo_original>
